<compile_context>
chip_gen: v5e
topology: v5e:2x2
jax: 0.10.0
libtpu: 0.0.40
codegen_flags: <defaults>
</compile_context>

<pallas_src>
import math

import jax
import jax.numpy as jnp
from jax import lax
from jax.experimental import pallas as pl
from jax.experimental.pallas import tpu as pltpu

# ----------------------------- configuration --------------------------------
B = 2            # batch
IMG = 16         # image size (square)
PATCH = 8        # patch size  -> 2x2 = 4 patches
V_WIDTH = 32     # vision width (== embed_dim, required by the 'pacl' path)
V_HEADS = 2
V_LAYERS = 2
EMBED = 32       # CLIP embed dim
T_CTX = 8        # text context length
VOCAB = 64
T_WIDTH = 32
T_HEADS = 2
T_LAYERS = 2
N_CLASSES = 4
MLP_RATIO = 4.0
INIT_LOGIT_SCALE = math.log(1.0 / 0.07)

GH = IMG // PATCH
GW = IMG // PATCH
N_PATCHES = GH * GW          # 4
V_TOKENS = N_PATCHES + 1     # 5 real tokens (cls + patches)
V_SEQ = 8                    # padded sequence (sublane aligned); pads masked in attention

_VMEM = pl.BlockSpec(memory_space=pltpu.MemorySpace.VMEM)
_CPARAMS = pltpu.CompilerParams(vmem_limit_bytes=32 * 1024 * 1024)

_BLOCK_KEYS = ("ln1_g", "ln1_b", "qkv_w", "qkv_b", "out_w", "out_b",
               "ln2_g", "ln2_b", "fc1_w", "fc1_b", "fc2_w", "fc2_b")
_MATMUL_KEYS = ("qkv_w", "out_w", "fc1_w", "fc2_w")   # stored bf16


# --------------------------- in-kernel math helpers --------------------------
def _ln(x, g, b):
    mu = jnp.mean(x, axis=-1, keepdims=True)
    xc = x - mu
    var = jnp.mean(xc * xc, axis=-1, keepdims=True)
    return xc * jax.lax.rsqrt(var + 1e-5) * g + b


def _gelu(x):
    # TODO(synk): PyTorch nn.GELU() defaults to exact erf; tanh approximation used here.
    c = math.sqrt(2.0 / math.pi)
    return 0.5 * x * (1.0 + jnp.tanh(c * (x + 0.044715 * x * x * x)))


def _l2n(x):
    # F.normalize(dim=-1, eps=1e-12) == x * rsqrt(max(sum(x^2), 1e-24))
    return x * jax.lax.rsqrt(jnp.maximum(jnp.sum(x * x, axis=-1, keepdims=True), 1e-24))


def _softmax_last(s):
    # exact divide (parity with PyTorch); denominators are tiny here anyway
    s = s - jnp.max(s, axis=-1, keepdims=True)
    p = jnp.exp(s)
    return p / jnp.sum(p, axis=-1, keepdims=True)


def _bf16(x):
    return x.astype(jnp.bfloat16)


def _mha(x, qkv_w, qkv_b, out_w, out_b, n_batch, seq, heads, attn_bias):
    """Multi-head self-attention on flat (n_batch*seq, d) f32 activations.

    The batch dim rides in one batched einsum per head; the output projection is
    accumulated per head (no concats, no separate projection matmul).  attn_bias
    is an additive (seq, seq) f32 mask (0 / -1e30) or None.
    """
    d = x.shape[-1]
    dh = d // heads
    scale = 1.0 / math.sqrt(dh)
    qkv = jnp.dot(_bf16(x), qkv_w, preferred_element_type=jnp.float32) + qkv_b   # (N, 3d) f32
    qkv = qkv.reshape(n_batch, seq, 3 * d)
    q = qkv[:, :, :d] * scale                     # fold 1/sqrt(dh) into q
    k = qkv[:, :, d:2 * d]
    v = qkv[:, :, 2 * d:]

    o = None
    for h in range(heads):                        # heads unrolled (tiny, static)
        c = slice(h * dh, (h + 1) * dh)
        s = jnp.einsum('bqd,bkd->bqk', _bf16(q[:, :, c]), _bf16(k[:, :, c]),
                       preferred_element_type=jnp.float32)            # (B, S, S) f32
        if attn_bias is not None:
            s = s + attn_bias[None, :, :]
        p = _softmax_last(s)
        oh = jnp.einsum('bqk,bkd->bqd', _bf16(p), _bf16(v[:, :, c]),
                        preferred_element_type=jnp.float32)           # (B, S, dh)
        oh = oh.reshape(n_batch * seq, dh)
        contrib = jnp.dot(_bf16(oh), out_w[c, :],                     # fold out-proj per head
                          preferred_element_type=jnp.float32)
        o = contrib if o is None else o + contrib
    return o + out_b


def _block(x, w, n_batch, seq, heads, attn_bias):
    # pre-norm transformer block: x += attn(ln1(x)); x += mlp(ln2(x))
    (ln1g, ln1b, qkvw, qkvb, outw, outb, ln2g, ln2b, fc1w, fc1b, fc2w, fc2b) = w
    x = x + _mha(_ln(x, ln1g, ln1b), qkvw, qkvb, outw, outb,
                 n_batch, seq, heads, attn_bias)
    h = jnp.dot(_bf16(_ln(x, ln2g, ln2b)), fc1w, preferred_element_type=jnp.float32) + fc1b
    h = _gelu(h)
    x = x + jnp.dot(_bf16(h), fc2w, preferred_element_type=jnp.float32) + fc2b
    return x


def _layer(l, refs):
    # refs are stacked (L, ...) weight refs; static index -> per-layer arrays.
    return tuple(r[l] for r in refs)


# ------------------------------- fused kernels --------------------------------
def _text_kernel(x_ref, sel_ref,
                 ln1g, ln1b, qkvw, qkvb, outw, outb,
                 ln2g, ln2b, fc1w, fc1b, fc2w, fc2b,
                 lnfg, lnfb, proj_ref, o_ref):
    """Whole text tower: blocks -> final LN -> EOT pool -> text_projection -> L2 norm."""
    block_refs = (ln1g, ln1b, qkvw, qkvb, outw, outb, ln2g, ln2b, fc1w, fc1b, fc2w, fc2b)
    x = x_ref[...].astype(jnp.float32)                                      # (B*T_CTX, D)
    rows = lax.broadcasted_iota(jnp.int32, (T_CTX, T_CTX), 0)
    cols = lax.broadcasted_iota(jnp.int32, (T_CTX, T_CTX), 1)
    causal_bias = jnp.where(cols <= rows, 0.0, -1e30).astype(jnp.float32)   # built once, f32
    for l in range(T_LAYERS):
        x = _block(x, _layer(l, block_refs), B, T_CTX, T_HEADS, causal_bias)
    x = _ln(x, lnfg[...], lnfb[...])
    # EOT gather as a one-hot matmul; kept in f32 (it's a gather, not real compute)
    pooled = jnp.dot(sel_ref[...], x, preferred_element_type=jnp.float32)   # (B, D)
    feats = jnp.dot(_bf16(pooled), proj_ref[...], preferred_element_type=jnp.float32)
    o_ref[...] = _l2n(feats).astype(o_ref.dtype)


def _vision_kernel(patches_ref, eos_ref, base_ref, pw_ref,
                   ln1g, ln1b, qkvw, qkvb, outw, outb,
                   ln2g, ln2b, fc1w, fc1b, fc2w, fc2b,
                   lnfg, lnfb, o_ref):
    """Whole vision tower + fused PACL pooling against the (normalized) text EOS features."""
    # TODO(synk): Denoiser/ViTWrapper (pretrained DINOv2 backbone + denoiser checkpoint)
    # is approximated by a standard pre-norm ViT with deterministic random weights.
    block_refs = (ln1g, ln1b, qkvw, qkvb, outw, outb, ln2g, ln2b, fc1w, fc1b, fc2w, fc2b)
    # patch embedding: one aligned (B*V_SEQ, 3*P*P) x (3*P*P, D) matmul; cls/pos/bias
    # were pre-assembled host-side into base_ref (pad rows are zero).
    x = jnp.dot(_bf16(patches_ref[...]), pw_ref[...],
                preferred_element_type=jnp.float32) + base_ref[...]         # (B*V_SEQ, D)
    # pad-key mask: real keys are cols < V_TOKENS
    cols = lax.broadcasted_iota(jnp.int32, (V_SEQ, V_SEQ), 1)
    pad_bias = jnp.where(cols < V_TOKENS, 0.0, -1e30).astype(jnp.float32)
    for l in range(V_LAYERS):
        x = _block(x, _layer(l, block_refs), B, V_SEQ, V_HEADS, pad_bias)
    x = _ln(x, lnfg[...], lnfb[...])

    # PACL: normalized text EOS attends over normalized patch tokens; batched over B,
    # patch rows selected with an additive bias (no unaligned row slices), one store.
    xt = _l2n(x).reshape(B, V_SEQ, V_WIDTH)                                 # (B, 8, D) normalized
    eos = eos_ref[...]                                                      # (B, EMBED) normalized
    rowpos = lax.broadcasted_iota(jnp.int32, (1, V_SEQ), 1)
    patch_bias = jnp.where((rowpos >= 1) & (rowpos < 1 + N_PATCHES),
                           0.0, -1e30).astype(jnp.float32)                  # (1, 8)
    s = jnp.sum(eos[:, None, :] * xt, axis=-1) + patch_bias                 # (B, 8)
    w = _softmax_last(s)                                                    # pad/cls rows -> 0
    pooled = jnp.sum(w[:, :, None] * xt, axis=1)                            # (B, D)
    o_ref[...] = _l2n(pooled).astype(o_ref.dtype)                           # single coalesced store


# ------------------------------- tower wrappers --------------------------------
def encode_text(tp, text):
    # embedding gather + positional add as JAX glue; everything else in one kernel
    x = jnp.take(tp["tok_emb"], text, axis=0) + tp["pos_emb"][None, :T_CTX]
    x = x.reshape(B * T_CTX, T_WIDTH)
    eos_idx = jnp.argmax(text, axis=-1)                                     # EOT = argmax token id
    sel = jax.nn.one_hot(jnp.arange(B) * T_CTX + eos_idx, B * T_CTX, dtype=jnp.float32)
    inputs = ([x, sel]
              + [tp["blocks"][k] for k in _BLOCK_KEYS]
              + [tp["ln_f_g"].reshape(1, -1), tp["ln_f_b"].reshape(1, -1), tp["text_proj"]])
    return pl.pallas_call(
        _text_kernel,
        out_shape=jax.ShapeDtypeStruct((B, EMBED), jnp.float32),
        in_specs=[_VMEM] * len(inputs),
        out_specs=_VMEM,
        compiler_params=_CPARAMS,
    )(*inputs)


def encode_image_pacl(vp, image, eos_txt):
    # NCHW -> per-patch flatten in (c, ph, pw) order (matches Conv2d weight flattening)
    Bb, C, H, W = image.shape
    patches = image.reshape(Bb, C, GH, PATCH, GW, PATCH).transpose(0, 2, 4, 1, 3, 5)
    patches = patches.reshape(Bb, N_PATCHES, C * PATCH * PATCH)
    # pad sequence to 8 rows host-side: row0=cls slot (zeros), rows1-4=patches, rows5-7=pad
    patches_padded = jnp.zeros((Bb, V_SEQ, C * PATCH * PATCH), jnp.float32)
    patches_padded = patches_padded.at[:, 1:1 + N_PATCHES, :].set(patches)
    patches_padded = patches_padded.reshape(Bb * V_SEQ, C * PATCH * PATCH)
    # token base: row0 = cls + pos0; rows1-4 = pos + patch bias; rows5-7 = 0 (masked)
    pos = vp["pos_emb"]                                                     # (V_TOKENS, D)
    base = jnp.zeros((V_SEQ, V_WIDTH), jnp.float32)
    base = base.at[0].set(vp["cls_token"] + pos[0])
    base = base.at[1:1 + N_PATCHES].set(pos[1:] + vp["patch_b"][None, :])
    base = jnp.broadcast_to(base[None], (Bb, V_SEQ, V_WIDTH)).reshape(Bb * V_SEQ, V_WIDTH)

    inputs = ([patches_padded, eos_txt, base, vp["patch_w"]]
              + [vp["blocks"][k] for k in _BLOCK_KEYS]
              + [vp["ln_f_g"].reshape(1, -1), vp["ln_f_b"].reshape(1, -1)])
    return pl.pallas_call(
        _vision_kernel,
        out_shape=jax.ShapeDtypeStruct((B, EMBED), jnp.float32),
        in_specs=[_VMEM] * len(inputs),
        out_specs=_VMEM,
        compiler_params=_CPARAMS,
    )(*inputs)


# ------------------------------- OursCLIP.forward ----------------------------
def ours_clip_forward(params, image, text):
    # encode_text(text, normalize=True, return_all=True): only the normalized EOS
    # features are consumed downstream when args.n_dense_cls == 0.
    eos_txt = encode_text(params["text"], text)

    # encode_image(image, normalize=True) and args.image_features_type == 'pacl'
    # pooling are fused into a single vision kernel.
    # TODO(synk): on v7x (2 TCs) decoupling PACL from the vision kernel would let the
    # two towers run core-parallel; kept fused here (1 TC on v5e/v6e, toy sizes).
    image_features = encode_image_pacl(params["visual"], image, eos_txt)

    # args.n_dense_cls == 0 -> no concept/decoder branch.
    out_dict = {
        "image_features": image_features,
        "text_features": eos_txt,
        "logit_scale": jnp.exp(params["logit_scale"]),
        "cls_embeds_visual": None,
        "cls_embeds_txt": None,
        "logit_scale_local": jnp.exp(params["logit_scale_local"]),
        "classification_weights_ema": params["classification_weights_ema"],
        "concepts_labels": None,
    }
    # logit_bias is None (init_logit_bias=None) -> no 'logit_bias' keys, matching the module.
    return out_dict


# ------------------------------ parameter init --------------------------------
def init_block(key, width, mlp_ratio=MLP_RATIO):
    ks = jax.random.split(key, 4)
    hidden = int(width * mlp_ratio)
    std = 0.02
    return dict(
        ln1_g=jnp.ones((width,), jnp.float32), ln1_b=jnp.zeros((width,), jnp.float32),
        qkv_w=std * jax.random.normal(ks[0], (width, 3 * width), jnp.float32),
        qkv_b=jnp.zeros((3 * width,), jnp.float32),
        out_w=std * jax.random.normal(ks[1], (width, width), jnp.float32),
        out_b=jnp.zeros((width,), jnp.float32),
        ln2_g=jnp.ones((width,), jnp.float32), ln2_b=jnp.zeros((width,), jnp.float32),
        fc1_w=std * jax.random.normal(ks[2], (width, hidden), jnp.float32),
        fc1_b=jnp.zeros((hidden,), jnp.float32),
        fc2_w=std * jax.random.normal(ks[3], (hidden, width), jnp.float32),
        fc2_b=jnp.zeros((width,), jnp.float32),
    )


def stack_blocks(blocks):
    # stack per-layer params along a leading L axis so the fused kernel can index [l];
    # 1-D vectors become (L, 1, dim) for clean in-kernel broadcasting; matmul weights bf16.
    out = {}
    for k in _BLOCK_KEYS:
        a = jnp.stack([blk[k] for blk in blocks], axis=0)
        if a.ndim == 2:
            a = a[:, None, :]
        if k in _MATMUL_KEYS:
            a = a.astype(jnp.bfloat16)
        out[k] = a
    return out


def init_params(key):
    kv, kt = jax.random.split(key, 2)
    std = 0.02

    kvs = jax.random.split(kv, 4 + V_LAYERS)
    visual = dict(
        patch_w=(std * jax.random.normal(kvs[0], (3 * PATCH * PATCH, V_WIDTH),
                                         jnp.float32)).astype(jnp.bfloat16),
        patch_b=jnp.zeros((V_WIDTH,), jnp.float32),
        cls_token=std * jax.random.normal(kvs[1], (V_WIDTH,), jnp.float32),
        pos_emb=std * jax.random.normal(kvs[2], (V_TOKENS, V_WIDTH), jnp.float32),
        ln_f_g=jnp.ones((V_WIDTH,), jnp.float32), ln_f_b=jnp.zeros((V_WIDTH,), jnp.float32),
        blocks=stack_blocks([init_block(kvs[4 + i], V_WIDTH) for i in range(V_LAYERS)]),
    )

    kts = jax.random.split(kt, 4 + T_LAYERS)
    text = dict(
        tok_emb=std * jax.random.normal(kts[0], (VOCAB, T_WIDTH), jnp.float32),
        pos_emb=std * jax.random.normal(kts[1], (T_CTX, T_WIDTH), jnp.float32),
        ln_f_g=jnp.ones((T_WIDTH,), jnp.float32), ln_f_b=jnp.zeros((T_WIDTH,), jnp.float32),
        text_proj=(std * jax.random.normal(kts[2], (T_WIDTH, EMBED),
                                           jnp.float32)).astype(jnp.bfloat16),
        blocks=stack_blocks([init_block(kts[4 + i], T_WIDTH) for i in range(T_LAYERS)]),
    )

    return dict(
        visual=visual,
        text=text,
        logit_scale=jnp.array(INIT_LOGIT_SCALE, jnp.float32),
        logit_scale_local=INIT_LOGIT_SCALE * jnp.ones((1,), jnp.float32),
        classification_weights_ema=jnp.zeros((N_CLASSES + 1, EMBED), jnp.float32),
        beta_ema=jnp.array(0.999, jnp.float32),
    )


# ------------------------------------ main ------------------------------------
if __name__ == "__main__":
    key = jax.random.PRNGKey(0)
    k_param, k_img, k_txt = jax.random.split(key, 3)

    params = init_params(k_param)
    image = jax.random.normal(k_img, (B, 3, IMG, IMG), jnp.float32)          # NCHW
    text = jax.random.randint(k_txt, (B, T_CTX), 1, VOCAB - 1, dtype=jnp.int32)
    text = text.at[:, -1].set(VOCAB - 1)   # EOT token (highest id) at the end -> argmax pooling

    out = jax.jit(ours_clip_forward)(params, image, text)
    jax.block_until_ready(out)

    assert out["image_features"].shape == (B, EMBED)
    assert out["text_features"].shape == (B, EMBED)
    assert out["classification_weights_ema"].shape == (N_CLASSES + 1, EMBED)
    assert bool(jnp.all(jnp.isfinite(out["image_features"])))
    assert bool(jnp.all(jnp.isfinite(out["text_features"])))
    print("KERNEL_OK")
</pallas_src>

<mosaic_0001>
module attributes {stable_mosaic.version = 11 : i64} {
  func.func @_text_kernel(%arg0: memref<16x32xf32, #tpu.memory_space<vmem>>, %arg1: memref<2x16xf32, #tpu.memory_space<vmem>>, %arg2: memref<2x1x32xf32, #tpu.memory_space<vmem>>, %arg3: memref<2x1x32xf32, #tpu.memory_space<vmem>>, %arg4: memref<2x32x96xbf16, #tpu.memory_space<vmem>>, %arg5: memref<2x1x96xf32, #tpu.memory_space<vmem>>, %arg6: memref<2x32x32xbf16, #tpu.memory_space<vmem>>, %arg7: memref<2x1x32xf32, #tpu.memory_space<vmem>>, %arg8: memref<2x1x32xf32, #tpu.memory_space<vmem>>, %arg9: memref<2x1x32xf32, #tpu.memory_space<vmem>>, %arg10: memref<2x32x128xbf16, #tpu.memory_space<vmem>>, %arg11: memref<2x1x128xf32, #tpu.memory_space<vmem>>, %arg12: memref<2x128x32xbf16, #tpu.memory_space<vmem>>, %arg13: memref<2x1x32xf32, #tpu.memory_space<vmem>>, %arg14: memref<1x32xf32, #tpu.memory_space<vmem>>, %arg15: memref<1x32xf32, #tpu.memory_space<vmem>>, %arg16: memref<32x32xbf16, #tpu.memory_space<vmem>>, %arg17: memref<2x32xf32, #tpu.memory_space<vmem>>) attributes {dimension_semantics = [], scalar_prefetch = 0 : i64, scratch_operands = 0 : i64, tpu.core_type = #tpu.core_type<tc>} {
    %c0 = arith.constant 0 : index
    %c0_0 = arith.constant 0 : index
    %0 = vector.load %arg0[%c0, %c0_0] : memref<16x32xf32, #tpu.memory_space<vmem>>, vector<16x32xf32>
    %1 = tpu.iota {dimensions = array<i32: 0>} : vector<8x8xi32>
    %2 = tpu.iota {dimensions = array<i32: 1>} : vector<8x8xi32>
    %3 = arith.cmpi sle, %2, %1 : vector<8x8xi32>
    %cst = arith.constant 0.000000e+00 : f32
    %cst_1 = arith.constant -1.000000e+30 : f32
    %4 = vector.broadcast %cst : f32 to vector<8x8xf32>
    %5 = vector.broadcast %cst_1 : f32 to vector<8x8xf32>
    %6 = arith.select %3, %4, %5 : vector<8x8xi1>, vector<8x8xf32>
    %c0_2 = arith.constant 0 : index
    %c0_3 = arith.constant 0 : index
    %c0_4 = arith.constant 0 : index
    %7 = vector.load %arg2[%c0_2, %c0_3, %c0_4] : memref<2x1x32xf32, #tpu.memory_space<vmem>>, vector<1x1x32xf32>
    %8 = vector.shape_cast %7 : vector<1x1x32xf32> to vector<1x32xf32>
    %c0_5 = arith.constant 0 : index
    %c0_6 = arith.constant 0 : index
    %c0_7 = arith.constant 0 : index
    %9 = vector.load %arg3[%c0_5, %c0_6, %c0_7] : memref<2x1x32xf32, #tpu.memory_space<vmem>>, vector<1x1x32xf32>
    %10 = vector.shape_cast %9 : vector<1x1x32xf32> to vector<1x32xf32>
    %c0_8 = arith.constant 0 : index
    %c0_9 = arith.constant 0 : index
    %c0_10 = arith.constant 0 : index
    %11 = vector.load %arg4[%c0_8, %c0_9, %c0_10] : memref<2x32x96xbf16, #tpu.memory_space<vmem>>, vector<1x32x96xbf16>
    %12 = vector.shape_cast %11 : vector<1x32x96xbf16> to vector<32x96xbf16>
    %c0_11 = arith.constant 0 : index
    %c0_12 = arith.constant 0 : index
    %c0_13 = arith.constant 0 : index
    %13 = vector.load %arg5[%c0_11, %c0_12, %c0_13] : memref<2x1x96xf32, #tpu.memory_space<vmem>>, vector<1x1x96xf32>
    %14 = vector.shape_cast %13 : vector<1x1x96xf32> to vector<1x96xf32>
    %c0_14 = arith.constant 0 : index
    %c0_15 = arith.constant 0 : index
    %c0_16 = arith.constant 0 : index
    %15 = vector.load %arg6[%c0_14, %c0_15, %c0_16] : memref<2x32x32xbf16, #tpu.memory_space<vmem>>, vector<1x32x32xbf16>
    %16 = vector.shape_cast %15 : vector<1x32x32xbf16> to vector<32x32xbf16>
    %c0_17 = arith.constant 0 : index
    %c0_18 = arith.constant 0 : index
    %c0_19 = arith.constant 0 : index
    %17 = vector.load %arg7[%c0_17, %c0_18, %c0_19] : memref<2x1x32xf32, #tpu.memory_space<vmem>>, vector<1x1x32xf32>
    %18 = vector.shape_cast %17 : vector<1x1x32xf32> to vector<1x32xf32>
    %c0_20 = arith.constant 0 : index
    %c0_21 = arith.constant 0 : index
    %c0_22 = arith.constant 0 : index
    %19 = vector.load %arg8[%c0_20, %c0_21, %c0_22] : memref<2x1x32xf32, #tpu.memory_space<vmem>>, vector<1x1x32xf32>
    %20 = vector.shape_cast %19 : vector<1x1x32xf32> to vector<1x32xf32>
    %c0_23 = arith.constant 0 : index
    %c0_24 = arith.constant 0 : index
    %c0_25 = arith.constant 0 : index
    %21 = vector.load %arg9[%c0_23, %c0_24, %c0_25] : memref<2x1x32xf32, #tpu.memory_space<vmem>>, vector<1x1x32xf32>
    %22 = vector.shape_cast %21 : vector<1x1x32xf32> to vector<1x32xf32>
    %c0_26 = arith.constant 0 : index
    %c0_27 = arith.constant 0 : index
    %c0_28 = arith.constant 0 : index
    %23 = vector.load %arg10[%c0_26, %c0_27, %c0_28] : memref<2x32x128xbf16, #tpu.memory_space<vmem>>, vector<1x32x128xbf16>
    %24 = vector.shape_cast %23 : vector<1x32x128xbf16> to vector<32x128xbf16>
    %c0_29 = arith.constant 0 : index
    %c0_30 = arith.constant 0 : index
    %c0_31 = arith.constant 0 : index
    %25 = vector.load %arg11[%c0_29, %c0_30, %c0_31] : memref<2x1x128xf32, #tpu.memory_space<vmem>>, vector<1x1x128xf32>
    %26 = vector.shape_cast %25 : vector<1x1x128xf32> to vector<1x128xf32>
    %c0_32 = arith.constant 0 : index
    %c0_33 = arith.constant 0 : index
    %c0_34 = arith.constant 0 : index
    %27 = vector.load %arg12[%c0_32, %c0_33, %c0_34] : memref<2x128x32xbf16, #tpu.memory_space<vmem>>, vector<1x128x32xbf16>
    %28 = vector.shape_cast %27 : vector<1x128x32xbf16> to vector<128x32xbf16>
    %c0_35 = arith.constant 0 : index
    %c0_36 = arith.constant 0 : index
    %c0_37 = arith.constant 0 : index
    %29 = vector.load %arg13[%c0_35, %c0_36, %c0_37] : memref<2x1x32xf32, #tpu.memory_space<vmem>>, vector<1x1x32xf32>
    %30 = vector.shape_cast %29 : vector<1x1x32xf32> to vector<1x32xf32>
    %cst_38 = arith.constant dense<0.000000e+00> : vector<16xf32>
    %31 = vector.multi_reduction <add>, %0, %cst_38 [1] : vector<16x32xf32> to vector<16xf32>
    %32 = vector.shape_cast %31 : vector<16xf32> to vector<16x1xf32>
    %cst_39 = arith.constant 3.200000e+01 : f32
    %33 = vector.broadcast %cst_39 : f32 to vector<16x1xf32>
    %34 = arith.divf %32, %33 : vector<16x1xf32>
    %35 = vector.broadcast %34 : vector<16x1xf32> to vector<16x32xf32>
    %36 = arith.subf %0, %35 : vector<16x32xf32>
    %37 = arith.mulf %36, %36 : vector<16x32xf32>
    %cst_40 = arith.constant dense<0.000000e+00> : vector<16xf32>
    %38 = vector.multi_reduction <add>, %37, %cst_40 [1] : vector<16x32xf32> to vector<16xf32>
    %39 = vector.shape_cast %38 : vector<16xf32> to vector<16x1xf32>
    %cst_41 = arith.constant 3.200000e+01 : f32
    %40 = vector.broadcast %cst_41 : f32 to vector<16x1xf32>
    %41 = arith.divf %39, %40 : vector<16x1xf32>
    %cst_42 = arith.constant 9.99999974E-6 : f32
    %42 = vector.broadcast %cst_42 : f32 to vector<16x1xf32>
    %43 = arith.addf %41, %42 : vector<16x1xf32>
    %44 = math.rsqrt %43 : vector<16x1xf32>
    %45 = vector.broadcast %44 : vector<16x1xf32> to vector<16x32xf32>
    %46 = arith.mulf %36, %45 : vector<16x32xf32>
    %47 = vector.broadcast %8 : vector<1x32xf32> to vector<16x32xf32>
    %48 = arith.mulf %46, %47 : vector<16x32xf32>
    %49 = vector.broadcast %10 : vector<1x32xf32> to vector<16x32xf32>
    %50 = arith.addf %48, %49 : vector<16x32xf32>
    %51 = arith.truncf %50 : vector<16x32xf32> to vector<16x32xbf16>
    %cst_43 = arith.constant dense<0.000000e+00> : vector<16x96xf32>
    %52 = tpu.matmul %51, %12, %cst_43 {dimension_numbers = #tpu.dot_dimension_numbers<[1], [0], [0], [1], [0, 0, 1, 1], [], []>} : vector<16x32xbf16>, vector<32x96xbf16>, vector<16x96xf32> -> vector<16x96xf32>
    %53 = vector.broadcast %14 : vector<1x96xf32> to vector<16x96xf32>
    %54 = arith.addf %52, %53 : vector<16x96xf32>
    %55 = vector.shape_cast %54 : vector<16x96xf32> to vector<2x8x96xf32>
    %56 = vector.extract_strided_slice %55 {offsets = [0, 0, 0], sizes = [2, 8, 32], strides = [1, 1, 1]} : vector<2x8x96xf32> to vector<2x8x32xf32>
    %cst_44 = arith.constant 2.500000e-01 : f32
    %57 = vector.broadcast %cst_44 : f32 to vector<2x8x32xf32>
    %58 = arith.mulf %56, %57 : vector<2x8x32xf32>
    %59 = vector.extract_strided_slice %55 {offsets = [0, 0, 32], sizes = [2, 8, 32], strides = [1, 1, 1]} : vector<2x8x96xf32> to vector<2x8x32xf32>
    %60 = vector.extract_strided_slice %55 {offsets = [0, 0, 64], sizes = [2, 8, 32], strides = [1, 1, 1]} : vector<2x8x96xf32> to vector<2x8x32xf32>
    %61 = vector.extract_strided_slice %58 {offsets = [0, 0, 0], sizes = [2, 8, 16], strides = [1, 1, 1]} : vector<2x8x32xf32> to vector<2x8x16xf32>
    %62 = arith.truncf %61 : vector<2x8x16xf32> to vector<2x8x16xbf16>
    %63 = vector.extract_strided_slice %59 {offsets = [0, 0, 0], sizes = [2, 8, 16], strides = [1, 1, 1]} : vector<2x8x32xf32> to vector<2x8x16xf32>
    %64 = arith.truncf %63 : vector<2x8x16xf32> to vector<2x8x16xbf16>
    "tpu.trace_start"() <{level = 10 : i32, message = "bqd,bkd->bqk"}> : () -> ()
    %cst_45 = arith.constant dense<0.000000e+00> : vector<2x8x8xf32>
    %65 = tpu.matmul %62, %64, %cst_45 {dimension_numbers = #tpu.dot_dimension_numbers<[2], [2], [1], [1], [0, 0, 0, 1, 1, 1], [0], [0]>} : vector<2x8x16xbf16>, vector<2x8x16xbf16>, vector<2x8x8xf32> -> vector<2x8x8xf32>
    "tpu.trace_stop"() : () -> ()
    %66 = vector.shape_cast %6 : vector<8x8xf32> to vector<1x8x8xf32>
    %67 = vector.broadcast %66 : vector<1x8x8xf32> to vector<2x8x8xf32>
    %68 = arith.addf %65, %67 : vector<2x8x8xf32>
    %cst_46 = arith.constant dense<0xFF800000> : vector<2x8xf32>
    %69 = vector.multi_reduction <maximumf>, %68, %cst_46 [2] : vector<2x8x8xf32> to vector<2x8xf32>
    %70 = vector.shape_cast %69 : vector<2x8xf32> to vector<2x8x1xf32>
    %71 = vector.broadcast %70 : vector<2x8x1xf32> to vector<2x8x8xf32>
    %72 = arith.subf %68, %71 : vector<2x8x8xf32>
    %73 = math.exp %72 : vector<2x8x8xf32>
    %cst_47 = arith.constant dense<0.000000e+00> : vector<2x8xf32>
    %74 = vector.multi_reduction <add>, %73, %cst_47 [2] : vector<2x8x8xf32> to vector<2x8xf32>
    %75 = vector.shape_cast %74 : vector<2x8xf32> to vector<2x8x1xf32>
    %76 = vector.broadcast %75 : vector<2x8x1xf32> to vector<2x8x8xf32>
    %77 = arith.divf %73, %76 : vector<2x8x8xf32>
    %78 = arith.truncf %77 : vector<2x8x8xf32> to vector<2x8x8xbf16>
    %79 = vector.extract_strided_slice %60 {offsets = [0, 0, 0], sizes = [2, 8, 16], strides = [1, 1, 1]} : vector<2x8x32xf32> to vector<2x8x16xf32>
    %80 = arith.truncf %79 : vector<2x8x16xf32> to vector<2x8x16xbf16>
    "tpu.trace_start"() <{level = 10 : i32, message = "bqk,bkd->bqd"}> : () -> ()
    %cst_48 = arith.constant dense<0.000000e+00> : vector<2x8x16xf32>
    %81 = tpu.matmul %78, %80, %cst_48 {dimension_numbers = #tpu.dot_dimension_numbers<[2], [1], [1], [2], [0, 0, 0, 1, 1, 2], [0], [0]>} : vector<2x8x8xbf16>, vector<2x8x16xbf16>, vector<2x8x16xf32> -> vector<2x8x16xf32>
    "tpu.trace_stop"() : () -> ()
    %82 = vector.shape_cast %81 : vector<2x8x16xf32> to vector<16x16xf32>
    %83 = arith.truncf %82 : vector<16x16xf32> to vector<16x16xbf16>
    %84 = vector.extract_strided_slice %16 {offsets = [0, 0], sizes = [16, 32], strides = [1, 1]} : vector<32x32xbf16> to vector<16x32xbf16>
    %cst_49 = arith.constant dense<0.000000e+00> : vector<16x32xf32>
    %85 = tpu.matmul %83, %84, %cst_49 {dimension_numbers = #tpu.dot_dimension_numbers<[1], [0], [0], [1], [0, 0, 1, 1], [], []>} : vector<16x16xbf16>, vector<16x32xbf16>, vector<16x32xf32> -> vector<16x32xf32>
    %86 = vector.extract_strided_slice %58 {offsets = [0, 0, 16], sizes = [2, 8, 16], strides = [1, 1, 1]} : vector<2x8x32xf32> to vector<2x8x16xf32>
    %87 = arith.truncf %86 : vector<2x8x16xf32> to vector<2x8x16xbf16>
    %88 = vector.extract_strided_slice %59 {offsets = [0, 0, 16], sizes = [2, 8, 16], strides = [1, 1, 1]} : vector<2x8x32xf32> to vector<2x8x16xf32>
    %89 = arith.truncf %88 : vector<2x8x16xf32> to vector<2x8x16xbf16>
    "tpu.trace_start"() <{level = 10 : i32, message = "bqd,bkd->bqk"}> : () -> ()
    %cst_50 = arith.constant dense<0.000000e+00> : vector<2x8x8xf32>
    %90 = tpu.matmul %87, %89, %cst_50 {dimension_numbers = #tpu.dot_dimension_numbers<[2], [2], [1], [1], [0, 0, 0, 1, 1, 1], [0], [0]>} : vector<2x8x16xbf16>, vector<2x8x16xbf16>, vector<2x8x8xf32> -> vector<2x8x8xf32>
    "tpu.trace_stop"() : () -> ()
    %91 = vector.shape_cast %6 : vector<8x8xf32> to vector<1x8x8xf32>
    %92 = vector.broadcast %91 : vector<1x8x8xf32> to vector<2x8x8xf32>
    %93 = arith.addf %90, %92 : vector<2x8x8xf32>
    %cst_51 = arith.constant dense<0xFF800000> : vector<2x8xf32>
    %94 = vector.multi_reduction <maximumf>, %93, %cst_51 [2] : vector<2x8x8xf32> to vector<2x8xf32>
    %95 = vector.shape_cast %94 : vector<2x8xf32> to vector<2x8x1xf32>
    %96 = vector.broadcast %95 : vector<2x8x1xf32> to vector<2x8x8xf32>
    %97 = arith.subf %93, %96 : vector<2x8x8xf32>
    %98 = math.exp %97 : vector<2x8x8xf32>
    %cst_52 = arith.constant dense<0.000000e+00> : vector<2x8xf32>
    %99 = vector.multi_reduction <add>, %98, %cst_52 [2] : vector<2x8x8xf32> to vector<2x8xf32>
    %100 = vector.shape_cast %99 : vector<2x8xf32> to vector<2x8x1xf32>
    %101 = vector.broadcast %100 : vector<2x8x1xf32> to vector<2x8x8xf32>
    %102 = arith.divf %98, %101 : vector<2x8x8xf32>
    %103 = arith.truncf %102 : vector<2x8x8xf32> to vector<2x8x8xbf16>
    %104 = vector.extract_strided_slice %60 {offsets = [0, 0, 16], sizes = [2, 8, 16], strides = [1, 1, 1]} : vector<2x8x32xf32> to vector<2x8x16xf32>
    %105 = arith.truncf %104 : vector<2x8x16xf32> to vector<2x8x16xbf16>
    "tpu.trace_start"() <{level = 10 : i32, message = "bqk,bkd->bqd"}> : () -> ()
    %cst_53 = arith.constant dense<0.000000e+00> : vector<2x8x16xf32>
    %106 = tpu.matmul %103, %105, %cst_53 {dimension_numbers = #tpu.dot_dimension_numbers<[2], [1], [1], [2], [0, 0, 0, 1, 1, 2], [0], [0]>} : vector<2x8x8xbf16>, vector<2x8x16xbf16>, vector<2x8x16xf32> -> vector<2x8x16xf32>
    "tpu.trace_stop"() : () -> ()
    %107 = vector.shape_cast %106 : vector<2x8x16xf32> to vector<16x16xf32>
    %108 = arith.truncf %107 : vector<16x16xf32> to vector<16x16xbf16>
    %109 = vector.extract_strided_slice %16 {offsets = [16, 0], sizes = [16, 32], strides = [1, 1]} : vector<32x32xbf16> to vector<16x32xbf16>
    %cst_54 = arith.constant dense<0.000000e+00> : vector<16x32xf32>
    %110 = tpu.matmul %108, %109, %cst_54 {dimension_numbers = #tpu.dot_dimension_numbers<[1], [0], [0], [1], [0, 0, 1, 1], [], []>} : vector<16x16xbf16>, vector<16x32xbf16>, vector<16x32xf32> -> vector<16x32xf32>
    %111 = arith.addf %85, %110 : vector<16x32xf32>
    %112 = vector.broadcast %18 : vector<1x32xf32> to vector<16x32xf32>
    %113 = arith.addf %111, %112 : vector<16x32xf32>
    %114 = arith.addf %0, %113 : vector<16x32xf32>
    %cst_55 = arith.constant dense<0.000000e+00> : vector<16xf32>
    %115 = vector.multi_reduction <add>, %114, %cst_55 [1] : vector<16x32xf32> to vector<16xf32>
    %116 = vector.shape_cast %115 : vector<16xf32> to vector<16x1xf32>
    %cst_56 = arith.constant 3.200000e+01 : f32
    %117 = vector.broadcast %cst_56 : f32 to vector<16x1xf32>
    %118 = arith.divf %116, %117 : vector<16x1xf32>
    %119 = vector.broadcast %118 : vector<16x1xf32> to vector<16x32xf32>
    %120 = arith.subf %114, %119 : vector<16x32xf32>
    %121 = arith.mulf %120, %120 : vector<16x32xf32>
    %cst_57 = arith.constant dense<0.000000e+00> : vector<16xf32>
    %122 = vector.multi_reduction <add>, %121, %cst_57 [1] : vector<16x32xf32> to vector<16xf32>
    %123 = vector.shape_cast %122 : vector<16xf32> to vector<16x1xf32>
    %cst_58 = arith.constant 3.200000e+01 : f32
    %124 = vector.broadcast %cst_58 : f32 to vector<16x1xf32>
    %125 = arith.divf %123, %124 : vector<16x1xf32>
    %cst_59 = arith.constant 9.99999974E-6 : f32
    %126 = vector.broadcast %cst_59 : f32 to vector<16x1xf32>
    %127 = arith.addf %125, %126 : vector<16x1xf32>
    %128 = math.rsqrt %127 : vector<16x1xf32>
    %129 = vector.broadcast %128 : vector<16x1xf32> to vector<16x32xf32>
    %130 = arith.mulf %120, %129 : vector<16x32xf32>
    %131 = vector.broadcast %20 : vector<1x32xf32> to vector<16x32xf32>
    %132 = arith.mulf %130, %131 : vector<16x32xf32>
    %133 = vector.broadcast %22 : vector<1x32xf32> to vector<16x32xf32>
    %134 = arith.addf %132, %133 : vector<16x32xf32>
    %135 = arith.truncf %134 : vector<16x32xf32> to vector<16x32xbf16>
    %cst_60 = arith.constant dense<0.000000e+00> : vector<16x128xf32>
    %136 = tpu.matmul %135, %24, %cst_60 {dimension_numbers = #tpu.dot_dimension_numbers<[1], [0], [0], [1], [0, 0, 1, 1], [], []>} : vector<16x32xbf16>, vector<32x128xbf16>, vector<16x128xf32> -> vector<16x128xf32>
    %137 = vector.broadcast %26 : vector<1x128xf32> to vector<16x128xf32>
    %138 = arith.addf %136, %137 : vector<16x128xf32>
    %cst_61 = arith.constant 5.000000e-01 : f32
    %139 = vector.broadcast %cst_61 : f32 to vector<16x128xf32>
    %140 = arith.mulf %139, %138 : vector<16x128xf32>
    %cst_62 = arith.constant 4.471500e-02 : f32
    %141 = vector.broadcast %cst_62 : f32 to vector<16x128xf32>
    %142 = arith.mulf %141, %138 : vector<16x128xf32>
    %143 = arith.mulf %142, %138 : vector<16x128xf32>
    %144 = arith.mulf %143, %138 : vector<16x128xf32>
    %145 = arith.addf %138, %144 : vector<16x128xf32>
    %cst_63 = arith.constant 0.797884583 : f32
    %146 = vector.broadcast %cst_63 : f32 to vector<16x128xf32>
    %147 = arith.mulf %146, %145 : vector<16x128xf32>
    %148 = math.tanh %147 : vector<16x128xf32>
    %cst_64 = arith.constant 1.000000e+00 : f32
    %149 = vector.broadcast %cst_64 : f32 to vector<16x128xf32>
    %150 = arith.addf %149, %148 : vector<16x128xf32>
    %151 = arith.mulf %140, %150 : vector<16x128xf32>
    %152 = arith.truncf %151 : vector<16x128xf32> to vector<16x128xbf16>
    %cst_65 = arith.constant dense<0.000000e+00> : vector<16x32xf32>
    %153 = tpu.matmul %152, %28, %cst_65 {dimension_numbers = #tpu.dot_dimension_numbers<[1], [0], [0], [1], [0, 0, 1, 1], [], []>} : vector<16x128xbf16>, vector<128x32xbf16>, vector<16x32xf32> -> vector<16x32xf32>
    %154 = arith.addf %114, %153 : vector<16x32xf32>
    %155 = vector.broadcast %30 : vector<1x32xf32> to vector<16x32xf32>
    %156 = arith.addf %154, %155 : vector<16x32xf32>
    %c1 = arith.constant 1 : index
    %c0_66 = arith.constant 0 : index
    %c0_67 = arith.constant 0 : index
    %157 = vector.load %arg2[%c1, %c0_66, %c0_67] : memref<2x1x32xf32, #tpu.memory_space<vmem>>, vector<1x1x32xf32>
    %158 = vector.shape_cast %157 : vector<1x1x32xf32> to vector<1x32xf32>
    %c1_68 = arith.constant 1 : index
    %c0_69 = arith.constant 0 : index
    %c0_70 = arith.constant 0 : index
    %159 = vector.load %arg3[%c1_68, %c0_69, %c0_70] : memref<2x1x32xf32, #tpu.memory_space<vmem>>, vector<1x1x32xf32>
    %160 = vector.shape_cast %159 : vector<1x1x32xf32> to vector<1x32xf32>
    %c1_71 = arith.constant 1 : index
    %c0_72 = arith.constant 0 : index
    %c0_73 = arith.constant 0 : index
    %161 = vector.load %arg4[%c1_71, %c0_72, %c0_73] : memref<2x32x96xbf16, #tpu.memory_space<vmem>>, vector<1x32x96xbf16>
    %162 = vector.shape_cast %161 : vector<1x32x96xbf16> to vector<32x96xbf16>
    %c1_74 = arith.constant 1 : index
    %c0_75 = arith.constant 0 : index
    %c0_76 = arith.constant 0 : index
    %163 = vector.load %arg5[%c1_74, %c0_75, %c0_76] : memref<2x1x96xf32, #tpu.memory_space<vmem>>, vector<1x1x96xf32>
    %164 = vector.shape_cast %163 : vector<1x1x96xf32> to vector<1x96xf32>
    %c1_77 = arith.constant 1 : index
    %c0_78 = arith.constant 0 : index
    %c0_79 = arith.constant 0 : index
    %165 = vector.load %arg6[%c1_77, %c0_78, %c0_79] : memref<2x32x32xbf16, #tpu.memory_space<vmem>>, vector<1x32x32xbf16>
    %166 = vector.shape_cast %165 : vector<1x32x32xbf16> to vector<32x32xbf16>
    %c1_80 = arith.constant 1 : index
    %c0_81 = arith.constant 0 : index
    %c0_82 = arith.constant 0 : index
    %167 = vector.load %arg7[%c1_80, %c0_81, %c0_82] : memref<2x1x32xf32, #tpu.memory_space<vmem>>, vector<1x1x32xf32>
    %168 = vector.shape_cast %167 : vector<1x1x32xf32> to vector<1x32xf32>
    %c1_83 = arith.constant 1 : index
    %c0_84 = arith.constant 0 : index
    %c0_85 = arith.constant 0 : index
    %169 = vector.load %arg8[%c1_83, %c0_84, %c0_85] : memref<2x1x32xf32, #tpu.memory_space<vmem>>, vector<1x1x32xf32>
    %170 = vector.shape_cast %169 : vector<1x1x32xf32> to vector<1x32xf32>
    %c1_86 = arith.constant 1 : index
    %c0_87 = arith.constant 0 : index
    %c0_88 = arith.constant 0 : index
    %171 = vector.load %arg9[%c1_86, %c0_87, %c0_88] : memref<2x1x32xf32, #tpu.memory_space<vmem>>, vector<1x1x32xf32>
    %172 = vector.shape_cast %171 : vector<1x1x32xf32> to vector<1x32xf32>
    %c1_89 = arith.constant 1 : index
    %c0_90 = arith.constant 0 : index
    %c0_91 = arith.constant 0 : index
    %173 = vector.load %arg10[%c1_89, %c0_90, %c0_91] : memref<2x32x128xbf16, #tpu.memory_space<vmem>>, vector<1x32x128xbf16>
    %174 = vector.shape_cast %173 : vector<1x32x128xbf16> to vector<32x128xbf16>
    %c1_92 = arith.constant 1 : index
    %c0_93 = arith.constant 0 : index
    %c0_94 = arith.constant 0 : index
    %175 = vector.load %arg11[%c1_92, %c0_93, %c0_94] : memref<2x1x128xf32, #tpu.memory_space<vmem>>, vector<1x1x128xf32>
    %176 = vector.shape_cast %175 : vector<1x1x128xf32> to vector<1x128xf32>
    %c1_95 = arith.constant 1 : index
    %c0_96 = arith.constant 0 : index
    %c0_97 = arith.constant 0 : index
    %177 = vector.load %arg12[%c1_95, %c0_96, %c0_97] : memref<2x128x32xbf16, #tpu.memory_space<vmem>>, vector<1x128x32xbf16>
    %178 = vector.shape_cast %177 : vector<1x128x32xbf16> to vector<128x32xbf16>
    %c1_98 = arith.constant 1 : index
    %c0_99 = arith.constant 0 : index
    %c0_100 = arith.constant 0 : index
    %179 = vector.load %arg13[%c1_98, %c0_99, %c0_100] : memref<2x1x32xf32, #tpu.memory_space<vmem>>, vector<1x1x32xf32>
    %180 = vector.shape_cast %179 : vector<1x1x32xf32> to vector<1x32xf32>
    %cst_101 = arith.constant dense<0.000000e+00> : vector<16xf32>
    %181 = vector.multi_reduction <add>, %156, %cst_101 [1] : vector<16x32xf32> to vector<16xf32>
    %182 = vector.shape_cast %181 : vector<16xf32> to vector<16x1xf32>
    %cst_102 = arith.constant 3.200000e+01 : f32
    %183 = vector.broadcast %cst_102 : f32 to vector<16x1xf32>
    %184 = arith.divf %182, %183 : vector<16x1xf32>
    %185 = vector.broadcast %184 : vector<16x1xf32> to vector<16x32xf32>
    %186 = arith.subf %156, %185 : vector<16x32xf32>
    %187 = arith.mulf %186, %186 : vector<16x32xf32>
    %cst_103 = arith.constant dense<0.000000e+00> : vector<16xf32>
    %188 = vector.multi_reduction <add>, %187, %cst_103 [1] : vector<16x32xf32> to vector<16xf32>
    %189 = vector.shape_cast %188 : vector<16xf32> to vector<16x1xf32>
    %cst_104 = arith.constant 3.200000e+01 : f32
    %190 = vector.broadcast %cst_104 : f32 to vector<16x1xf32>
    %191 = arith.divf %189, %190 : vector<16x1xf32>
    %cst_105 = arith.constant 9.99999974E-6 : f32
    %192 = vector.broadcast %cst_105 : f32 to vector<16x1xf32>
    %193 = arith.addf %191, %192 : vector<16x1xf32>
    %194 = math.rsqrt %193 : vector<16x1xf32>
    %195 = vector.broadcast %194 : vector<16x1xf32> to vector<16x32xf32>
    %196 = arith.mulf %186, %195 : vector<16x32xf32>
    %197 = vector.broadcast %158 : vector<1x32xf32> to vector<16x32xf32>
    %198 = arith.mulf %196, %197 : vector<16x32xf32>
    %199 = vector.broadcast %160 : vector<1x32xf32> to vector<16x32xf32>
    %200 = arith.addf %198, %199 : vector<16x32xf32>
    %201 = arith.truncf %200 : vector<16x32xf32> to vector<16x32xbf16>
    %cst_106 = arith.constant dense<0.000000e+00> : vector<16x96xf32>
    %202 = tpu.matmul %201, %162, %cst_106 {dimension_numbers = #tpu.dot_dimension_numbers<[1], [0], [0], [1], [0, 0, 1, 1], [], []>} : vector<16x32xbf16>, vector<32x96xbf16>, vector<16x96xf32> -> vector<16x96xf32>
    %203 = vector.broadcast %164 : vector<1x96xf32> to vector<16x96xf32>
    %204 = arith.addf %202, %203 : vector<16x96xf32>
    %205 = vector.shape_cast %204 : vector<16x96xf32> to vector<2x8x96xf32>
    %206 = vector.extract_strided_slice %205 {offsets = [0, 0, 0], sizes = [2, 8, 32], strides = [1, 1, 1]} : vector<2x8x96xf32> to vector<2x8x32xf32>
    %cst_107 = arith.constant 2.500000e-01 : f32
    %207 = vector.broadcast %cst_107 : f32 to vector<2x8x32xf32>
    %208 = arith.mulf %206, %207 : vector<2x8x32xf32>
    %209 = vector.extract_strided_slice %205 {offsets = [0, 0, 32], sizes = [2, 8, 32], strides = [1, 1, 1]} : vector<2x8x96xf32> to vector<2x8x32xf32>
    %210 = vector.extract_strided_slice %205 {offsets = [0, 0, 64], sizes = [2, 8, 32], strides = [1, 1, 1]} : vector<2x8x96xf32> to vector<2x8x32xf32>
    %211 = vector.extract_strided_slice %208 {offsets = [0, 0, 0], sizes = [2, 8, 16], strides = [1, 1, 1]} : vector<2x8x32xf32> to vector<2x8x16xf32>
    %212 = arith.truncf %211 : vector<2x8x16xf32> to vector<2x8x16xbf16>
    %213 = vector.extract_strided_slice %209 {offsets = [0, 0, 0], sizes = [2, 8, 16], strides = [1, 1, 1]} : vector<2x8x32xf32> to vector<2x8x16xf32>
    %214 = arith.truncf %213 : vector<2x8x16xf32> to vector<2x8x16xbf16>
    "tpu.trace_start"() <{level = 10 : i32, message = "bqd,bkd->bqk"}> : () -> ()
    %cst_108 = arith.constant dense<0.000000e+00> : vector<2x8x8xf32>
    %215 = tpu.matmul %212, %214, %cst_108 {dimension_numbers = #tpu.dot_dimension_numbers<[2], [2], [1], [1], [0, 0, 0, 1, 1, 1], [0], [0]>} : vector<2x8x16xbf16>, vector<2x8x16xbf16>, vector<2x8x8xf32> -> vector<2x8x8xf32>
    "tpu.trace_stop"() : () -> ()
    %216 = vector.shape_cast %6 : vector<8x8xf32> to vector<1x8x8xf32>
    %217 = vector.broadcast %216 : vector<1x8x8xf32> to vector<2x8x8xf32>
    %218 = arith.addf %215, %217 : vector<2x8x8xf32>
    %cst_109 = arith.constant dense<0xFF800000> : vector<2x8xf32>
    %219 = vector.multi_reduction <maximumf>, %218, %cst_109 [2] : vector<2x8x8xf32> to vector<2x8xf32>
    %220 = vector.shape_cast %219 : vector<2x8xf32> to vector<2x8x1xf32>
    %221 = vector.broadcast %220 : vector<2x8x1xf32> to vector<2x8x8xf32>
    %222 = arith.subf %218, %221 : vector<2x8x8xf32>
    %223 = math.exp %222 : vector<2x8x8xf32>
    %cst_110 = arith.constant dense<0.000000e+00> : vector<2x8xf32>
    %224 = vector.multi_reduction <add>, %223, %cst_110 [2] : vector<2x8x8xf32> to vector<2x8xf32>
    %225 = vector.shape_cast %224 : vector<2x8xf32> to vector<2x8x1xf32>
    %226 = vector.broadcast %225 : vector<2x8x1xf32> to vector<2x8x8xf32>
    %227 = arith.divf %223, %226 : vector<2x8x8xf32>
    %228 = arith.truncf %227 : vector<2x8x8xf32> to vector<2x8x8xbf16>
    %229 = vector.extract_strided_slice %210 {offsets = [0, 0, 0], sizes = [2, 8, 16], strides = [1, 1, 1]} : vector<2x8x32xf32> to vector<2x8x16xf32>
    %230 = arith.truncf %229 : vector<2x8x16xf32> to vector<2x8x16xbf16>
    "tpu.trace_start"() <{level = 10 : i32, message = "bqk,bkd->bqd"}> : () -> ()
    %cst_111 = arith.constant dense<0.000000e+00> : vector<2x8x16xf32>
    %231 = tpu.matmul %228, %230, %cst_111 {dimension_numbers = #tpu.dot_dimension_numbers<[2], [1], [1], [2], [0, 0, 0, 1, 1, 2], [0], [0]>} : vector<2x8x8xbf16>, vector<2x8x16xbf16>, vector<2x8x16xf32> -> vector<2x8x16xf32>
    "tpu.trace_stop"() : () -> ()
    %232 = vector.shape_cast %231 : vector<2x8x16xf32> to vector<16x16xf32>
    %233 = arith.truncf %232 : vector<16x16xf32> to vector<16x16xbf16>
    %234 = vector.extract_strided_slice %166 {offsets = [0, 0], sizes = [16, 32], strides = [1, 1]} : vector<32x32xbf16> to vector<16x32xbf16>
    %cst_112 = arith.constant dense<0.000000e+00> : vector<16x32xf32>
    %235 = tpu.matmul %233, %234, %cst_112 {dimension_numbers = #tpu.dot_dimension_numbers<[1], [0], [0], [1], [0, 0, 1, 1], [], []>} : vector<16x16xbf16>, vector<16x32xbf16>, vector<16x32xf32> -> vector<16x32xf32>
    %236 = vector.extract_strided_slice %208 {offsets = [0, 0, 16], sizes = [2, 8, 16], strides = [1, 1, 1]} : vector<2x8x32xf32> to vector<2x8x16xf32>
    %237 = arith.truncf %236 : vector<2x8x16xf32> to vector<2x8x16xbf16>
    %238 = vector.extract_strided_slice %209 {offsets = [0, 0, 16], sizes = [2, 8, 16], strides = [1, 1, 1]} : vector<2x8x32xf32> to vector<2x8x16xf32>
    %239 = arith.truncf %238 : vector<2x8x16xf32> to vector<2x8x16xbf16>
    "tpu.trace_start"() <{level = 10 : i32, message = "bqd,bkd->bqk"}> : () -> ()
    %cst_113 = arith.constant dense<0.000000e+00> : vector<2x8x8xf32>
    %240 = tpu.matmul %237, %239, %cst_113 {dimension_numbers = #tpu.dot_dimension_numbers<[2], [2], [1], [1], [0, 0, 0, 1, 1, 1], [0], [0]>} : vector<2x8x16xbf16>, vector<2x8x16xbf16>, vector<2x8x8xf32> -> vector<2x8x8xf32>
    "tpu.trace_stop"() : () -> ()
    %241 = vector.shape_cast %6 : vector<8x8xf32> to vector<1x8x8xf32>
    %242 = vector.broadcast %241 : vector<1x8x8xf32> to vector<2x8x8xf32>
    %243 = arith.addf %240, %242 : vector<2x8x8xf32>
    %cst_114 = arith.constant dense<0xFF800000> : vector<2x8xf32>
    %244 = vector.multi_reduction <maximumf>, %243, %cst_114 [2] : vector<2x8x8xf32> to vector<2x8xf32>
    %245 = vector.shape_cast %244 : vector<2x8xf32> to vector<2x8x1xf32>
    %246 = vector.broadcast %245 : vector<2x8x1xf32> to vector<2x8x8xf32>
    %247 = arith.subf %243, %246 : vector<2x8x8xf32>
    %248 = math.exp %247 : vector<2x8x8xf32>
    %cst_115 = arith.constant dense<0.000000e+00> : vector<2x8xf32>
    %249 = vector.multi_reduction <add>, %248, %cst_115 [2] : vector<2x8x8xf32> to vector<2x8xf32>
    %250 = vector.shape_cast %249 : vector<2x8xf32> to vector<2x8x1xf32>
    %251 = vector.broadcast %250 : vector<2x8x1xf32> to vector<2x8x8xf32>
    %252 = arith.divf %248, %251 : vector<2x8x8xf32>
    %253 = arith.truncf %252 : vector<2x8x8xf32> to vector<2x8x8xbf16>
    %254 = vector.extract_strided_slice %210 {offsets = [0, 0, 16], sizes = [2, 8, 16], strides = [1, 1, 1]} : vector<2x8x32xf32> to vector<2x8x16xf32>
    %255 = arith.truncf %254 : vector<2x8x16xf32> to vector<2x8x16xbf16>
    "tpu.trace_start"() <{level = 10 : i32, message = "bqk,bkd->bqd"}> : () -> ()
    %cst_116 = arith.constant dense<0.000000e+00> : vector<2x8x16xf32>
    %256 = tpu.matmul %253, %255, %cst_116 {dimension_numbers = #tpu.dot_dimension_numbers<[2], [1], [1], [2], [0, 0, 0, 1, 1, 2], [0], [0]>} : vector<2x8x8xbf16>, vector<2x8x16xbf16>, vector<2x8x16xf32> -> vector<2x8x16xf32>
    "tpu.trace_stop"() : () -> ()
    %257 = vector.shape_cast %256 : vector<2x8x16xf32> to vector<16x16xf32>
    %258 = arith.truncf %257 : vector<16x16xf32> to vector<16x16xbf16>
    %259 = vector.extract_strided_slice %166 {offsets = [16, 0], sizes = [16, 32], strides = [1, 1]} : vector<32x32xbf16> to vector<16x32xbf16>
    %cst_117 = arith.constant dense<0.000000e+00> : vector<16x32xf32>
    %260 = tpu.matmul %258, %259, %cst_117 {dimension_numbers = #tpu.dot_dimension_numbers<[1], [0], [0], [1], [0, 0, 1, 1], [], []>} : vector<16x16xbf16>, vector<16x32xbf16>, vector<16x32xf32> -> vector<16x32xf32>
    %261 = arith.addf %235, %260 : vector<16x32xf32>
    %262 = vector.broadcast %168 : vector<1x32xf32> to vector<16x32xf32>
    %263 = arith.addf %261, %262 : vector<16x32xf32>
    %264 = arith.addf %156, %263 : vector<16x32xf32>
    %cst_118 = arith.constant dense<0.000000e+00> : vector<16xf32>
    %265 = vector.multi_reduction <add>, %264, %cst_118 [1] : vector<16x32xf32> to vector<16xf32>
    %266 = vector.shape_cast %265 : vector<16xf32> to vector<16x1xf32>
    %cst_119 = arith.constant 3.200000e+01 : f32
    %267 = vector.broadcast %cst_119 : f32 to vector<16x1xf32>
    %268 = arith.divf %266, %267 : vector<16x1xf32>
    %269 = vector.broadcast %268 : vector<16x1xf32> to vector<16x32xf32>
    %270 = arith.subf %264, %269 : vector<16x32xf32>
    %271 = arith.mulf %270, %270 : vector<16x32xf32>
    %cst_120 = arith.constant dense<0.000000e+00> : vector<16xf32>
    %272 = vector.multi_reduction <add>, %271, %cst_120 [1] : vector<16x32xf32> to vector<16xf32>
    %273 = vector.shape_cast %272 : vector<16xf32> to vector<16x1xf32>
    %cst_121 = arith.constant 3.200000e+01 : f32
    %274 = vector.broadcast %cst_121 : f32 to vector<16x1xf32>
    %275 = arith.divf %273, %274 : vector<16x1xf32>
    %cst_122 = arith.constant 9.99999974E-6 : f32
    %276 = vector.broadcast %cst_122 : f32 to vector<16x1xf32>
    %277 = arith.addf %275, %276 : vector<16x1xf32>
    %278 = math.rsqrt %277 : vector<16x1xf32>
    %279 = vector.broadcast %278 : vector<16x1xf32> to vector<16x32xf32>
    %280 = arith.mulf %270, %279 : vector<16x32xf32>
    %281 = vector.broadcast %170 : vector<1x32xf32> to vector<16x32xf32>
    %282 = arith.mulf %280, %281 : vector<16x32xf32>
    %283 = vector.broadcast %172 : vector<1x32xf32> to vector<16x32xf32>
    %284 = arith.addf %282, %283 : vector<16x32xf32>
    %285 = arith.truncf %284 : vector<16x32xf32> to vector<16x32xbf16>
    %cst_123 = arith.constant dense<0.000000e+00> : vector<16x128xf32>
    %286 = tpu.matmul %285, %174, %cst_123 {dimension_numbers = #tpu.dot_dimension_numbers<[1], [0], [0], [1], [0, 0, 1, 1], [], []>} : vector<16x32xbf16>, vector<32x128xbf16>, vector<16x128xf32> -> vector<16x128xf32>
    %287 = vector.broadcast %176 : vector<1x128xf32> to vector<16x128xf32>
    %288 = arith.addf %286, %287 : vector<16x128xf32>
    %cst_124 = arith.constant 5.000000e-01 : f32
    %289 = vector.broadcast %cst_124 : f32 to vector<16x128xf32>
    %290 = arith.mulf %289, %288 : vector<16x128xf32>
    %cst_125 = arith.constant 4.471500e-02 : f32
    %291 = vector.broadcast %cst_125 : f32 to vector<16x128xf32>
    %292 = arith.mulf %291, %288 : vector<16x128xf32>
    %293 = arith.mulf %292, %288 : vector<16x128xf32>
    %294 = arith.mulf %293, %288 : vector<16x128xf32>
    %295 = arith.addf %288, %294 : vector<16x128xf32>
    %cst_126 = arith.constant 0.797884583 : f32
    %296 = vector.broadcast %cst_126 : f32 to vector<16x128xf32>
    %297 = arith.mulf %296, %295 : vector<16x128xf32>
    %298 = math.tanh %297 : vector<16x128xf32>
    %cst_127 = arith.constant 1.000000e+00 : f32
    %299 = vector.broadcast %cst_127 : f32 to vector<16x128xf32>
    %300 = arith.addf %299, %298 : vector<16x128xf32>
    %301 = arith.mulf %290, %300 : vector<16x128xf32>
    %302 = arith.truncf %301 : vector<16x128xf32> to vector<16x128xbf16>
    %cst_128 = arith.constant dense<0.000000e+00> : vector<16x32xf32>
    %303 = tpu.matmul %302, %178, %cst_128 {dimension_numbers = #tpu.dot_dimension_numbers<[1], [0], [0], [1], [0, 0, 1, 1], [], []>} : vector<16x128xbf16>, vector<128x32xbf16>, vector<16x32xf32> -> vector<16x32xf32>
    %304 = arith.addf %264, %303 : vector<16x32xf32>
    %305 = vector.broadcast %180 : vector<1x32xf32> to vector<16x32xf32>
    %306 = arith.addf %304, %305 : vector<16x32xf32>
    %c0_129 = arith.constant 0 : index
    %c0_130 = arith.constant 0 : index
    %307 = vector.load %arg14[%c0_129, %c0_130] : memref<1x32xf32, #tpu.memory_space<vmem>>, vector<1x32xf32>
    %c0_131 = arith.constant 0 : index
    %c0_132 = arith.constant 0 : index
    %308 = vector.load %arg15[%c0_131, %c0_132] : memref<1x32xf32, #tpu.memory_space<vmem>>, vector<1x32xf32>
    %cst_133 = arith.constant dense<0.000000e+00> : vector<16xf32>
    %309 = vector.multi_reduction <add>, %306, %cst_133 [1] : vector<16x32xf32> to vector<16xf32>
    %310 = vector.shape_cast %309 : vector<16xf32> to vector<16x1xf32>
    %cst_134 = arith.constant 3.200000e+01 : f32
    %311 = vector.broadcast %cst_134 : f32 to vector<16x1xf32>
    %312 = arith.divf %310, %311 : vector<16x1xf32>
    %313 = vector.broadcast %312 : vector<16x1xf32> to vector<16x32xf32>
    %314 = arith.subf %306, %313 : vector<16x32xf32>
    %315 = arith.mulf %314, %314 : vector<16x32xf32>
    %cst_135 = arith.constant dense<0.000000e+00> : vector<16xf32>
    %316 = vector.multi_reduction <add>, %315, %cst_135 [1] : vector<16x32xf32> to vector<16xf32>
    %317 = vector.shape_cast %316 : vector<16xf32> to vector<16x1xf32>
    %cst_136 = arith.constant 3.200000e+01 : f32
    %318 = vector.broadcast %cst_136 : f32 to vector<16x1xf32>
    %319 = arith.divf %317, %318 : vector<16x1xf32>
    %cst_137 = arith.constant 9.99999974E-6 : f32
    %320 = vector.broadcast %cst_137 : f32 to vector<16x1xf32>
    %321 = arith.addf %319, %320 : vector<16x1xf32>
    %322 = math.rsqrt %321 : vector<16x1xf32>
    %323 = vector.broadcast %322 : vector<16x1xf32> to vector<16x32xf32>
    %324 = arith.mulf %314, %323 : vector<16x32xf32>
    %325 = vector.broadcast %307 : vector<1x32xf32> to vector<16x32xf32>
    %326 = arith.mulf %324, %325 : vector<16x32xf32>
    %327 = vector.broadcast %308 : vector<1x32xf32> to vector<16x32xf32>
    %328 = arith.addf %326, %327 : vector<16x32xf32>
    %c0_138 = arith.constant 0 : index
    %c0_139 = arith.constant 0 : index
    %329 = vector.load %arg1[%c0_138, %c0_139] : memref<2x16xf32, #tpu.memory_space<vmem>>, vector<2x16xf32>
    %cst_140 = arith.constant dense<0.000000e+00> : vector<2x32xf32>
    %330 = tpu.matmul %329, %328, %cst_140 {dimension_numbers = #tpu.dot_dimension_numbers<[1], [0], [0], [1], [0, 0, 1, 1], [], []>} : vector<2x16xf32>, vector<16x32xf32>, vector<2x32xf32> -> vector<2x32xf32>
    %331 = arith.truncf %330 : vector<2x32xf32> to vector<2x32xbf16>
    %c0_141 = arith.constant 0 : index
    %c0_142 = arith.constant 0 : index
    %332 = vector.load %arg16[%c0_141, %c0_142] : memref<32x32xbf16, #tpu.memory_space<vmem>>, vector<32x32xbf16>
    %cst_143 = arith.constant dense<0.000000e+00> : vector<2x32xf32>
    %333 = tpu.matmul %331, %332, %cst_143 {dimension_numbers = #tpu.dot_dimension_numbers<[1], [0], [0], [1], [0, 0, 1, 1], [], []>} : vector<2x32xbf16>, vector<32x32xbf16>, vector<2x32xf32> -> vector<2x32xf32>
    %334 = arith.mulf %333, %333 : vector<2x32xf32>
    %cst_144 = arith.constant dense<0.000000e+00> : vector<2xf32>
    %335 = vector.multi_reduction <add>, %334, %cst_144 [1] : vector<2x32xf32> to vector<2xf32>
    %336 = vector.shape_cast %335 : vector<2xf32> to vector<2x1xf32>
    %cst_145 = arith.constant 1.000000e-24 : f32
    %337 = vector.broadcast %cst_145 : f32 to vector<2x1xf32>
    %338 = arith.maximumf %336, %337 : vector<2x1xf32>
    %339 = math.rsqrt %338 : vector<2x1xf32>
    %340 = vector.broadcast %339 : vector<2x1xf32> to vector<2x32xf32>
    %341 = arith.mulf %333, %340 : vector<2x32xf32>
    %c0_146 = arith.constant 0 : index
    %c0_147 = arith.constant 0 : index
    %342 = vector.load %arg17[%c0_146, %c0_147] : memref<2x32xf32, #tpu.memory_space<vmem>>, vector<2x32xf32>
    tpu.vector_store %arg17[%c0_146, %c0_147], %341 {strides = array<i32>} : memref<2x32xf32, #tpu.memory_space<vmem>>, vector<2x32xf32>,
    return
  }
}

module attributes {stable_mosaic.version = 11 : i64} {
  func.func @_vision_kernel(%arg0: memref<16x192xf32, #tpu.memory_space<vmem>>, %arg1: memref<2x32xf32, #tpu.memory_space<vmem>>, %arg2: memref<16x32xf32, #tpu.memory_space<vmem>>, %arg3: memref<192x32xbf16, #tpu.memory_space<vmem>>, %arg4: memref<2x1x32xf32, #tpu.memory_space<vmem>>, %arg5: memref<2x1x32xf32, #tpu.memory_space<vmem>>, %arg6: memref<2x32x96xbf16, #tpu.memory_space<vmem>>, %arg7: memref<2x1x96xf32, #tpu.memory_space<vmem>>, %arg8: memref<2x32x32xbf16, #tpu.memory_space<vmem>>, %arg9: memref<2x1x32xf32, #tpu.memory_space<vmem>>, %arg10: memref<2x1x32xf32, #tpu.memory_space<vmem>>, %arg11: memref<2x1x32xf32, #tpu.memory_space<vmem>>, %arg12: memref<2x32x128xbf16, #tpu.memory_space<vmem>>, %arg13: memref<2x1x128xf32, #tpu.memory_space<vmem>>, %arg14: memref<2x128x32xbf16, #tpu.memory_space<vmem>>, %arg15: memref<2x1x32xf32, #tpu.memory_space<vmem>>, %arg16: memref<1x32xf32, #tpu.memory_space<vmem>>, %arg17: memref<1x32xf32, #tpu.memory_space<vmem>>, %arg18: memref<2x32xf32, #tpu.memory_space<vmem>>) attributes {dimension_semantics = [], scalar_prefetch = 0 : i64, scratch_operands = 0 : i64, tpu.core_type = #tpu.core_type<tc>} {
    %c0 = arith.constant 0 : index
    %c0_0 = arith.constant 0 : index
    %0 = vector.load %arg0[%c0, %c0_0] : memref<16x192xf32, #tpu.memory_space<vmem>>, vector<16x192xf32>
    %1 = arith.truncf %0 : vector<16x192xf32> to vector<16x192xbf16>
    %c0_1 = arith.constant 0 : index
    %c0_2 = arith.constant 0 : index
    %2 = vector.load %arg3[%c0_1, %c0_2] : memref<192x32xbf16, #tpu.memory_space<vmem>>, vector<192x32xbf16>
    %cst = arith.constant dense<0.000000e+00> : vector<16x32xf32>
    %3 = tpu.matmul %1, %2, %cst {dimension_numbers = #tpu.dot_dimension_numbers<[1], [0], [0], [1], [0, 0, 1, 1], [], []>} : vector<16x192xbf16>, vector<192x32xbf16>, vector<16x32xf32> -> vector<16x32xf32>
    %c0_3 = arith.constant 0 : index
    %c0_4 = arith.constant 0 : index
    %4 = vector.load %arg2[%c0_3, %c0_4] : memref<16x32xf32, #tpu.memory_space<vmem>>, vector<16x32xf32>
    %5 = arith.addf %3, %4 : vector<16x32xf32>
    %6 = tpu.iota {dimensions = array<i32: 1>} : vector<8x8xi32>
    %c5_i32 = arith.constant 5 : i32
    %7 = vector.broadcast %c5_i32 : i32 to vector<8x8xi32>
    %8 = arith.cmpi slt, %6, %7 : vector<8x8xi32>
    %cst_5 = arith.constant 0.000000e+00 : f32
    %cst_6 = arith.constant -1.000000e+30 : f32
    %9 = vector.broadcast %cst_5 : f32 to vector<8x8xf32>
    %10 = vector.broadcast %cst_6 : f32 to vector<8x8xf32>
    %11 = arith.select %8, %9, %10 : vector<8x8xi1>, vector<8x8xf32>
    %c0_7 = arith.constant 0 : index
    %c0_8 = arith.constant 0 : index
    %c0_9 = arith.constant 0 : index
    %12 = vector.load %arg4[%c0_7, %c0_8, %c0_9] : memref<2x1x32xf32, #tpu.memory_space<vmem>>, vector<1x1x32xf32>
    %13 = vector.shape_cast %12 : vector<1x1x32xf32> to vector<1x32xf32>
    %c0_10 = arith.constant 0 : index
    %c0_11 = arith.constant 0 : index
    %c0_12 = arith.constant 0 : index
    %14 = vector.load %arg5[%c0_10, %c0_11, %c0_12] : memref<2x1x32xf32, #tpu.memory_space<vmem>>, vector<1x1x32xf32>
    %15 = vector.shape_cast %14 : vector<1x1x32xf32> to vector<1x32xf32>
    %c0_13 = arith.constant 0 : index
    %c0_14 = arith.constant 0 : index
    %c0_15 = arith.constant 0 : index
    %16 = vector.load %arg6[%c0_13, %c0_14, %c0_15] : memref<2x32x96xbf16, #tpu.memory_space<vmem>>, vector<1x32x96xbf16>
    %17 = vector.shape_cast %16 : vector<1x32x96xbf16> to vector<32x96xbf16>
    %c0_16 = arith.constant 0 : index
    %c0_17 = arith.constant 0 : index
    %c0_18 = arith.constant 0 : index
    %18 = vector.load %arg7[%c0_16, %c0_17, %c0_18] : memref<2x1x96xf32, #tpu.memory_space<vmem>>, vector<1x1x96xf32>
    %19 = vector.shape_cast %18 : vector<1x1x96xf32> to vector<1x96xf32>
    %c0_19 = arith.constant 0 : index
    %c0_20 = arith.constant 0 : index
    %c0_21 = arith.constant 0 : index
    %20 = vector.load %arg8[%c0_19, %c0_20, %c0_21] : memref<2x32x32xbf16, #tpu.memory_space<vmem>>, vector<1x32x32xbf16>
    %21 = vector.shape_cast %20 : vector<1x32x32xbf16> to vector<32x32xbf16>
    %c0_22 = arith.constant 0 : index
    %c0_23 = arith.constant 0 : index
    %c0_24 = arith.constant 0 : index
    %22 = vector.load %arg9[%c0_22, %c0_23, %c0_24] : memref<2x1x32xf32, #tpu.memory_space<vmem>>, vector<1x1x32xf32>
    %23 = vector.shape_cast %22 : vector<1x1x32xf32> to vector<1x32xf32>
    %c0_25 = arith.constant 0 : index
    %c0_26 = arith.constant 0 : index
    %c0_27 = arith.constant 0 : index
    %24 = vector.load %arg10[%c0_25, %c0_26, %c0_27] : memref<2x1x32xf32, #tpu.memory_space<vmem>>, vector<1x1x32xf32>
    %25 = vector.shape_cast %24 : vector<1x1x32xf32> to vector<1x32xf32>
    %c0_28 = arith.constant 0 : index
    %c0_29 = arith.constant 0 : index
    %c0_30 = arith.constant 0 : index
    %26 = vector.load %arg11[%c0_28, %c0_29, %c0_30] : memref<2x1x32xf32, #tpu.memory_space<vmem>>, vector<1x1x32xf32>
    %27 = vector.shape_cast %26 : vector<1x1x32xf32> to vector<1x32xf32>
    %c0_31 = arith.constant 0 : index
    %c0_32 = arith.constant 0 : index
    %c0_33 = arith.constant 0 : index
    %28 = vector.load %arg12[%c0_31, %c0_32, %c0_33] : memref<2x32x128xbf16, #tpu.memory_space<vmem>>, vector<1x32x128xbf16>
    %29 = vector.shape_cast %28 : vector<1x32x128xbf16> to vector<32x128xbf16>
    %c0_34 = arith.constant 0 : index
    %c0_35 = arith.constant 0 : index
    %c0_36 = arith.constant 0 : index
    %30 = vector.load %arg13[%c0_34, %c0_35, %c0_36] : memref<2x1x128xf32, #tpu.memory_space<vmem>>, vector<1x1x128xf32>
    %31 = vector.shape_cast %30 : vector<1x1x128xf32> to vector<1x128xf32>
    %c0_37 = arith.constant 0 : index
    %c0_38 = arith.constant 0 : index
    %c0_39 = arith.constant 0 : index
    %32 = vector.load %arg14[%c0_37, %c0_38, %c0_39] : memref<2x128x32xbf16, #tpu.memory_space<vmem>>, vector<1x128x32xbf16>
    %33 = vector.shape_cast %32 : vector<1x128x32xbf16> to vector<128x32xbf16>
    %c0_40 = arith.constant 0 : index
    %c0_41 = arith.constant 0 : index
    %c0_42 = arith.constant 0 : index
    %34 = vector.load %arg15[%c0_40, %c0_41, %c0_42] : memref<2x1x32xf32, #tpu.memory_space<vmem>>, vector<1x1x32xf32>
    %35 = vector.shape_cast %34 : vector<1x1x32xf32> to vector<1x32xf32>
    %cst_43 = arith.constant dense<0.000000e+00> : vector<16xf32>
    %36 = vector.multi_reduction <add>, %5, %cst_43 [1] : vector<16x32xf32> to vector<16xf32>
    %37 = vector.shape_cast %36 : vector<16xf32> to vector<16x1xf32>
    %cst_44 = arith.constant 3.200000e+01 : f32
    %38 = vector.broadcast %cst_44 : f32 to vector<16x1xf32>
    %39 = arith.divf %37, %38 : vector<16x1xf32>
    %40 = vector.broadcast %39 : vector<16x1xf32> to vector<16x32xf32>
    %41 = arith.subf %5, %40 : vector<16x32xf32>
    %42 = arith.mulf %41, %41 : vector<16x32xf32>
    %cst_45 = arith.constant dense<0.000000e+00> : vector<16xf32>
    %43 = vector.multi_reduction <add>, %42, %cst_45 [1] : vector<16x32xf32> to vector<16xf32>
    %44 = vector.shape_cast %43 : vector<16xf32> to vector<16x1xf32>
    %cst_46 = arith.constant 3.200000e+01 : f32
    %45 = vector.broadcast %cst_46 : f32 to vector<16x1xf32>
    %46 = arith.divf %44, %45 : vector<16x1xf32>
    %cst_47 = arith.constant 9.99999974E-6 : f32
    %47 = vector.broadcast %cst_47 : f32 to vector<16x1xf32>
    %48 = arith.addf %46, %47 : vector<16x1xf32>
    %49 = math.rsqrt %48 : vector<16x1xf32>
    %50 = vector.broadcast %49 : vector<16x1xf32> to vector<16x32xf32>
    %51 = arith.mulf %41, %50 : vector<16x32xf32>
    %52 = vector.broadcast %13 : vector<1x32xf32> to vector<16x32xf32>
    %53 = arith.mulf %51, %52 : vector<16x32xf32>
    %54 = vector.broadcast %15 : vector<1x32xf32> to vector<16x32xf32>
    %55 = arith.addf %53, %54 : vector<16x32xf32>
    %56 = arith.truncf %55 : vector<16x32xf32> to vector<16x32xbf16>
    %cst_48 = arith.constant dense<0.000000e+00> : vector<16x96xf32>
    %57 = tpu.matmul %56, %17, %cst_48 {dimension_numbers = #tpu.dot_dimension_numbers<[1], [0], [0], [1], [0, 0, 1, 1], [], []>} : vector<16x32xbf16>, vector<32x96xbf16>, vector<16x96xf32> -> vector<16x96xf32>
    %58 = vector.broadcast %19 : vector<1x96xf32> to vector<16x96xf32>
    %59 = arith.addf %57, %58 : vector<16x96xf32>
    %60 = vector.shape_cast %59 : vector<16x96xf32> to vector<2x8x96xf32>
    %61 = vector.extract_strided_slice %60 {offsets = [0, 0, 0], sizes = [2, 8, 32], strides = [1, 1, 1]} : vector<2x8x96xf32> to vector<2x8x32xf32>
    %cst_49 = arith.constant 2.500000e-01 : f32
    %62 = vector.broadcast %cst_49 : f32 to vector<2x8x32xf32>
    %63 = arith.mulf %61, %62 : vector<2x8x32xf32>
    %64 = vector.extract_strided_slice %60 {offsets = [0, 0, 32], sizes = [2, 8, 32], strides = [1, 1, 1]} : vector<2x8x96xf32> to vector<2x8x32xf32>
    %65 = vector.extract_strided_slice %60 {offsets = [0, 0, 64], sizes = [2, 8, 32], strides = [1, 1, 1]} : vector<2x8x96xf32> to vector<2x8x32xf32>
    %66 = vector.extract_strided_slice %63 {offsets = [0, 0, 0], sizes = [2, 8, 16], strides = [1, 1, 1]} : vector<2x8x32xf32> to vector<2x8x16xf32>
    %67 = arith.truncf %66 : vector<2x8x16xf32> to vector<2x8x16xbf16>
    %68 = vector.extract_strided_slice %64 {offsets = [0, 0, 0], sizes = [2, 8, 16], strides = [1, 1, 1]} : vector<2x8x32xf32> to vector<2x8x16xf32>
    %69 = arith.truncf %68 : vector<2x8x16xf32> to vector<2x8x16xbf16>
    "tpu.trace_start"() <{level = 10 : i32, message = "bqd,bkd->bqk"}> : () -> ()
    %cst_50 = arith.constant dense<0.000000e+00> : vector<2x8x8xf32>
    %70 = tpu.matmul %67, %69, %cst_50 {dimension_numbers = #tpu.dot_dimension_numbers<[2], [2], [1], [1], [0, 0, 0, 1, 1, 1], [0], [0]>} : vector<2x8x16xbf16>, vector<2x8x16xbf16>, vector<2x8x8xf32> -> vector<2x8x8xf32>
    "tpu.trace_stop"() : () -> ()
    %71 = vector.shape_cast %11 : vector<8x8xf32> to vector<1x8x8xf32>
    %72 = vector.broadcast %71 : vector<1x8x8xf32> to vector<2x8x8xf32>
    %73 = arith.addf %70, %72 : vector<2x8x8xf32>
    %cst_51 = arith.constant dense<0xFF800000> : vector<2x8xf32>
    %74 = vector.multi_reduction <maximumf>, %73, %cst_51 [2] : vector<2x8x8xf32> to vector<2x8xf32>
    %75 = vector.shape_cast %74 : vector<2x8xf32> to vector<2x8x1xf32>
    %76 = vector.broadcast %75 : vector<2x8x1xf32> to vector<2x8x8xf32>
    %77 = arith.subf %73, %76 : vector<2x8x8xf32>
    %78 = math.exp %77 : vector<2x8x8xf32>
    %cst_52 = arith.constant dense<0.000000e+00> : vector<2x8xf32>
    %79 = vector.multi_reduction <add>, %78, %cst_52 [2] : vector<2x8x8xf32> to vector<2x8xf32>
    %80 = vector.shape_cast %79 : vector<2x8xf32> to vector<2x8x1xf32>
    %81 = vector.broadcast %80 : vector<2x8x1xf32> to vector<2x8x8xf32>
    %82 = arith.divf %78, %81 : vector<2x8x8xf32>
    %83 = arith.truncf %82 : vector<2x8x8xf32> to vector<2x8x8xbf16>
    %84 = vector.extract_strided_slice %65 {offsets = [0, 0, 0], sizes = [2, 8, 16], strides = [1, 1, 1]} : vector<2x8x32xf32> to vector<2x8x16xf32>
    %85 = arith.truncf %84 : vector<2x8x16xf32> to vector<2x8x16xbf16>
    "tpu.trace_start"() <{level = 10 : i32, message = "bqk,bkd->bqd"}> : () -> ()
    %cst_53 = arith.constant dense<0.000000e+00> : vector<2x8x16xf32>
    %86 = tpu.matmul %83, %85, %cst_53 {dimension_numbers = #tpu.dot_dimension_numbers<[2], [1], [1], [2], [0, 0, 0, 1, 1, 2], [0], [0]>} : vector<2x8x8xbf16>, vector<2x8x16xbf16>, vector<2x8x16xf32> -> vector<2x8x16xf32>
    "tpu.trace_stop"() : () -> ()
    %87 = vector.shape_cast %86 : vector<2x8x16xf32> to vector<16x16xf32>
    %88 = arith.truncf %87 : vector<16x16xf32> to vector<16x16xbf16>
    %89 = vector.extract_strided_slice %21 {offsets = [0, 0], sizes = [16, 32], strides = [1, 1]} : vector<32x32xbf16> to vector<16x32xbf16>
    %cst_54 = arith.constant dense<0.000000e+00> : vector<16x32xf32>
    %90 = tpu.matmul %88, %89, %cst_54 {dimension_numbers = #tpu.dot_dimension_numbers<[1], [0], [0], [1], [0, 0, 1, 1], [], []>} : vector<16x16xbf16>, vector<16x32xbf16>, vector<16x32xf32> -> vector<16x32xf32>
    %91 = vector.extract_strided_slice %63 {offsets = [0, 0, 16], sizes = [2, 8, 16], strides = [1, 1, 1]} : vector<2x8x32xf32> to vector<2x8x16xf32>
    %92 = arith.truncf %91 : vector<2x8x16xf32> to vector<2x8x16xbf16>
    %93 = vector.extract_strided_slice %64 {offsets = [0, 0, 16], sizes = [2, 8, 16], strides = [1, 1, 1]} : vector<2x8x32xf32> to vector<2x8x16xf32>
    %94 = arith.truncf %93 : vector<2x8x16xf32> to vector<2x8x16xbf16>
    "tpu.trace_start"() <{level = 10 : i32, message = "bqd,bkd->bqk"}> : () -> ()
    %cst_55 = arith.constant dense<0.000000e+00> : vector<2x8x8xf32>
    %95 = tpu.matmul %92, %94, %cst_55 {dimension_numbers = #tpu.dot_dimension_numbers<[2], [2], [1], [1], [0, 0, 0, 1, 1, 1], [0], [0]>} : vector<2x8x16xbf16>, vector<2x8x16xbf16>, vector<2x8x8xf32> -> vector<2x8x8xf32>
    "tpu.trace_stop"() : () -> ()
    %96 = vector.shape_cast %11 : vector<8x8xf32> to vector<1x8x8xf32>
    %97 = vector.broadcast %96 : vector<1x8x8xf32> to vector<2x8x8xf32>
    %98 = arith.addf %95, %97 : vector<2x8x8xf32>
    %cst_56 = arith.constant dense<0xFF800000> : vector<2x8xf32>
    %99 = vector.multi_reduction <maximumf>, %98, %cst_56 [2] : vector<2x8x8xf32> to vector<2x8xf32>
    %100 = vector.shape_cast %99 : vector<2x8xf32> to vector<2x8x1xf32>
    %101 = vector.broadcast %100 : vector<2x8x1xf32> to vector<2x8x8xf32>
    %102 = arith.subf %98, %101 : vector<2x8x8xf32>
    %103 = math.exp %102 : vector<2x8x8xf32>
    %cst_57 = arith.constant dense<0.000000e+00> : vector<2x8xf32>
    %104 = vector.multi_reduction <add>, %103, %cst_57 [2] : vector<2x8x8xf32> to vector<2x8xf32>
    %105 = vector.shape_cast %104 : vector<2x8xf32> to vector<2x8x1xf32>
    %106 = vector.broadcast %105 : vector<2x8x1xf32> to vector<2x8x8xf32>
    %107 = arith.divf %103, %106 : vector<2x8x8xf32>
    %108 = arith.truncf %107 : vector<2x8x8xf32> to vector<2x8x8xbf16>
    %109 = vector.extract_strided_slice %65 {offsets = [0, 0, 16], sizes = [2, 8, 16], strides = [1, 1, 1]} : vector<2x8x32xf32> to vector<2x8x16xf32>
    %110 = arith.truncf %109 : vector<2x8x16xf32> to vector<2x8x16xbf16>
    "tpu.trace_start"() <{level = 10 : i32, message = "bqk,bkd->bqd"}> : () -> ()
    %cst_58 = arith.constant dense<0.000000e+00> : vector<2x8x16xf32>
    %111 = tpu.matmul %108, %110, %cst_58 {dimension_numbers = #tpu.dot_dimension_numbers<[2], [1], [1], [2], [0, 0, 0, 1, 1, 2], [0], [0]>} : vector<2x8x8xbf16>, vector<2x8x16xbf16>, vector<2x8x16xf32> -> vector<2x8x16xf32>
    "tpu.trace_stop"() : () -> ()
    %112 = vector.shape_cast %111 : vector<2x8x16xf32> to vector<16x16xf32>
    %113 = arith.truncf %112 : vector<16x16xf32> to vector<16x16xbf16>
    %114 = vector.extract_strided_slice %21 {offsets = [16, 0], sizes = [16, 32], strides = [1, 1]} : vector<32x32xbf16> to vector<16x32xbf16>
    %cst_59 = arith.constant dense<0.000000e+00> : vector<16x32xf32>
    %115 = tpu.matmul %113, %114, %cst_59 {dimension_numbers = #tpu.dot_dimension_numbers<[1], [0], [0], [1], [0, 0, 1, 1], [], []>} : vector<16x16xbf16>, vector<16x32xbf16>, vector<16x32xf32> -> vector<16x32xf32>
    %116 = arith.addf %90, %115 : vector<16x32xf32>
    %117 = vector.broadcast %23 : vector<1x32xf32> to vector<16x32xf32>
    %118 = arith.addf %116, %117 : vector<16x32xf32>
    %119 = arith.addf %5, %118 : vector<16x32xf32>
    %cst_60 = arith.constant dense<0.000000e+00> : vector<16xf32>
    %120 = vector.multi_reduction <add>, %119, %cst_60 [1] : vector<16x32xf32> to vector<16xf32>
    %121 = vector.shape_cast %120 : vector<16xf32> to vector<16x1xf32>
    %cst_61 = arith.constant 3.200000e+01 : f32
    %122 = vector.broadcast %cst_61 : f32 to vector<16x1xf32>
    %123 = arith.divf %121, %122 : vector<16x1xf32>
    %124 = vector.broadcast %123 : vector<16x1xf32> to vector<16x32xf32>
    %125 = arith.subf %119, %124 : vector<16x32xf32>
    %126 = arith.mulf %125, %125 : vector<16x32xf32>
    %cst_62 = arith.constant dense<0.000000e+00> : vector<16xf32>
    %127 = vector.multi_reduction <add>, %126, %cst_62 [1] : vector<16x32xf32> to vector<16xf32>
    %128 = vector.shape_cast %127 : vector<16xf32> to vector<16x1xf32>
    %cst_63 = arith.constant 3.200000e+01 : f32
    %129 = vector.broadcast %cst_63 : f32 to vector<16x1xf32>
    %130 = arith.divf %128, %129 : vector<16x1xf32>
    %cst_64 = arith.constant 9.99999974E-6 : f32
    %131 = vector.broadcast %cst_64 : f32 to vector<16x1xf32>
    %132 = arith.addf %130, %131 : vector<16x1xf32>
    %133 = math.rsqrt %132 : vector<16x1xf32>
    %134 = vector.broadcast %133 : vector<16x1xf32> to vector<16x32xf32>
    %135 = arith.mulf %125, %134 : vector<16x32xf32>
    %136 = vector.broadcast %25 : vector<1x32xf32> to vector<16x32xf32>
    %137 = arith.mulf %135, %136 : vector<16x32xf32>
    %138 = vector.broadcast %27 : vector<1x32xf32> to vector<16x32xf32>
    %139 = arith.addf %137, %138 : vector<16x32xf32>
    %140 = arith.truncf %139 : vector<16x32xf32> to vector<16x32xbf16>
    %cst_65 = arith.constant dense<0.000000e+00> : vector<16x128xf32>
    %141 = tpu.matmul %140, %29, %cst_65 {dimension_numbers = #tpu.dot_dimension_numbers<[1], [0], [0], [1], [0, 0, 1, 1], [], []>} : vector<16x32xbf16>, vector<32x128xbf16>, vector<16x128xf32> -> vector<16x128xf32>
    %142 = vector.broadcast %31 : vector<1x128xf32> to vector<16x128xf32>
    %143 = arith.addf %141, %142 : vector<16x128xf32>
    %cst_66 = arith.constant 5.000000e-01 : f32
    %144 = vector.broadcast %cst_66 : f32 to vector<16x128xf32>
    %145 = arith.mulf %144, %143 : vector<16x128xf32>
    %cst_67 = arith.constant 4.471500e-02 : f32
    %146 = vector.broadcast %cst_67 : f32 to vector<16x128xf32>
    %147 = arith.mulf %146, %143 : vector<16x128xf32>
    %148 = arith.mulf %147, %143 : vector<16x128xf32>
    %149 = arith.mulf %148, %143 : vector<16x128xf32>
    %150 = arith.addf %143, %149 : vector<16x128xf32>
    %cst_68 = arith.constant 0.797884583 : f32
    %151 = vector.broadcast %cst_68 : f32 to vector<16x128xf32>
    %152 = arith.mulf %151, %150 : vector<16x128xf32>
    %153 = math.tanh %152 : vector<16x128xf32>
    %cst_69 = arith.constant 1.000000e+00 : f32
    %154 = vector.broadcast %cst_69 : f32 to vector<16x128xf32>
    %155 = arith.addf %154, %153 : vector<16x128xf32>
    %156 = arith.mulf %145, %155 : vector<16x128xf32>
    %157 = arith.truncf %156 : vector<16x128xf32> to vector<16x128xbf16>
    %cst_70 = arith.constant dense<0.000000e+00> : vector<16x32xf32>
    %158 = tpu.matmul %157, %33, %cst_70 {dimension_numbers = #tpu.dot_dimension_numbers<[1], [0], [0], [1], [0, 0, 1, 1], [], []>} : vector<16x128xbf16>, vector<128x32xbf16>, vector<16x32xf32> -> vector<16x32xf32>
    %159 = arith.addf %119, %158 : vector<16x32xf32>
    %160 = vector.broadcast %35 : vector<1x32xf32> to vector<16x32xf32>
    %161 = arith.addf %159, %160 : vector<16x32xf32>
    %c1 = arith.constant 1 : index
    %c0_71 = arith.constant 0 : index
    %c0_72 = arith.constant 0 : index
    %162 = vector.load %arg4[%c1, %c0_71, %c0_72] : memref<2x1x32xf32, #tpu.memory_space<vmem>>, vector<1x1x32xf32>
    %163 = vector.shape_cast %162 : vector<1x1x32xf32> to vector<1x32xf32>
    %c1_73 = arith.constant 1 : index
    %c0_74 = arith.constant 0 : index
    %c0_75 = arith.constant 0 : index
    %164 = vector.load %arg5[%c1_73, %c0_74, %c0_75] : memref<2x1x32xf32, #tpu.memory_space<vmem>>, vector<1x1x32xf32>
    %165 = vector.shape_cast %164 : vector<1x1x32xf32> to vector<1x32xf32>
    %c1_76 = arith.constant 1 : index
    %c0_77 = arith.constant 0 : index
    %c0_78 = arith.constant 0 : index
    %166 = vector.load %arg6[%c1_76, %c0_77, %c0_78] : memref<2x32x96xbf16, #tpu.memory_space<vmem>>, vector<1x32x96xbf16>
    %167 = vector.shape_cast %166 : vector<1x32x96xbf16> to vector<32x96xbf16>
    %c1_79 = arith.constant 1 : index
    %c0_80 = arith.constant 0 : index
    %c0_81 = arith.constant 0 : index
    %168 = vector.load %arg7[%c1_79, %c0_80, %c0_81] : memref<2x1x96xf32, #tpu.memory_space<vmem>>, vector<1x1x96xf32>
    %169 = vector.shape_cast %168 : vector<1x1x96xf32> to vector<1x96xf32>
    %c1_82 = arith.constant 1 : index
    %c0_83 = arith.constant 0 : index
    %c0_84 = arith.constant 0 : index
    %170 = vector.load %arg8[%c1_82, %c0_83, %c0_84] : memref<2x32x32xbf16, #tpu.memory_space<vmem>>, vector<1x32x32xbf16>
    %171 = vector.shape_cast %170 : vector<1x32x32xbf16> to vector<32x32xbf16>
    %c1_85 = arith.constant 1 : index
    %c0_86 = arith.constant 0 : index
    %c0_87 = arith.constant 0 : index
    %172 = vector.load %arg9[%c1_85, %c0_86, %c0_87] : memref<2x1x32xf32, #tpu.memory_space<vmem>>, vector<1x1x32xf32>
    %173 = vector.shape_cast %172 : vector<1x1x32xf32> to vector<1x32xf32>
    %c1_88 = arith.constant 1 : index
    %c0_89 = arith.constant 0 : index
    %c0_90 = arith.constant 0 : index
    %174 = vector.load %arg10[%c1_88, %c0_89, %c0_90] : memref<2x1x32xf32, #tpu.memory_space<vmem>>, vector<1x1x32xf32>
    %175 = vector.shape_cast %174 : vector<1x1x32xf32> to vector<1x32xf32>
    %c1_91 = arith.constant 1 : index
    %c0_92 = arith.constant 0 : index
    %c0_93 = arith.constant 0 : index
    %176 = vector.load %arg11[%c1_91, %c0_92, %c0_93] : memref<2x1x32xf32, #tpu.memory_space<vmem>>, vector<1x1x32xf32>
    %177 = vector.shape_cast %176 : vector<1x1x32xf32> to vector<1x32xf32>
    %c1_94 = arith.constant 1 : index
    %c0_95 = arith.constant 0 : index
    %c0_96 = arith.constant 0 : index
    %178 = vector.load %arg12[%c1_94, %c0_95, %c0_96] : memref<2x32x128xbf16, #tpu.memory_space<vmem>>, vector<1x32x128xbf16>
    %179 = vector.shape_cast %178 : vector<1x32x128xbf16> to vector<32x128xbf16>
    %c1_97 = arith.constant 1 : index
    %c0_98 = arith.constant 0 : index
    %c0_99 = arith.constant 0 : index
    %180 = vector.load %arg13[%c1_97, %c0_98, %c0_99] : memref<2x1x128xf32, #tpu.memory_space<vmem>>, vector<1x1x128xf32>
    %181 = vector.shape_cast %180 : vector<1x1x128xf32> to vector<1x128xf32>
    %c1_100 = arith.constant 1 : index
    %c0_101 = arith.constant 0 : index
    %c0_102 = arith.constant 0 : index
    %182 = vector.load %arg14[%c1_100, %c0_101, %c0_102] : memref<2x128x32xbf16, #tpu.memory_space<vmem>>, vector<1x128x32xbf16>
    %183 = vector.shape_cast %182 : vector<1x128x32xbf16> to vector<128x32xbf16>
    %c1_103 = arith.constant 1 : index
    %c0_104 = arith.constant 0 : index
    %c0_105 = arith.constant 0 : index
    %184 = vector.load %arg15[%c1_103, %c0_104, %c0_105] : memref<2x1x32xf32, #tpu.memory_space<vmem>>, vector<1x1x32xf32>
    %185 = vector.shape_cast %184 : vector<1x1x32xf32> to vector<1x32xf32>
    %cst_106 = arith.constant dense<0.000000e+00> : vector<16xf32>
    %186 = vector.multi_reduction <add>, %161, %cst_106 [1] : vector<16x32xf32> to vector<16xf32>
    %187 = vector.shape_cast %186 : vector<16xf32> to vector<16x1xf32>
    %cst_107 = arith.constant 3.200000e+01 : f32
    %188 = vector.broadcast %cst_107 : f32 to vector<16x1xf32>
    %189 = arith.divf %187, %188 : vector<16x1xf32>
    %190 = vector.broadcast %189 : vector<16x1xf32> to vector<16x32xf32>
    %191 = arith.subf %161, %190 : vector<16x32xf32>
    %192 = arith.mulf %191, %191 : vector<16x32xf32>
    %cst_108 = arith.constant dense<0.000000e+00> : vector<16xf32>
    %193 = vector.multi_reduction <add>, %192, %cst_108 [1] : vector<16x32xf32> to vector<16xf32>
    %194 = vector.shape_cast %193 : vector<16xf32> to vector<16x1xf32>
    %cst_109 = arith.constant 3.200000e+01 : f32
    %195 = vector.broadcast %cst_109 : f32 to vector<16x1xf32>
    %196 = arith.divf %194, %195 : vector<16x1xf32>
    %cst_110 = arith.constant 9.99999974E-6 : f32
    %197 = vector.broadcast %cst_110 : f32 to vector<16x1xf32>
    %198 = arith.addf %196, %197 : vector<16x1xf32>
    %199 = math.rsqrt %198 : vector<16x1xf32>
    %200 = vector.broadcast %199 : vector<16x1xf32> to vector<16x32xf32>
    %201 = arith.mulf %191, %200 : vector<16x32xf32>
    %202 = vector.broadcast %163 : vector<1x32xf32> to vector<16x32xf32>
    %203 = arith.mulf %201, %202 : vector<16x32xf32>
    %204 = vector.broadcast %165 : vector<1x32xf32> to vector<16x32xf32>
    %205 = arith.addf %203, %204 : vector<16x32xf32>
    %206 = arith.truncf %205 : vector<16x32xf32> to vector<16x32xbf16>
    %cst_111 = arith.constant dense<0.000000e+00> : vector<16x96xf32>
    %207 = tpu.matmul %206, %167, %cst_111 {dimension_numbers = #tpu.dot_dimension_numbers<[1], [0], [0], [1], [0, 0, 1, 1], [], []>} : vector<16x32xbf16>, vector<32x96xbf16>, vector<16x96xf32> -> vector<16x96xf32>
    %208 = vector.broadcast %169 : vector<1x96xf32> to vector<16x96xf32>
    %209 = arith.addf %207, %208 : vector<16x96xf32>
    %210 = vector.shape_cast %209 : vector<16x96xf32> to vector<2x8x96xf32>
    %211 = vector.extract_strided_slice %210 {offsets = [0, 0, 0], sizes = [2, 8, 32], strides = [1, 1, 1]} : vector<2x8x96xf32> to vector<2x8x32xf32>
    %cst_112 = arith.constant 2.500000e-01 : f32
    %212 = vector.broadcast %cst_112 : f32 to vector<2x8x32xf32>
    %213 = arith.mulf %211, %212 : vector<2x8x32xf32>
    %214 = vector.extract_strided_slice %210 {offsets = [0, 0, 32], sizes = [2, 8, 32], strides = [1, 1, 1]} : vector<2x8x96xf32> to vector<2x8x32xf32>
    %215 = vector.extract_strided_slice %210 {offsets = [0, 0, 64], sizes = [2, 8, 32], strides = [1, 1, 1]} : vector<2x8x96xf32> to vector<2x8x32xf32>
    %216 = vector.extract_strided_slice %213 {offsets = [0, 0, 0], sizes = [2, 8, 16], strides = [1, 1, 1]} : vector<2x8x32xf32> to vector<2x8x16xf32>
    %217 = arith.truncf %216 : vector<2x8x16xf32> to vector<2x8x16xbf16>
    %218 = vector.extract_strided_slice %214 {offsets = [0, 0, 0], sizes = [2, 8, 16], strides = [1, 1, 1]} : vector<2x8x32xf32> to vector<2x8x16xf32>
    %219 = arith.truncf %218 : vector<2x8x16xf32> to vector<2x8x16xbf16>
    "tpu.trace_start"() <{level = 10 : i32, message = "bqd,bkd->bqk"}> : () -> ()
    %cst_113 = arith.constant dense<0.000000e+00> : vector<2x8x8xf32>
    %220 = tpu.matmul %217, %219, %cst_113 {dimension_numbers = #tpu.dot_dimension_numbers<[2], [2], [1], [1], [0, 0, 0, 1, 1, 1], [0], [0]>} : vector<2x8x16xbf16>, vector<2x8x16xbf16>, vector<2x8x8xf32> -> vector<2x8x8xf32>
    "tpu.trace_stop"() : () -> ()
    %221 = vector.shape_cast %11 : vector<8x8xf32> to vector<1x8x8xf32>
    %222 = vector.broadcast %221 : vector<1x8x8xf32> to vector<2x8x8xf32>
    %223 = arith.addf %220, %222 : vector<2x8x8xf32>
    %cst_114 = arith.constant dense<0xFF800000> : vector<2x8xf32>
    %224 = vector.multi_reduction <maximumf>, %223, %cst_114 [2] : vector<2x8x8xf32> to vector<2x8xf32>
    %225 = vector.shape_cast %224 : vector<2x8xf32> to vector<2x8x1xf32>
    %226 = vector.broadcast %225 : vector<2x8x1xf32> to vector<2x8x8xf32>
    %227 = arith.subf %223, %226 : vector<2x8x8xf32>
    %228 = math.exp %227 : vector<2x8x8xf32>
    %cst_115 = arith.constant dense<0.000000e+00> : vector<2x8xf32>
    %229 = vector.multi_reduction <add>, %228, %cst_115 [2] : vector<2x8x8xf32> to vector<2x8xf32>
    %230 = vector.shape_cast %229 : vector<2x8xf32> to vector<2x8x1xf32>
    %231 = vector.broadcast %230 : vector<2x8x1xf32> to vector<2x8x8xf32>
    %232 = arith.divf %228, %231 : vector<2x8x8xf32>
    %233 = arith.truncf %232 : vector<2x8x8xf32> to vector<2x8x8xbf16>
    %234 = vector.extract_strided_slice %215 {offsets = [0, 0, 0], sizes = [2, 8, 16], strides = [1, 1, 1]} : vector<2x8x32xf32> to vector<2x8x16xf32>
    %235 = arith.truncf %234 : vector<2x8x16xf32> to vector<2x8x16xbf16>
    "tpu.trace_start"() <{level = 10 : i32, message = "bqk,bkd->bqd"}> : () -> ()
    %cst_116 = arith.constant dense<0.000000e+00> : vector<2x8x16xf32>
    %236 = tpu.matmul %233, %235, %cst_116 {dimension_numbers = #tpu.dot_dimension_numbers<[2], [1], [1], [2], [0, 0, 0, 1, 1, 2], [0], [0]>} : vector<2x8x8xbf16>, vector<2x8x16xbf16>, vector<2x8x16xf32> -> vector<2x8x16xf32>
    "tpu.trace_stop"() : () -> ()
    %237 = vector.shape_cast %236 : vector<2x8x16xf32> to vector<16x16xf32>
    %238 = arith.truncf %237 : vector<16x16xf32> to vector<16x16xbf16>
    %239 = vector.extract_strided_slice %171 {offsets = [0, 0], sizes = [16, 32], strides = [1, 1]} : vector<32x32xbf16> to vector<16x32xbf16>
    %cst_117 = arith.constant dense<0.000000e+00> : vector<16x32xf32>
    %240 = tpu.matmul %238, %239, %cst_117 {dimension_numbers = #tpu.dot_dimension_numbers<[1], [0], [0], [1], [0, 0, 1, 1], [], []>} : vector<16x16xbf16>, vector<16x32xbf16>, vector<16x32xf32> -> vector<16x32xf32>
    %241 = vector.extract_strided_slice %213 {offsets = [0, 0, 16], sizes = [2, 8, 16], strides = [1, 1, 1]} : vector<2x8x32xf32> to vector<2x8x16xf32>
    %242 = arith.truncf %241 : vector<2x8x16xf32> to vector<2x8x16xbf16>
    %243 = vector.extract_strided_slice %214 {offsets = [0, 0, 16], sizes = [2, 8, 16], strides = [1, 1, 1]} : vector<2x8x32xf32> to vector<2x8x16xf32>
    %244 = arith.truncf %243 : vector<2x8x16xf32> to vector<2x8x16xbf16>
    "tpu.trace_start"() <{level = 10 : i32, message = "bqd,bkd->bqk"}> : () -> ()
    %cst_118 = arith.constant dense<0.000000e+00> : vector<2x8x8xf32>
    %245 = tpu.matmul %242, %244, %cst_118 {dimension_numbers = #tpu.dot_dimension_numbers<[2], [2], [1], [1], [0, 0, 0, 1, 1, 1], [0], [0]>} : vector<2x8x16xbf16>, vector<2x8x16xbf16>, vector<2x8x8xf32> -> vector<2x8x8xf32>
    "tpu.trace_stop"() : () -> ()
    %246 = vector.shape_cast %11 : vector<8x8xf32> to vector<1x8x8xf32>
    %247 = vector.broadcast %246 : vector<1x8x8xf32> to vector<2x8x8xf32>
    %248 = arith.addf %245, %247 : vector<2x8x8xf32>
    %cst_119 = arith.constant dense<0xFF800000> : vector<2x8xf32>
    %249 = vector.multi_reduction <maximumf>, %248, %cst_119 [2] : vector<2x8x8xf32> to vector<2x8xf32>
    %250 = vector.shape_cast %249 : vector<2x8xf32> to vector<2x8x1xf32>
    %251 = vector.broadcast %250 : vector<2x8x1xf32> to vector<2x8x8xf32>
    %252 = arith.subf %248, %251 : vector<2x8x8xf32>
    %253 = math.exp %252 : vector<2x8x8xf32>
    %cst_120 = arith.constant dense<0.000000e+00> : vector<2x8xf32>
    %254 = vector.multi_reduction <add>, %253, %cst_120 [2] : vector<2x8x8xf32> to vector<2x8xf32>
    %255 = vector.shape_cast %254 : vector<2x8xf32> to vector<2x8x1xf32>
    %256 = vector.broadcast %255 : vector<2x8x1xf32> to vector<2x8x8xf32>
    %257 = arith.divf %253, %256 : vector<2x8x8xf32>
    %258 = arith.truncf %257 : vector<2x8x8xf32> to vector<2x8x8xbf16>
    %259 = vector.extract_strided_slice %215 {offsets = [0, 0, 16], sizes = [2, 8, 16], strides = [1, 1, 1]} : vector<2x8x32xf32> to vector<2x8x16xf32>
    %260 = arith.truncf %259 : vector<2x8x16xf32> to vector<2x8x16xbf16>
    "tpu.trace_start"() <{level = 10 : i32, message = "bqk,bkd->bqd"}> : () -> ()
    %cst_121 = arith.constant dense<0.000000e+00> : vector<2x8x16xf32>
    %261 = tpu.matmul %258, %260, %cst_121 {dimension_numbers = #tpu.dot_dimension_numbers<[2], [1], [1], [2], [0, 0, 0, 1, 1, 2], [0], [0]>} : vector<2x8x8xbf16>, vector<2x8x16xbf16>, vector<2x8x16xf32> -> vector<2x8x16xf32>
    "tpu.trace_stop"() : () -> ()
    %262 = vector.shape_cast %261 : vector<2x8x16xf32> to vector<16x16xf32>
    %263 = arith.truncf %262 : vector<16x16xf32> to vector<16x16xbf16>
    %264 = vector.extract_strided_slice %171 {offsets = [16, 0], sizes = [16, 32], strides = [1, 1]} : vector<32x32xbf16> to vector<16x32xbf16>
    %cst_122 = arith.constant dense<0.000000e+00> : vector<16x32xf32>
    %265 = tpu.matmul %263, %264, %cst_122 {dimension_numbers = #tpu.dot_dimension_numbers<[1], [0], [0], [1], [0, 0, 1, 1], [], []>} : vector<16x16xbf16>, vector<16x32xbf16>, vector<16x32xf32> -> vector<16x32xf32>
    %266 = arith.addf %240, %265 : vector<16x32xf32>
    %267 = vector.broadcast %173 : vector<1x32xf32> to vector<16x32xf32>
    %268 = arith.addf %266, %267 : vector<16x32xf32>
    %269 = arith.addf %161, %268 : vector<16x32xf32>
    %cst_123 = arith.constant dense<0.000000e+00> : vector<16xf32>
    %270 = vector.multi_reduction <add>, %269, %cst_123 [1] : vector<16x32xf32> to vector<16xf32>
    %271 = vector.shape_cast %270 : vector<16xf32> to vector<16x1xf32>
    %cst_124 = arith.constant 3.200000e+01 : f32
    %272 = vector.broadcast %cst_124 : f32 to vector<16x1xf32>
    %273 = arith.divf %271, %272 : vector<16x1xf32>
    %274 = vector.broadcast %273 : vector<16x1xf32> to vector<16x32xf32>
    %275 = arith.subf %269, %274 : vector<16x32xf32>
    %276 = arith.mulf %275, %275 : vector<16x32xf32>
    %cst_125 = arith.constant dense<0.000000e+00> : vector<16xf32>
    %277 = vector.multi_reduction <add>, %276, %cst_125 [1] : vector<16x32xf32> to vector<16xf32>
    %278 = vector.shape_cast %277 : vector<16xf32> to vector<16x1xf32>
    %cst_126 = arith.constant 3.200000e+01 : f32
    %279 = vector.broadcast %cst_126 : f32 to vector<16x1xf32>
    %280 = arith.divf %278, %279 : vector<16x1xf32>
    %cst_127 = arith.constant 9.99999974E-6 : f32
    %281 = vector.broadcast %cst_127 : f32 to vector<16x1xf32>
    %282 = arith.addf %280, %281 : vector<16x1xf32>
    %283 = math.rsqrt %282 : vector<16x1xf32>
    %284 = vector.broadcast %283 : vector<16x1xf32> to vector<16x32xf32>
    %285 = arith.mulf %275, %284 : vector<16x32xf32>
    %286 = vector.broadcast %175 : vector<1x32xf32> to vector<16x32xf32>
    %287 = arith.mulf %285, %286 : vector<16x32xf32>
    %288 = vector.broadcast %177 : vector<1x32xf32> to vector<16x32xf32>
    %289 = arith.addf %287, %288 : vector<16x32xf32>
    %290 = arith.truncf %289 : vector<16x32xf32> to vector<16x32xbf16>
    %cst_128 = arith.constant dense<0.000000e+00> : vector<16x128xf32>
    %291 = tpu.matmul %290, %179, %cst_128 {dimension_numbers = #tpu.dot_dimension_numbers<[1], [0], [0], [1], [0, 0, 1, 1], [], []>} : vector<16x32xbf16>, vector<32x128xbf16>, vector<16x128xf32> -> vector<16x128xf32>
    %292 = vector.broadcast %181 : vector<1x128xf32> to vector<16x128xf32>
    %293 = arith.addf %291, %292 : vector<16x128xf32>
    %cst_129 = arith.constant 5.000000e-01 : f32
    %294 = vector.broadcast %cst_129 : f32 to vector<16x128xf32>
    %295 = arith.mulf %294, %293 : vector<16x128xf32>
    %cst_130 = arith.constant 4.471500e-02 : f32
    %296 = vector.broadcast %cst_130 : f32 to vector<16x128xf32>
    %297 = arith.mulf %296, %293 : vector<16x128xf32>
    %298 = arith.mulf %297, %293 : vector<16x128xf32>
    %299 = arith.mulf %298, %293 : vector<16x128xf32>
    %300 = arith.addf %293, %299 : vector<16x128xf32>
    %cst_131 = arith.constant 0.797884583 : f32
    %301 = vector.broadcast %cst_131 : f32 to vector<16x128xf32>
    %302 = arith.mulf %301, %300 : vector<16x128xf32>
    %303 = math.tanh %302 : vector<16x128xf32>
    %cst_132 = arith.constant 1.000000e+00 : f32
    %304 = vector.broadcast %cst_132 : f32 to vector<16x128xf32>
    %305 = arith.addf %304, %303 : vector<16x128xf32>
    %306 = arith.mulf %295, %305 : vector<16x128xf32>
    %307 = arith.truncf %306 : vector<16x128xf32> to vector<16x128xbf16>
    %cst_133 = arith.constant dense<0.000000e+00> : vector<16x32xf32>
    %308 = tpu.matmul %307, %183, %cst_133 {dimension_numbers = #tpu.dot_dimension_numbers<[1], [0], [0], [1], [0, 0, 1, 1], [], []>} : vector<16x128xbf16>, vector<128x32xbf16>, vector<16x32xf32> -> vector<16x32xf32>
    %309 = arith.addf %269, %308 : vector<16x32xf32>
    %310 = vector.broadcast %185 : vector<1x32xf32> to vector<16x32xf32>
    %311 = arith.addf %309, %310 : vector<16x32xf32>
    %c0_134 = arith.constant 0 : index
    %c0_135 = arith.constant 0 : index
    %312 = vector.load %arg16[%c0_134, %c0_135] : memref<1x32xf32, #tpu.memory_space<vmem>>, vector<1x32xf32>
    %c0_136 = arith.constant 0 : index
    %c0_137 = arith.constant 0 : index
    %313 = vector.load %arg17[%c0_136, %c0_137] : memref<1x32xf32, #tpu.memory_space<vmem>>, vector<1x32xf32>
    %cst_138 = arith.constant dense<0.000000e+00> : vector<16xf32>
    %314 = vector.multi_reduction <add>, %311, %cst_138 [1] : vector<16x32xf32> to vector<16xf32>
    %315 = vector.shape_cast %314 : vector<16xf32> to vector<16x1xf32>
    %cst_139 = arith.constant 3.200000e+01 : f32
    %316 = vector.broadcast %cst_139 : f32 to vector<16x1xf32>
    %317 = arith.divf %315, %316 : vector<16x1xf32>
    %318 = vector.broadcast %317 : vector<16x1xf32> to vector<16x32xf32>
    %319 = arith.subf %311, %318 : vector<16x32xf32>
    %320 = arith.mulf %319, %319 : vector<16x32xf32>
    %cst_140 = arith.constant dense<0.000000e+00> : vector<16xf32>
    %321 = vector.multi_reduction <add>, %320, %cst_140 [1] : vector<16x32xf32> to vector<16xf32>
    %322 = vector.shape_cast %321 : vector<16xf32> to vector<16x1xf32>
    %cst_141 = arith.constant 3.200000e+01 : f32
    %323 = vector.broadcast %cst_141 : f32 to vector<16x1xf32>
    %324 = arith.divf %322, %323 : vector<16x1xf32>
    %cst_142 = arith.constant 9.99999974E-6 : f32
    %325 = vector.broadcast %cst_142 : f32 to vector<16x1xf32>
    %326 = arith.addf %324, %325 : vector<16x1xf32>
    %327 = math.rsqrt %326 : vector<16x1xf32>
    %328 = vector.broadcast %327 : vector<16x1xf32> to vector<16x32xf32>
    %329 = arith.mulf %319, %328 : vector<16x32xf32>
    %330 = vector.broadcast %312 : vector<1x32xf32> to vector<16x32xf32>
    %331 = arith.mulf %329, %330 : vector<16x32xf32>
    %332 = vector.broadcast %313 : vector<1x32xf32> to vector<16x32xf32>
    %333 = arith.addf %331, %332 : vector<16x32xf32>
    %334 = arith.mulf %333, %333 : vector<16x32xf32>
    %cst_143 = arith.constant dense<0.000000e+00> : vector<16xf32>
    %335 = vector.multi_reduction <add>, %334, %cst_143 [1] : vector<16x32xf32> to vector<16xf32>
    %336 = vector.shape_cast %335 : vector<16xf32> to vector<16x1xf32>
    %cst_144 = arith.constant 1.000000e-24 : f32
    %337 = vector.broadcast %cst_144 : f32 to vector<16x1xf32>
    %338 = arith.maximumf %336, %337 : vector<16x1xf32>
    %339 = math.rsqrt %338 : vector<16x1xf32>
    %340 = vector.broadcast %339 : vector<16x1xf32> to vector<16x32xf32>
    %341 = arith.mulf %333, %340 : vector<16x32xf32>
    %342 = vector.shape_cast %341 : vector<16x32xf32> to vector<2x8x32xf32>
    %c0_145 = arith.constant 0 : index
    %c0_146 = arith.constant 0 : index
    %343 = vector.load %arg1[%c0_145, %c0_146] : memref<2x32xf32, #tpu.memory_space<vmem>>, vector<2x32xf32>
    %344 = tpu.iota {dimensions = array<i32: 1>} : vector<1x8xi32>
    %c1_i32 = arith.constant 1 : i32
    %345 = vector.broadcast %c1_i32 : i32 to vector<1x8xi32>
    %346 = arith.cmpi sge, %344, %345 : vector<1x8xi32>
    %c5_i32_147 = arith.constant 5 : i32
    %347 = vector.broadcast %c5_i32_147 : i32 to vector<1x8xi32>
    %348 = arith.cmpi slt, %344, %347 : vector<1x8xi32>
    %349 = arith.andi %346, %348 : vector<1x8xi1>
    %cst_148 = arith.constant 0.000000e+00 : f32
    %cst_149 = arith.constant -1.000000e+30 : f32
    %350 = vector.broadcast %cst_148 : f32 to vector<1x8xf32>
    %351 = vector.broadcast %cst_149 : f32 to vector<1x8xf32>
    %352 = arith.select %349, %350, %351 : vector<1x8xi1>, vector<1x8xf32>
    %353 = vector.shape_cast %343 : vector<2x32xf32> to vector<2x1x32xf32>
    %354 = vector.broadcast %353 : vector<2x1x32xf32> to vector<2x8x32xf32>
    %355 = arith.mulf %354, %342 : vector<2x8x32xf32>
    %cst_150 = arith.constant dense<0.000000e+00> : vector<2x8xf32>
    %356 = vector.multi_reduction <add>, %355, %cst_150 [2] : vector<2x8x32xf32> to vector<2x8xf32>
    %357 = vector.broadcast %352 : vector<1x8xf32> to vector<2x8xf32>
    %358 = arith.addf %356, %357 : vector<2x8xf32>
    %cst_151 = arith.constant dense<0xFF800000> : vector<2xf32>
    %359 = vector.multi_reduction <maximumf>, %358, %cst_151 [1] : vector<2x8xf32> to vector<2xf32>
    %360 = vector.shape_cast %359 : vector<2xf32> to vector<2x1xf32>
    %361 = vector.broadcast %360 : vector<2x1xf32> to vector<2x8xf32>
    %362 = arith.subf %358, %361 : vector<2x8xf32>
    %363 = math.exp %362 : vector<2x8xf32>
    %cst_152 = arith.constant dense<0.000000e+00> : vector<2xf32>
    %364 = vector.multi_reduction <add>, %363, %cst_152 [1] : vector<2x8xf32> to vector<2xf32>
    %365 = vector.shape_cast %364 : vector<2xf32> to vector<2x1xf32>
    %366 = vector.broadcast %365 : vector<2x1xf32> to vector<2x8xf32>
    %367 = arith.divf %363, %366 : vector<2x8xf32>
    %368 = vector.shape_cast %367 : vector<2x8xf32> to vector<2x8x1xf32>
    %369 = vector.broadcast %368 : vector<2x8x1xf32> to vector<2x8x32xf32>
    %370 = arith.mulf %369, %342 : vector<2x8x32xf32>
    %cst_153 = arith.constant dense<0.000000e+00> : vector<2x32xf32>
    %371 = vector.multi_reduction <add>, %370, %cst_153 [1] : vector<2x8x32xf32> to vector<2x32xf32>
    %372 = arith.mulf %371, %371 : vector<2x32xf32>
    %cst_154 = arith.constant dense<0.000000e+00> : vector<2xf32>
    %373 = vector.multi_reduction <add>, %372, %cst_154 [1] : vector<2x32xf32> to vector<2xf32>
    %374 = vector.shape_cast %373 : vector<2xf32> to vector<2x1xf32>
    %cst_155 = arith.constant 1.000000e-24 : f32
    %375 = vector.broadcast %cst_155 : f32 to vector<2x1xf32>
    %376 = arith.maximumf %374, %375 : vector<2x1xf32>
    %377 = math.rsqrt %376 : vector<2x1xf32>
    %378 = vector.broadcast %377 : vector<2x1xf32> to vector<2x32xf32>
    %379 = arith.mulf %371, %378 : vector<2x32xf32>
    %c0_156 = arith.constant 0 : index
    %c0_157 = arith.constant 0 : index
    %380 = vector.load %arg18[%c0_156, %c0_157] : memref<2x32xf32, #tpu.memory_space<vmem>>, vector<2x32xf32>
    tpu.vector_store %arg18[%c0_156, %c0_157], %379 {strides = array<i32>} : memref<2x32xf32, #tpu.memory_space<vmem>>, vector<2x32xf32>,
    return
  }
}

</mosaic_0001>

<llo_original>
// kernel: ours_clip_forward.2
$region0: #{ours_clip_forward.2}
  #allocation0 [shape = 'u32[]', space=smem, size = 0x4, offset = 0x4, fixed_abs, tag = 'smem constant byte address 0x4 - core index']
  #allocation1 [shape = 'u32[72,128]{1,0:T(1,128)}', space=vmem, size = 0x9000, scoped, tag = 'internal scratch']
  %s0 = inlined_call_operand.vmem [shape: f32[16,32], index: 0, kind: input, shape index: {}]
  %s1 = inlined_call_operand.vmem [shape: f32[2,16], index: 1, kind: input, shape index: {}]
  %s2 = inlined_call_operand.vmem [shape: f32[2,1,32], index: 2, kind: input, shape index: {}]
  %s3 = inlined_call_operand.vmem [shape: f32[2,1,32], index: 3, kind: input, shape index: {}]
  %s4 = inlined_call_operand.vmem [shape: bf16[2,32,96], index: 4, kind: input, shape index: {}]
  %s5 = inlined_call_operand.vmem [shape: f32[2,1,96], index: 5, kind: input, shape index: {}]
  %s6 = inlined_call_operand.vmem [shape: bf16[2,32,32], index: 6, kind: input, shape index: {}]
  %s7 = inlined_call_operand.vmem [shape: f32[2,1,32], index: 7, kind: input, shape index: {}]
  %s8 = inlined_call_operand.vmem [shape: f32[2,1,32], index: 8, kind: input, shape index: {}]
  %s9 = inlined_call_operand.vmem [shape: f32[2,1,32], index: 9, kind: input, shape index: {}]
  %s10 = inlined_call_operand.vmem [shape: bf16[2,32,128], index: 10, kind: input, shape index: {}]
  %s11 = inlined_call_operand.vmem [shape: f32[2,1,128], index: 11, kind: input, shape index: {}]
  %s12 = inlined_call_operand.vmem [shape: bf16[2,128,32], index: 12, kind: input, shape index: {}]
  %s13 = inlined_call_operand.vmem [shape: f32[2,1,32], index: 13, kind: input, shape index: {}]
  %s14 = inlined_call_operand.vmem [shape: f32[1,32], index: 14, kind: input, shape index: {}]
  %s15 = inlined_call_operand.vmem [shape: f32[1,32], index: 15, kind: input, shape index: {}]
  %s16 = inlined_call_operand.vmem [shape: bf16[32,32], index: 16, kind: input, shape index: {}]
  %s17 = inlined_call_operand.vmem [shape: f32[2,32], index: 17, kind: output, shape index: {}]
  %s18 = sld [smem:[#allocation0]]
  $region78: #{ours_clip_forward.2} parent=0
    _
  %s20 = ssub.s32 1, %s18
  %s21 = scalar_select 0, %s20, %s18
  // Predicated region
  $region2: #{ours_clip_forward.2} parent=0 // pred_check
    _
  $region3: #{ours_clip_forward.2} parent=0 // pred_check_branch
    %23 = sbr.rel (0) target = $region5
  $region4: #{ours_clip_forward.2} parent=0 // pred_region
    _
  $region5: #{ours_clip_forward.2} parent=0 // pred_fallthru
    _
  // Predicated region
  $region6: #{ours_clip_forward.2} parent=0 // pred_check
    _
  $region7: #{ours_clip_forward.2} parent=0 // pred_check_branch
    %25 = sbr.rel (0) target = $region9
  $region8: #{ours_clip_forward.2} parent=0 // pred_region
    _
  $region9: #{ours_clip_forward.2} parent=0 // pred_fallthru
    _
  // Predicated region
  $region10: #{ours_clip_forward.2} parent=0 // pred_check
    _
  $region11: #{ours_clip_forward.2} parent=0 // pred_check_branch
    %27 = sbr.rel (0) target = $region13
  $region12: #{ours_clip_forward.2} parent=0 // pred_region
    _
  $region13: #{ours_clip_forward.2} parent=0 // pred_fallthru
    _
  // Predicated region
  $region14: #{ours_clip_forward.2} parent=0 // pred_check
    _
  $region15: #{ours_clip_forward.2} parent=0 // pred_check_branch
    %29 = sbr.rel (0) target = $region17
  $region16: #{ours_clip_forward.2} parent=0 // pred_region
    _
  $region17: #{ours_clip_forward.2} parent=0 // pred_fallthru
    _
  // Predicated region
  $region18: #{ours_clip_forward.2} parent=0 // pred_check
    _
  $region19: #{ours_clip_forward.2} parent=0 // pred_check_branch
    %31 = sbr.rel (0) target = $region21
  $region20: #{ours_clip_forward.2} parent=0 // pred_region
    _
  $region21: #{ours_clip_forward.2} parent=0 // pred_fallthru
    _
  // Predicated region
  $region22: #{ours_clip_forward.2} parent=0 // pred_check
    _
  $region23: #{ours_clip_forward.2} parent=0 // pred_check_branch
    %33 = sbr.rel (0) target = $region25
  $region24: #{ours_clip_forward.2} parent=0 // pred_region
    _
  $region25: #{ours_clip_forward.2} parent=0 // pred_fallthru
    _
  // Predicated region
  $region26: #{ours_clip_forward.2} parent=0 // pred_check
    _
  $region27: #{ours_clip_forward.2} parent=0 // pred_check_branch
    %35 = sbr.rel (0) target = $region29
  $region28: #{ours_clip_forward.2} parent=0 // pred_region
    _
  $region29: #{ours_clip_forward.2} parent=0 // pred_fallthru
    _
  // Predicated region
  $region30: #{ours_clip_forward.2} parent=0 // pred_check
    _
  $region31: #{ours_clip_forward.2} parent=0 // pred_check_branch
    %37 = sbr.rel (0) target = $region33
  $region32: #{ours_clip_forward.2} parent=0 // pred_region
    _
  $region33: #{ours_clip_forward.2} parent=0 // pred_fallthru
    _
  // Predicated region
  $region34: #{ours_clip_forward.2} parent=0 // pred_check
    _
  $region35: #{ours_clip_forward.2} parent=0 // pred_check_branch
    %39 = sbr.rel (0) target = $region37
  $region36: #{ours_clip_forward.2} parent=0 // pred_region
    _
  $region37: #{ours_clip_forward.2} parent=0 // pred_fallthru
    _
  // Predicated region
  $region38: #{ours_clip_forward.2} parent=0 // pred_check
    _
  $region39: #{ours_clip_forward.2} parent=0 // pred_check_branch
    %41 = sbr.rel (0) target = $region41
  $region40: #{ours_clip_forward.2} parent=0 // pred_region
    _
  $region41: #{ours_clip_forward.2} parent=0 // pred_fallthru
    _
  // Predicated region
  $region42: #{ours_clip_forward.2} parent=0 // pred_check
    _
  $region43: #{ours_clip_forward.2} parent=0 // pred_check_branch
    %43 = sbr.rel (0) target = $region45
  $region44: #{ours_clip_forward.2} parent=0 // pred_region
    _
  $region45: #{ours_clip_forward.2} parent=0 // pred_fallthru
    _
  // Predicated region
  $region46: #{ours_clip_forward.2} parent=0 // pred_check
    _
  $region47: #{ours_clip_forward.2} parent=0 // pred_check_branch
    %45 = sbr.rel (0) target = $region49
  $region48: #{ours_clip_forward.2} parent=0 // pred_region
    _
  $region49: #{ours_clip_forward.2} parent=0 // pred_fallthru
    _
  // Predicated region
  $region50: #{ours_clip_forward.2} parent=0 // pred_check
    _
  $region51: #{ours_clip_forward.2} parent=0 // pred_check_branch
    %47 = sbr.rel (0) target = $region53
  $region52: #{ours_clip_forward.2} parent=0 // pred_region
    _
  $region53: #{ours_clip_forward.2} parent=0 // pred_fallthru
    _
  // Predicated region
  $region54: #{ours_clip_forward.2} parent=0 // pred_check
    _
  $region55: #{ours_clip_forward.2} parent=0 // pred_check_branch
    %49 = sbr.rel (0) target = $region57
  $region56: #{ours_clip_forward.2} parent=0 // pred_region
    _
  $region57: #{ours_clip_forward.2} parent=0 // pred_fallthru
    _
  // Predicated region
  $region58: #{ours_clip_forward.2} parent=0 // pred_check
    _
  $region59: #{ours_clip_forward.2} parent=0 // pred_check_branch
    %51 = sbr.rel (0) target = $region61
  $region60: #{ours_clip_forward.2} parent=0 // pred_region
    _
  $region61: #{ours_clip_forward.2} parent=0 // pred_fallthru
    _
  // Predicated region
  $region62: #{ours_clip_forward.2} parent=0 // pred_check
    _
  $region63: #{ours_clip_forward.2} parent=0 // pred_check_branch
    %53 = sbr.rel (0) target = $region65
  $region64: #{ours_clip_forward.2} parent=0 // pred_region
    _
  $region65: #{ours_clip_forward.2} parent=0 // pred_fallthru
    _
  // Predicated region
  $region66: #{ours_clip_forward.2} parent=0 // pred_check
    _
  $region67: #{ours_clip_forward.2} parent=0 // pred_check_branch
    %55 = sbr.rel (0) target = $region69
  $region68: #{ours_clip_forward.2} parent=0 // pred_region
    _
  $region69: #{ours_clip_forward.2} parent=0 // pred_fallthru
    _
  %v57 = vld [vmem:[%s0] sm:$0xff]
  %v58 = vld [vmem:[%s0 + $0x8] sm:$0xff]
  %v59 = vlaneseq
  %v60 = vshrl.u32 %v59, 7
  %v61 = vlaneseq
  %v62 = vand.u32 %v61, 127
  %vm63 = vcmp.le.s32.totalorder %v62, %v60
  %v64 = vsel %vm63, 0.0, -1e+30
  %v65 = vld [vmem:[%s2] sm:$0x1]
  %v66 = vld [vmem:[%s3] sm:$0x1]
  %v67 = vld [vmem:[%s4] sm:$0xf]
  %v68 = vld [vmem:[%s4 + $0x4] sm:$0xf]
  %v69 = vld [vmem:[%s4 + $0x8] sm:$0xf]
  %v70 = vld [vmem:[%s4 + $0xc] sm:$0xf]
  %v71 = vld [vmem:[%s5] sm:$0x1]
  %v72 = vld [vmem:[%s6] sm:$0xf]
  %v73 = vld [vmem:[%s6 + $0x4] sm:$0xf]
  %v74 = vld [vmem:[%s6 + $0x8] sm:$0xf]
  %v75 = vld [vmem:[%s6 + $0xc] sm:$0xf]
  %v76 = vld [vmem:[%s7] sm:$0x1]
  %v77 = vld [vmem:[%s8] sm:$0x1]
  %v78 = vld [vmem:[%s9] sm:$0x1]
  %v79 = vld [vmem:[%s10] sm:$0xf]
  %v80 = vld [vmem:[%s10 + $0x4] sm:$0xf]
  %v81 = vld [vmem:[%s10 + $0x8] sm:$0xf]
  %v82 = vld [vmem:[%s10 + $0xc] sm:$0xf]
  %v83 = vld [vmem:[%s11] sm:$0x1]
  %v84 = vld [vmem:[%s12] sm:$0xf]
  %v85 = vld [vmem:[%s12 + $0x4] sm:$0xf]
  %v86 = vld [vmem:[%s12 + $0x8] sm:$0xf]
  %v87 = vld [vmem:[%s12 + $0xc] sm:$0xf]
  %v88 = vld [vmem:[%s12 + $0x10] sm:$0xf]
  %v89 = vld [vmem:[%s12 + $0x14] sm:$0xf]
  %v90 = vld [vmem:[%s12 + $0x18] sm:$0xf]
  %v91 = vld [vmem:[%s12 + $0x1c] sm:$0xf]
  %v92 = vld [vmem:[%s12 + $0x20] sm:$0xf]
  %v93 = vld [vmem:[%s12 + $0x24] sm:$0xf]
  %v94 = vld [vmem:[%s12 + $0x28] sm:$0xf]
  %v95 = vld [vmem:[%s12 + $0x2c] sm:$0xf]
  %v96 = vld [vmem:[%s12 + $0x30] sm:$0xf]
  %v97 = vld [vmem:[%s12 + $0x34] sm:$0xf]
  %v98 = vld [vmem:[%s12 + $0x38] sm:$0xf]
  %v99 = vld [vmem:[%s12 + $0x3c] sm:$0xf]
  %v100 = vld [vmem:[%s13] sm:$0x1]
  %vm101 = vcmask 261120
  %v102 = vsel %vm101, %v57, 0.0
  %103 = vadd.xlane.f32.xlu0 %v102
  %v104 = vpop.xlane.xlu0 %103
  %v105 = vsel %vm101, %v58, 0.0
  %106 = vadd.xlane.f32.xlu0 %v105
  %v107 = vpop.xlane.xlu0 %106
  %v108 = vrcp.pop 32.0
  %v109 = vmul.f32 32.0, %v108
  %v110 = vsub.f32 1.0, %v109
  %v111 = vmul.f32 %v108, %v110
  %v112 = vadd.f32 %v108, %v111
  %vm113 = vweird.f32 %v108
  %v114 = vsel %vm113, %v108, %v112
  %v115 = vmul.f32 %v104, %v114
  %v116 = vmul.f32 %v107, %v114
  %v117 = vsub.f32 %v57, %v115
  %v118 = vsub.f32 %v58, %v116
  %v119 = vmul.f32 %v117, %v117
  %v120 = vmul.f32 %v118, %v118
  %v121 = vsel %vm101, %v119, 0.0
  %122 = vadd.xlane.f32.xlu0 %v121
  %v123 = vpop.xlane.xlu0 %122
  %v124 = vsel %vm101, %v120, 0.0
  %125 = vadd.xlane.f32.xlu0 %v124
  %v126 = vpop.xlane.xlu0 %125
  %v127 = vmul.f32 %v123, %v114
  %v128 = vmul.f32 %v126, %v114
  %v129 = vadd.f32 %v127, 1e-05
  %v130 = vadd.f32 %v128, 1e-05
  %v131 = vrsqrt.pop %v129
  %v132 = vmul.f32 %v131, %v129
  %v133 = vmul.f32 %v132, %v131
  %v134 = vmul.f32 0.5, %v133
  %v135 = vsub.f32 1.5, %v134
  %v136 = vmul.f32 %v131, %v135
  %vm137 = vweird.f32 %v129
  %vm138 = vweird.f32 %v131
  %vm139 = vmor %vm137, %vm138
  %v140 = vsel %vm139, %v131, %v136
  %v141 = vrsqrt.pop %v130
  %v142 = vmul.f32 %v141, %v130
  %v143 = vmul.f32 %v142, %v141
  %v144 = vmul.f32 0.5, %v143
  %v145 = vsub.f32 1.5, %v144
  %v146 = vmul.f32 %v141, %v145
  %vm147 = vweird.f32 %v130
  %vm148 = vweird.f32 %v141
  %vm149 = vmor %vm147, %vm148
  %v150 = vsel %vm149, %v141, %v146
  %v151 = vmul.f32 %v117, %v140
  %v152 = vmul.f32 %v118, %v150
  %v154 = vperm.slane %v65, 0
  %v156 = vmul.f32 %v151, %v154
  %v157 = vmul.f32 %v152, %v154
  %v159 = vperm.slane %v66, 0
  %v161 = vadd.f32 %v156, %v159
  %v162 = vadd.f32 %v157, %v159
  %v163 = vpack.c.bf16 %v162, %v161
  %v165 = vperm.slane %v71, 0
  %v171 = vunpack.c.l.b16 %v67
  %v172 = vunpack.c.l.b16 %v68
  %v173 = vunpack.c.l.b16 %v69
  %v174 = vunpack.c.l.b16 %v70
  %v175 = vpack.c.b16 %v172, %v171
  %v176 = vpack.c.b16 %v174, %v173
  %v180 = vsel %vm101, %v163, 0
  %182 = vmatpush.bf16.msra.mxu0 0
  %183 = vmatpush.bf16.msra.mxu0 0
  %184 = vmatpush.bf16.msra.mxu0 0
  %185 = vmatpush.bf16.msra.mxu0 0
  %186 = vmatpush.bf16.msra.mxu0 0
  %187 = vmatpush.bf16.msra.mxu0 0
  %188 = vmatpush.bf16.msra.mxu0 %v176
  %189 = vmatpush.bf16.msra.mxu0 %v175
  %190 = vmatmul.bf16.gmra.mxu0 %v180
  %v191 = vpop.f32.mrf.mxu0
  %v192 = vadd.f32 %v165, %v191
  %v193 = vpop.f32.mrf.mxu0
  %v194 = vadd.f32 %v165, %v193
  %195 = vdwg.mxu0
  %v196 = vmul.f32 %v192, 0.25
  %v197 = vmul.f32 %v194, 0.25
  %v198 = vpack.c.bf16 %v196, %v196
  %v199 = vpack.c.bf16 %v197, %v197
  %v200 = vpack.c.bf16 %v192, %v192
  %v201 = vpack.c.bf16 %v194, %v194
  %v203 = vunpack.c.l.b16 %v200
  %v204 = vpack.c.b16 %v203, %v203
  %205 = vrot.lane.b32.xlu0 %v204, 96
  %v206 = vpop.permute.xlu0 %205
  %vm207 = vcmask 130048
  %v209 = vsel %vm207, %v198, 0
  %v212 = vsel %vm207, %v206, 0
  %214 = vmatpush.bf16.xpose.msra.mxu0 0
  %215 = vmatpush.bf16.xpose.msra.mxu0 0
  %216 = vmatpush.bf16.xpose.msra.mxu0 0
  %217 = vmatpush.bf16.xpose.msra.mxu0 0
  %218 = vmatpush.bf16.xpose.msra.mxu0 0
  %219 = vmatpush.bf16.xpose.msra.mxu0 0
  %220 = vmatpush.bf16.xpose.msra.mxu0 0
  %221 = vmatpush.bf16.xpose.msra.mxu0 %v212
  %222 = vmatmul.bf16.gmra.mxu0 %v209
  %v223 = vpop.f32.mrf.mxu0
  %v224 = vadd.f32 %v64, %v223
  %v225 = vpop.f32.mrf.mxu0
  %226 = vdwg.mxu0
  %v228 = vunpack.c.l.b16 %v201
  %v229 = vpack.c.b16 %v228, %v228
  %230 = vrot.lane.b32.xlu0 %v229, 96
  %v231 = vpop.permute.xlu0 %230
  %v233 = vsel %vm207, %v199, 0
  %v236 = vsel %vm207, %v231, 0
  %238 = vmatpush.bf16.xpose.msra.mxu0 0
  %239 = vmatpush.bf16.xpose.msra.mxu0 0
  %240 = vmatpush.bf16.xpose.msra.mxu0 0
  %241 = vmatpush.bf16.xpose.msra.mxu0 0
  %242 = vmatpush.bf16.xpose.msra.mxu0 0
  %243 = vmatpush.bf16.xpose.msra.mxu0 0
  %244 = vmatpush.bf16.xpose.msra.mxu0 0
  %245 = vmatpush.bf16.xpose.msra.mxu0 %v236
  %246 = vmatmul.bf16.gmra.mxu0 %v233
  %v247 = vpop.f32.mrf.mxu0
  %v248 = vadd.f32 %v64, %v247
  %v249 = vpop.f32.mrf.mxu0
  %250 = vdwg.mxu0
  %vm251 = vcmask 64512
  %v252 = vsel %vm251, %v224, -inf
  %253 = vmax.xlane.f32.xlu0 %v252
  %v254 = vpop.xlane.xlu0 %253
  %v255 = vsel %vm251, %v248, -inf
  %256 = vmax.xlane.f32.xlu0 %v255
  %v257 = vpop.xlane.xlu0 %256
  %v258 = vsub.f32 %v224, %v254
  %v259 = vsub.f32 %v248, %v257
  %v260 = vmul.f32 %v258, 1.442695
  %v261 = vpow.pop %v260
  %v262 = vmul.f32 %v259, 1.442695
  %v263 = vpow.pop %v262
  %v264 = vsel %vm251, %v261, 0.0
  %265 = vadd.xlane.f32.xlu0 %v264
  %v266 = vpop.xlane.xlu0 %265
  %v267 = vsel %vm251, %v263, 0.0
  %268 = vadd.xlane.f32.xlu0 %v267
  %v269 = vpop.xlane.xlu0 %268
  %v270 = vrcp.pop %v266
  %v271 = vmul.f32 %v266, %v270
  %v272 = vsub.f32 1.0, %v271
  %v273 = vmul.f32 %v270, %v272
  %v274 = vadd.f32 %v270, %v273
  %vm275 = vweird.f32 %v266
  %vm276 = vweird.f32 %v270
  %vm277 = vmor %vm275, %vm276
  %v278 = vsel %vm277, %v270, %v274
  %v279 = vand.u32 2147483647, %v266
  %vm280 = vcmp.eq.f32.partialorder %v279, 8.507059e+37
  %v281 = vand.u32 %v266, 2147483648
  %v282 = vor.u32 1.1754944e-38, %v281
  %v283 = vsel %vm280, %v282, %v278
  %v284 = vmul.f32 %v261, %v283
  %v285 = vrcp.pop %v269
  %v286 = vmul.f32 %v269, %v285
  %v287 = vsub.f32 1.0, %v286
  %v288 = vmul.f32 %v285, %v287
  %v289 = vadd.f32 %v285, %v288
  %vm290 = vweird.f32 %v269
  %vm291 = vweird.f32 %v285
  %vm292 = vmor %vm290, %vm291
  %v293 = vsel %vm292, %v285, %v289
  %v294 = vand.u32 2147483647, %v269
  %vm295 = vcmp.eq.f32.partialorder %v294, 8.507059e+37
  %v296 = vand.u32 %v269, 2147483648
  %v297 = vor.u32 1.1754944e-38, %v296
  %v298 = vsel %vm295, %v297, %v293
  %v299 = vmul.f32 %v263, %v298
  %v300 = vpack.c.bf16 %v284, %v284
  %v301 = vpack.c.bf16 %v299, %v299
  %302 = vrot.lane.b32.xlu0 %v204, 64
  %v303 = vpop.permute.xlu0 %302
  %v305 = vsel %vm251, %v300, 0
  %vm307 = vcmask 1043456
  %v309 = vsel %vm307, %v303, 0
  %311 = vmatpush.bf16.msra.mxu0 0
  %312 = vmatpush.bf16.msra.mxu0 0
  %313 = vmatpush.bf16.msra.mxu0 0
  %314 = vmatpush.bf16.msra.mxu0 0
  %315 = vmatpush.bf16.msra.mxu0 0
  %316 = vmatpush.bf16.msra.mxu0 0
  %317 = vmatpush.bf16.msra.mxu0 0
  %318 = vmatpush.bf16.msra.mxu0 %v309
  %319 = vmatmul.bf16.gmra.mxu0 %v305
  %v320 = vpop.f32.mrf.mxu0
  %v321 = vadd.f32 0.0, %v320
  %v322 = vpop.f32.mrf.mxu0
  %323 = vdwg.mxu0
  %324 = vrot.lane.b32.xlu0 %v229, 64
  %v325 = vpop.permute.xlu0 %324
  %v327 = vsel %vm251, %v301, 0
  %v330 = vsel %vm307, %v325, 0
  %332 = vmatpush.bf16.msra.mxu0 0
  %333 = vmatpush.bf16.msra.mxu0 0
  %334 = vmatpush.bf16.msra.mxu0 0
  %335 = vmatpush.bf16.msra.mxu0 0
  %336 = vmatpush.bf16.msra.mxu0 0
  %337 = vmatpush.bf16.msra.mxu0 0
  %338 = vmatpush.bf16.msra.mxu0 0
  %339 = vmatpush.bf16.msra.mxu0 %v330
  %340 = vmatmul.bf16.gmra.mxu0 %v327
  %v341 = vpop.f32.mrf.mxu0
  %v342 = vadd.f32 0.0, %v341
  %v343 = vpop.f32.mrf.mxu0
  %344 = vdwg.mxu0
  %v345 = vpack.c.bf16 %v342, %v321
  %v347 = vunpack.c.l.b16 %v198
  %v348 = vpack.c.b16 %v347, %v347
  %349 = vrot.lane.b32.xlu0 %v348, 112
  %v350 = vpop.permute.xlu0 %349
  %351 = vrot.lane.b32.xlu0 %v204, 80
  %v352 = vpop.permute.xlu0 %351
  %v354 = vsel %vm207, %v350, 0
  %v357 = vsel %vm207, %v352, 0
  %359 = vmatpush.bf16.xpose.msra.mxu0 0
  %360 = vmatpush.bf16.xpose.msra.mxu0 0
  %361 = vmatpush.bf16.xpose.msra.mxu0 0
  %362 = vmatpush.bf16.xpose.msra.mxu0 0
  %363 = vmatpush.bf16.xpose.msra.mxu0 0
  %364 = vmatpush.bf16.xpose.msra.mxu0 0
  %365 = vmatpush.bf16.xpose.msra.mxu0 0
  %366 = vmatpush.bf16.xpose.msra.mxu0 %v357
  %367 = vmatmul.bf16.gmra.mxu0 %v354
  %v368 = vpop.f32.mrf.mxu0
  %v369 = vadd.f32 %v64, %v368
  %v370 = vpop.f32.mrf.mxu0
  %371 = vdwg.mxu0
  %v373 = vunpack.c.l.b16 %v199
  %v374 = vpack.c.b16 %v373, %v373
  %375 = vrot.lane.b32.xlu0 %v374, 112
  %v376 = vpop.permute.xlu0 %375
  %377 = vrot.lane.b32.xlu0 %v229, 80
  %v378 = vpop.permute.xlu0 %377
  %v380 = vsel %vm207, %v376, 0
  %v383 = vsel %vm207, %v378, 0
  %385 = vmatpush.bf16.xpose.msra.mxu0 0
  %386 = vmatpush.bf16.xpose.msra.mxu0 0
  %387 = vmatpush.bf16.xpose.msra.mxu0 0
  %388 = vmatpush.bf16.xpose.msra.mxu0 0
  %389 = vmatpush.bf16.xpose.msra.mxu0 0
  %390 = vmatpush.bf16.xpose.msra.mxu0 0
  %391 = vmatpush.bf16.xpose.msra.mxu0 0
  %392 = vmatpush.bf16.xpose.msra.mxu0 %v383
  %393 = vmatmul.bf16.gmra.mxu0 %v380
  %v394 = vpop.f32.mrf.mxu0
  %v395 = vadd.f32 %v64, %v394
  %v396 = vpop.f32.mrf.mxu0
  %397 = vdwg.mxu0
  %v398 = vsel %vm251, %v369, -inf
  %399 = vmax.xlane.f32.xlu0 %v398
  %v400 = vpop.xlane.xlu0 %399
  %v401 = vsel %vm251, %v395, -inf
  %402 = vmax.xlane.f32.xlu0 %v401
  %v403 = vpop.xlane.xlu0 %402
  %v404 = vsub.f32 %v369, %v400
  %v405 = vsub.f32 %v395, %v403
  %v406 = vmul.f32 %v404, 1.442695
  %v407 = vpow.pop %v406
  %v408 = vmul.f32 %v405, 1.442695
  %v409 = vpow.pop %v408
  %v410 = vsel %vm251, %v407, 0.0
  %411 = vadd.xlane.f32.xlu0 %v410
  %v412 = vpop.xlane.xlu0 %411
  %v413 = vsel %vm251, %v409, 0.0
  %414 = vadd.xlane.f32.xlu0 %v413
  %v415 = vpop.xlane.xlu0 %414
  %v416 = vrcp.pop %v412
  %v417 = vmul.f32 %v412, %v416
  %v418 = vsub.f32 1.0, %v417
  %v419 = vmul.f32 %v416, %v418
  %v420 = vadd.f32 %v416, %v419
  %vm421 = vweird.f32 %v412
  %vm422 = vweird.f32 %v416
  %vm423 = vmor %vm421, %vm422
  %v424 = vsel %vm423, %v416, %v420
  %v425 = vand.u32 2147483647, %v412
  %vm426 = vcmp.eq.f32.partialorder %v425, 8.507059e+37
  %v427 = vand.u32 %v412, 2147483648
  %v428 = vor.u32 1.1754944e-38, %v427
  %v429 = vsel %vm426, %v428, %v424
  %v430 = vmul.f32 %v407, %v429
  %v431 = vrcp.pop %v415
  %v432 = vmul.f32 %v415, %v431
  %v433 = vsub.f32 1.0, %v432
  %v434 = vmul.f32 %v431, %v433
  %v435 = vadd.f32 %v431, %v434
  %vm436 = vweird.f32 %v415
  %vm437 = vweird.f32 %v431
  %vm438 = vmor %vm436, %vm437
  %v439 = vsel %vm438, %v431, %v435
  %v440 = vand.u32 2147483647, %v415
  %vm441 = vcmp.eq.f32.partialorder %v440, 8.507059e+37
  %v442 = vand.u32 %v415, 2147483648
  %v443 = vor.u32 1.1754944e-38, %v442
  %v444 = vsel %vm441, %v443, %v439
  %v445 = vmul.f32 %v409, %v444
  %v446 = vpack.c.bf16 %v430, %v430
  %v447 = vpack.c.bf16 %v445, %v445
  %448 = vrot.lane.b32.xlu0 %v204, 48
  %v449 = vpop.permute.xlu0 %448
  %v451 = vsel %vm251, %v446, 0
  %v454 = vsel %vm307, %v449, 0
  %456 = vmatpush.bf16.msra.mxu0 0
  %457 = vmatpush.bf16.msra.mxu0 0
  %458 = vmatpush.bf16.msra.mxu0 0
  %459 = vmatpush.bf16.msra.mxu0 0
  %460 = vmatpush.bf16.msra.mxu0 0
  %461 = vmatpush.bf16.msra.mxu0 0
  %462 = vmatpush.bf16.msra.mxu0 0
  %463 = vmatpush.bf16.msra.mxu0 %v454
  %464 = vmatmul.bf16.gmra.mxu0 %v451
  %v465 = vpop.f32.mrf.mxu0
  %v466 = vadd.f32 0.0, %v465
  %v467 = vpop.f32.mrf.mxu0
  %468 = vdwg.mxu0
  %469 = vrot.lane.b32.xlu0 %v229, 48
  %v470 = vpop.permute.xlu0 %469
  %v472 = vsel %vm251, %v447, 0
  %v475 = vsel %vm307, %v470, 0
  %477 = vmatpush.bf16.msra.mxu0 0
  %478 = vmatpush.bf16.msra.mxu0 0
  %479 = vmatpush.bf16.msra.mxu0 0
  %480 = vmatpush.bf16.msra.mxu0 0
  %481 = vmatpush.bf16.msra.mxu0 0
  %482 = vmatpush.bf16.msra.mxu0 0
  %483 = vmatpush.bf16.msra.mxu0 0
  %484 = vmatpush.bf16.msra.mxu0 %v475
  %485 = vmatmul.bf16.gmra.mxu0 %v472
  %v486 = vpop.f32.mrf.mxu0
  %v487 = vadd.f32 0.0, %v486
  %v488 = vpop.f32.mrf.mxu0
  %489 = vdwg.mxu0
  %v490 = vpack.c.bf16 %v487, %v466
  %v493 = vunpack.c.l.b16 %v74
  %v494 = vunpack.c.l.b16 %v75
  %v495 = vpack.c.b16 %v494, %v493
  %v498 = vsel %vm207, %v490, 0
  %500 = vmatpush.bf16.msra.mxu0 0
  %501 = vmatpush.bf16.msra.mxu0 0
  %502 = vmatpush.bf16.msra.mxu0 0
  %503 = vmatpush.bf16.msra.mxu0 0
  %504 = vmatpush.bf16.msra.mxu0 0
  %505 = vmatpush.bf16.msra.mxu0 0
  %506 = vmatpush.bf16.msra.mxu0 0
  %507 = vmatpush.bf16.msra.mxu0 %v495
  %508 = vmatmul.bf16.gmra.mxu0 %v498
  %v509 = vpop.f32.mrf.mxu0
  %v510 = vadd.f32 0.0, %v509
  %v511 = vpop.f32.mrf.mxu0
  %v512 = vadd.f32 0.0, %v511
  %513 = vdwg.mxu0
  %v516 = vunpack.c.l.b16 %v72
  %v517 = vunpack.c.l.b16 %v73
  %v518 = vpack.c.b16 %v517, %v516
  %v521 = vsel %vm207, %v345, 0
  %523 = vmatpush.bf16.msra.mxu0 0
  %524 = vmatpush.bf16.msra.mxu0 0
  %525 = vmatpush.bf16.msra.mxu0 0
  %526 = vmatpush.bf16.msra.mxu0 0
  %527 = vmatpush.bf16.msra.mxu0 0
  %528 = vmatpush.bf16.msra.mxu0 0
  %529 = vmatpush.bf16.msra.mxu0 0
  %530 = vmatpush.bf16.msra.mxu0 %v518
  %531 = vmatmul.bf16.gmra.mxu0 %v521
  %v532 = vpop.f32.mrf.mxu0
  %v533 = vadd.f32 %v510, %v532
  %v534 = vpop.f32.mrf.mxu0
  %v535 = vadd.f32 %v512, %v534
  %536 = vdwg.mxu0
  %v538 = vperm.slane %v76, 0
  %v540 = vadd.f32 %v533, %v538
  %v541 = vadd.f32 %v535, %v538
  %v542 = vadd.f32 %v57, %v540
  %v543 = vadd.f32 %v58, %v541
  %v544 = vsel %vm101, %v542, 0.0
  %545 = vadd.xlane.f32.xlu0 %v544
  %v546 = vpop.xlane.xlu0 %545
  %v547 = vsel %vm101, %v543, 0.0
  %548 = vadd.xlane.f32.xlu0 %v547
  %v549 = vpop.xlane.xlu0 %548
  %v550 = vmul.f32 %v546, %v114
  %v551 = vmul.f32 %v549, %v114
  %v552 = vsub.f32 %v542, %v550
  %v553 = vsub.f32 %v543, %v551
  %v554 = vmul.f32 %v552, %v552
  %v555 = vmul.f32 %v553, %v553
  %v556 = vsel %vm101, %v554, 0.0
  %557 = vadd.xlane.f32.xlu0 %v556
  %v558 = vpop.xlane.xlu0 %557
  %v559 = vsel %vm101, %v555, 0.0
  %560 = vadd.xlane.f32.xlu0 %v559
  %v561 = vpop.xlane.xlu0 %560
  %v562 = vmul.f32 %v558, %v114
  %v563 = vmul.f32 %v561, %v114
  %v564 = vadd.f32 %v562, 1e-05
  %v565 = vadd.f32 %v563, 1e-05
  %v566 = vrsqrt.pop %v564
  %v567 = vmul.f32 %v566, %v564
  %v568 = vmul.f32 %v567, %v566
  %v569 = vmul.f32 0.5, %v568
  %v570 = vsub.f32 1.5, %v569
  %v571 = vmul.f32 %v566, %v570
  %vm572 = vweird.f32 %v564
  %vm573 = vweird.f32 %v566
  %vm574 = vmor %vm572, %vm573
  %v575 = vsel %vm574, %v566, %v571
  %v576 = vrsqrt.pop %v565
  %v577 = vmul.f32 %v576, %v565
  %v578 = vmul.f32 %v577, %v576
  %v579 = vmul.f32 0.5, %v578
  %v580 = vsub.f32 1.5, %v579
  %v581 = vmul.f32 %v576, %v580
  %vm582 = vweird.f32 %v565
  %vm583 = vweird.f32 %v576
  %vm584 = vmor %vm582, %vm583
  %v585 = vsel %vm584, %v576, %v581
  %v586 = vmul.f32 %v552, %v575
  %v587 = vmul.f32 %v553, %v585
  %v589 = vperm.slane %v77, 0
  %v591 = vmul.f32 %v586, %v589
  %v592 = vmul.f32 %v587, %v589
  %v594 = vperm.slane %v78, 0
  %v596 = vadd.f32 %v591, %v594
  %v597 = vadd.f32 %v592, %v594
  %v598 = vpack.c.bf16 %v597, %v596
  %v600 = vperm.slane %v83, 0
  %v606 = vunpack.c.l.b16 %v79
  %v607 = vunpack.c.l.b16 %v80
  %v608 = vunpack.c.l.b16 %v81
  %v609 = vunpack.c.l.b16 %v82
  %v610 = vpack.c.b16 %v607, %v606
  %v611 = vpack.c.b16 %v609, %v608
  %v615 = vsel %vm101, %v598, 0
  %617 = vmatpush.bf16.msra.mxu0 0
  %618 = vmatpush.bf16.msra.mxu0 0
  %619 = vmatpush.bf16.msra.mxu0 0
  %620 = vmatpush.bf16.msra.mxu0 0
  %621 = vmatpush.bf16.msra.mxu0 0
  %622 = vmatpush.bf16.msra.mxu0 0
  %623 = vmatpush.bf16.msra.mxu0 %v611
  %624 = vmatpush.bf16.msra.mxu0 %v610
  %625 = vmatmul.bf16.gmra.mxu0 %v615
  %v626 = vpop.f32.mrf.mxu0
  %v627 = vadd.f32 %v600, %v626
  %v628 = vpop.f32.mrf.mxu0
  %v629 = vadd.f32 %v600, %v628
  %630 = vdwg.mxu0
  %v631 = vmul.f32 %v627, 0.5
  %v632 = vmul.f32 %v629, 0.5
  %v633 = vmul.f32 %v627, 0.044715
  %v634 = vmul.f32 %v629, 0.044715
  %v635 = vmul.f32 %v633, %v627
  %v636 = vmul.f32 %v634, %v629
  %v637 = vmul.f32 %v635, %v627
  %v638 = vmul.f32 %v636, %v629
  %v639 = vadd.f32 %v627, %v637
  %v640 = vadd.f32 %v629, %v638
  %v641 = vmul.f32 %v639, 0.7978846
  %v642 = vmul.f32 %v640, 0.7978846
  %v643 = vtanh.pop %v641
  %v644 = vtanh.pop %v642
  %v645 = vadd.f32 %v643, 1.0
  %v646 = vadd.f32 %v644, 1.0
  %v647 = vmul.f32 %v631, %v645
  %v648 = vmul.f32 %v632, %v646
  %v649 = vpack.c.bf16 %v648, %v647
  %v666 = vunpack.c.l.b16 %v84
  %v667 = vunpack.c.l.b16 %v85
  %v668 = vunpack.c.l.b16 %v86
  %v669 = vunpack.c.l.b16 %v87
  %v670 = vunpack.c.l.b16 %v88
  %v671 = vunpack.c.l.b16 %v89
  %v672 = vunpack.c.l.b16 %v90
  %v673 = vunpack.c.l.b16 %v91
  %v674 = vunpack.c.l.b16 %v92
  %v675 = vunpack.c.l.b16 %v93
  %v676 = vunpack.c.l.b16 %v94
  %v677 = vunpack.c.l.b16 %v95
  %v678 = vunpack.c.l.b16 %v96
  %v679 = vunpack.c.l.b16 %v97
  %v680 = vunpack.c.l.b16 %v98
  %v681 = vunpack.c.l.b16 %v99
  %v682 = vpack.c.b16 %v667, %v666
  %v683 = vpack.c.b16 %v669, %v668
  %v684 = vpack.c.b16 %v671, %v670
  %v685 = vpack.c.b16 %v673, %v672
  %v686 = vpack.c.b16 %v675, %v674
  %v687 = vpack.c.b16 %v677, %v676
  %v688 = vpack.c.b16 %v679, %v678
  %v689 = vpack.c.b16 %v681, %v680
  %698 = vmatpush.bf16.msra.mxu0 %v689
  %699 = vmatpush.bf16.msra.mxu0 %v688
  %700 = vmatpush.bf16.msra.mxu0 %v687
  %701 = vmatpush.bf16.msra.mxu0 %v686
  %702 = vmatpush.bf16.msra.mxu0 %v685
  %703 = vmatpush.bf16.msra.mxu0 %v684
  %704 = vmatpush.bf16.msra.mxu0 %v683
  %705 = vmatpush.bf16.msra.mxu0 %v682
  %706 = vmatmul.bf16.gmra.mxu0 %v649
  %v707 = vpop.f32.mrf.mxu0
  %v708 = vadd.f32 0.0, %v707
  %v709 = vpop.f32.mrf.mxu0
  %v710 = vadd.f32 0.0, %v709
  %711 = vdwg.mxu0
  %v712 = vadd.f32 %v542, %v708
  %v713 = vadd.f32 %v543, %v710
  %v715 = vperm.slane %v100, 0
  %v717 = vadd.f32 %v712, %v715
  %v718 = vadd.f32 %v713, %v715
  %s719 = scalar_lea.vmem %s2, 1
  %v720 = vld [vmem:[%s719] sm:$0x1]
  %s721 = scalar_lea.vmem %s3, 1
  %v722 = vld [vmem:[%s721] sm:$0x1]
  %s723 = scalar_lea.vmem %s4, 16
  %v724 = vld [vmem:[%s723] sm:$0xf]
  %v725 = vld [vmem:[%s723 + $0x4] sm:$0xf]
  %v726 = vld [vmem:[%s723 + $0x8] sm:$0xf]
  %v727 = vld [vmem:[%s723 + $0xc] sm:$0xf]
  %s728 = scalar_lea.vmem %s5, 1
  %v729 = vld [vmem:[%s728] sm:$0x1]
  %s730 = scalar_lea.vmem %s6, 16
  %v731 = vld [vmem:[%s730] sm:$0xf]
  %v732 = vld [vmem:[%s730 + $0x4] sm:$0xf]
  %v733 = vld [vmem:[%s730 + $0x8] sm:$0xf]
  %v734 = vld [vmem:[%s730 + $0xc] sm:$0xf]
  %s735 = scalar_lea.vmem %s7, 1
  %v736 = vld [vmem:[%s735] sm:$0x1]
  %s737 = scalar_lea.vmem %s8, 1
  %v738 = vld [vmem:[%s737] sm:$0x1]
  %s739 = scalar_lea.vmem %s9, 1
  %v740 = vld [vmem:[%s739] sm:$0x1]
  %s741 = scalar_lea.vmem %s10, 16
  %v742 = vld [vmem:[%s741] sm:$0xf]
  %v743 = vld [vmem:[%s741 + $0x4] sm:$0xf]
  %v744 = vld [vmem:[%s741 + $0x8] sm:$0xf]
  %v745 = vld [vmem:[%s741 + $0xc] sm:$0xf]
  %s746 = scalar_lea.vmem %s11, 1
  %v747 = vld [vmem:[%s746] sm:$0x1]
  %s748 = scalar_lea.vmem %s12, 64
  %v749 = vld [vmem:[%s748] sm:$0xf]
  %v750 = vld [vmem:[%s748 + $0x4] sm:$0xf]
  %v751 = vld [vmem:[%s748 + $0x8] sm:$0xf]
  %v752 = vld [vmem:[%s748 + $0xc] sm:$0xf]
  %v753 = vld [vmem:[%s748 + $0x10] sm:$0xf]
  %v754 = vld [vmem:[%s748 + $0x14] sm:$0xf]
  %v755 = vld [vmem:[%s748 + $0x18] sm:$0xf]
  %v756 = vld [vmem:[%s748 + $0x1c] sm:$0xf]
  %v757 = vld [vmem:[%s748 + $0x20] sm:$0xf]
  %v758 = vld [vmem:[%s748 + $0x24] sm:$0xf]
  %v759 = vld [vmem:[%s748 + $0x28] sm:$0xf]
  %v760 = vld [vmem:[%s748 + $0x2c] sm:$0xf]
  %v761 = vld [vmem:[%s748 + $0x30] sm:$0xf]
  %v762 = vld [vmem:[%s748 + $0x34] sm:$0xf]
  %v763 = vld [vmem:[%s748 + $0x38] sm:$0xf]
  %v764 = vld [vmem:[%s748 + $0x3c] sm:$0xf]
  %s765 = scalar_lea.vmem %s13, 1
  %v766 = vld [vmem:[%s765] sm:$0x1]
  %v767 = vsel %vm101, %v717, 0.0
  %768 = vadd.xlane.f32.xlu0 %v767
  %v769 = vpop.xlane.xlu0 %768
  %v770 = vsel %vm101, %v718, 0.0
  %771 = vadd.xlane.f32.xlu0 %v770
  %v772 = vpop.xlane.xlu0 %771
  %v773 = vmul.f32 %v769, %v114
  %v774 = vmul.f32 %v772, %v114
  %v775 = vsub.f32 %v717, %v773
  %v776 = vsub.f32 %v718, %v774
  %v777 = vmul.f32 %v775, %v775
  %v778 = vmul.f32 %v776, %v776
  %v779 = vsel %vm101, %v777, 0.0
  %780 = vadd.xlane.f32.xlu0 %v779
  %v781 = vpop.xlane.xlu0 %780
  %v782 = vsel %vm101, %v778, 0.0
  %783 = vadd.xlane.f32.xlu0 %v782
  %v784 = vpop.xlane.xlu0 %783
  %v785 = vmul.f32 %v781, %v114
  %v786 = vmul.f32 %v784, %v114
  %v787 = vadd.f32 %v785, 1e-05
  %v788 = vadd.f32 %v786, 1e-05
  %v789 = vrsqrt.pop %v787
  %v790 = vmul.f32 %v789, %v787
  %v791 = vmul.f32 %v790, %v789
  %v792 = vmul.f32 0.5, %v791
  %v793 = vsub.f32 1.5, %v792
  %v794 = vmul.f32 %v789, %v793
  %vm795 = vweird.f32 %v787
  %vm796 = vweird.f32 %v789
  %vm797 = vmor %vm795, %vm796
  %v798 = vsel %vm797, %v789, %v794
  %v799 = vrsqrt.pop %v788
  %v800 = vmul.f32 %v799, %v788
  %v801 = vmul.f32 %v800, %v799
  %v802 = vmul.f32 0.5, %v801
  %v803 = vsub.f32 1.5, %v802
  %v804 = vmul.f32 %v799, %v803
  %vm805 = vweird.f32 %v788
  %vm806 = vweird.f32 %v799
  %vm807 = vmor %vm805, %vm806
  %v808 = vsel %vm807, %v799, %v804
  %v809 = vmul.f32 %v775, %v798
  %v810 = vmul.f32 %v776, %v808
  %v812 = vperm.slane %v720, 0
  %v814 = vmul.f32 %v809, %v812
  %v815 = vmul.f32 %v810, %v812
  %v817 = vperm.slane %v722, 0
  %v819 = vadd.f32 %v814, %v817
  %v820 = vadd.f32 %v815, %v817
  %v821 = vpack.c.bf16 %v820, %v819
  %v823 = vperm.slane %v729, 0
  %v829 = vunpack.c.l.b16 %v724
  %v830 = vunpack.c.l.b16 %v725
  %v831 = vunpack.c.l.b16 %v726
  %v832 = vunpack.c.l.b16 %v727
  %v833 = vpack.c.b16 %v830, %v829
  %v834 = vpack.c.b16 %v832, %v831
  %v838 = vsel %vm101, %v821, 0
  %840 = vmatpush.bf16.msra.mxu0 0
  %841 = vmatpush.bf16.msra.mxu0 0
  %842 = vmatpush.bf16.msra.mxu0 0
  %843 = vmatpush.bf16.msra.mxu0 0
  %844 = vmatpush.bf16.msra.mxu0 0
  %845 = vmatpush.bf16.msra.mxu0 0
  %846 = vmatpush.bf16.msra.mxu0 %v834
  %847 = vmatpush.bf16.msra.mxu0 %v833
  %848 = vmatmul.bf16.gmra.mxu0 %v838
  %v849 = vpop.f32.mrf.mxu0
  %v850 = vadd.f32 %v823, %v849
  %v851 = vpop.f32.mrf.mxu0
  %v852 = vadd.f32 %v823, %v851
  %853 = vdwg.mxu0
  %v854 = vmul.f32 %v850, 0.25
  %v855 = vmul.f32 %v852, 0.25
  %v856 = vpack.c.bf16 %v854, %v854
  %v857 = vpack.c.bf16 %v855, %v855
  %v858 = vpack.c.bf16 %v850, %v850
  %v859 = vpack.c.bf16 %v852, %v852
  %v861 = vunpack.c.l.b16 %v858
  %v862 = vpack.c.b16 %v861, %v861
  %863 = vrot.lane.b32.xlu0 %v862, 96
  %v864 = vpop.permute.xlu0 %863
  %v866 = vsel %vm207, %v856, 0
  %v869 = vsel %vm207, %v864, 0
  %871 = vmatpush.bf16.xpose.msra.mxu0 0
  %872 = vmatpush.bf16.xpose.msra.mxu0 0
  %873 = vmatpush.bf16.xpose.msra.mxu0 0
  %874 = vmatpush.bf16.xpose.msra.mxu0 0
  %875 = vmatpush.bf16.xpose.msra.mxu0 0
  %876 = vmatpush.bf16.xpose.msra.mxu0 0
  %877 = vmatpush.bf16.xpose.msra.mxu0 0
  %878 = vmatpush.bf16.xpose.msra.mxu0 %v869
  %879 = vmatmul.bf16.gmra.mxu0 %v866
  %v880 = vpop.f32.mrf.mxu0
  %v881 = vadd.f32 %v64, %v880
  %v882 = vpop.f32.mrf.mxu0
  %883 = vdwg.mxu0
  %v885 = vunpack.c.l.b16 %v859
  %v886 = vpack.c.b16 %v885, %v885
  %887 = vrot.lane.b32.xlu0 %v886, 96
  %v888 = vpop.permute.xlu0 %887
  %v890 = vsel %vm207, %v857, 0
  %v893 = vsel %vm207, %v888, 0
  %895 = vmatpush.bf16.xpose.msra.mxu0 0
  %896 = vmatpush.bf16.xpose.msra.mxu0 0
  %897 = vmatpush.bf16.xpose.msra.mxu0 0
  %898 = vmatpush.bf16.xpose.msra.mxu0 0
  %899 = vmatpush.bf16.xpose.msra.mxu0 0
  %900 = vmatpush.bf16.xpose.msra.mxu0 0
  %901 = vmatpush.bf16.xpose.msra.mxu0 0
  %902 = vmatpush.bf16.xpose.msra.mxu0 %v893
  %903 = vmatmul.bf16.gmra.mxu0 %v890
  %v904 = vpop.f32.mrf.mxu0
  %v905 = vadd.f32 %v64, %v904
  %v906 = vpop.f32.mrf.mxu0
  %907 = vdwg.mxu0
  %v908 = vsel %vm251, %v881, -inf
  %909 = vmax.xlane.f32.xlu0 %v908
  %v910 = vpop.xlane.xlu0 %909
  %v911 = vsel %vm251, %v905, -inf
  %912 = vmax.xlane.f32.xlu0 %v911
  %v913 = vpop.xlane.xlu0 %912
  %v914 = vsub.f32 %v881, %v910
  %v915 = vsub.f32 %v905, %v913
  %v916 = vmul.f32 %v914, 1.442695
  %v917 = vpow.pop %v916
  %v918 = vmul.f32 %v915, 1.442695
  %v919 = vpow.pop %v918
  %v920 = vsel %vm251, %v917, 0.0
  %921 = vadd.xlane.f32.xlu0 %v920
  %v922 = vpop.xlane.xlu0 %921
  %v923 = vsel %vm251, %v919, 0.0
  %924 = vadd.xlane.f32.xlu0 %v923
  %v925 = vpop.xlane.xlu0 %924
  %v926 = vrcp.pop %v922
  %v927 = vmul.f32 %v922, %v926
  %v928 = vsub.f32 1.0, %v927
  %v929 = vmul.f32 %v926, %v928
  %v930 = vadd.f32 %v926, %v929
  %vm931 = vweird.f32 %v922
  %vm932 = vweird.f32 %v926
  %vm933 = vmor %vm931, %vm932
  %v934 = vsel %vm933, %v926, %v930
  %v935 = vand.u32 2147483647, %v922
  %vm936 = vcmp.eq.f32.partialorder %v935, 8.507059e+37
  %v937 = vand.u32 %v922, 2147483648
  %v938 = vor.u32 1.1754944e-38, %v937
  %v939 = vsel %vm936, %v938, %v934
  %v940 = vmul.f32 %v917, %v939
  %v941 = vrcp.pop %v925
  %v942 = vmul.f32 %v925, %v941
  %v943 = vsub.f32 1.0, %v942
  %v944 = vmul.f32 %v941, %v943
  %v945 = vadd.f32 %v941, %v944
  %vm946 = vweird.f32 %v925
  %vm947 = vweird.f32 %v941
  %vm948 = vmor %vm946, %vm947
  %v949 = vsel %vm948, %v941, %v945
  %v950 = vand.u32 2147483647, %v925
  %vm951 = vcmp.eq.f32.partialorder %v950, 8.507059e+37
  %v952 = vand.u32 %v925, 2147483648
  %v953 = vor.u32 1.1754944e-38, %v952
  %v954 = vsel %vm951, %v953, %v949
  %v955 = vmul.f32 %v919, %v954
  %v956 = vpack.c.bf16 %v940, %v940
  %v957 = vpack.c.bf16 %v955, %v955
  %958 = vrot.lane.b32.xlu0 %v862, 64
  %v959 = vpop.permute.xlu0 %958
  %v961 = vsel %vm251, %v956, 0
  %v964 = vsel %vm307, %v959, 0
  %966 = vmatpush.bf16.msra.mxu0 0
  %967 = vmatpush.bf16.msra.mxu0 0
  %968 = vmatpush.bf16.msra.mxu0 0
  %969 = vmatpush.bf16.msra.mxu0 0
  %970 = vmatpush.bf16.msra.mxu0 0
  %971 = vmatpush.bf16.msra.mxu0 0
  %972 = vmatpush.bf16.msra.mxu0 0
  %973 = vmatpush.bf16.msra.mxu0 %v964
  %974 = vmatmul.bf16.gmra.mxu0 %v961
  %v975 = vpop.f32.mrf.mxu0
  %v976 = vadd.f32 0.0, %v975
  %v977 = vpop.f32.mrf.mxu0
  %978 = vdwg.mxu0
  %979 = vrot.lane.b32.xlu0 %v886, 64
  %v980 = vpop.permute.xlu0 %979
  %v982 = vsel %vm251, %v957, 0
  %v985 = vsel %vm307, %v980, 0
  %987 = vmatpush.bf16.msra.mxu0 0
  %988 = vmatpush.bf16.msra.mxu0 0
  %989 = vmatpush.bf16.msra.mxu0 0
  %990 = vmatpush.bf16.msra.mxu0 0
  %991 = vmatpush.bf16.msra.mxu0 0
  %992 = vmatpush.bf16.msra.mxu0 0
  %993 = vmatpush.bf16.msra.mxu0 0
  %994 = vmatpush.bf16.msra.mxu0 %v985
  %995 = vmatmul.bf16.gmra.mxu0 %v982
  %v996 = vpop.f32.mrf.mxu0
  %v997 = vadd.f32 0.0, %v996
  %v998 = vpop.f32.mrf.mxu0
  %999 = vdwg.mxu0
  %v1000 = vpack.c.bf16 %v997, %v976
  %v1002 = vunpack.c.l.b16 %v856
  %v1003 = vpack.c.b16 %v1002, %v1002
  %1004 = vrot.lane.b32.xlu0 %v1003, 112
  %v1005 = vpop.permute.xlu0 %1004
  %1006 = vrot.lane.b32.xlu0 %v862, 80
  %v1007 = vpop.permute.xlu0 %1006
  %v1009 = vsel %vm207, %v1005, 0
  %v1012 = vsel %vm207, %v1007, 0
  %1014 = vmatpush.bf16.xpose.msra.mxu0 0
  %1015 = vmatpush.bf16.xpose.msra.mxu0 0
  %1016 = vmatpush.bf16.xpose.msra.mxu0 0
  %1017 = vmatpush.bf16.xpose.msra.mxu0 0
  %1018 = vmatpush.bf16.xpose.msra.mxu0 0
  %1019 = vmatpush.bf16.xpose.msra.mxu0 0
  %1020 = vmatpush.bf16.xpose.msra.mxu0 0
  %1021 = vmatpush.bf16.xpose.msra.mxu0 %v1012
  %1022 = vmatmul.bf16.gmra.mxu0 %v1009
  %v1023 = vpop.f32.mrf.mxu0
  %v1024 = vadd.f32 %v64, %v1023
  %v1025 = vpop.f32.mrf.mxu0
  %1026 = vdwg.mxu0
  %v1028 = vunpack.c.l.b16 %v857
  %v1029 = vpack.c.b16 %v1028, %v1028
  %1030 = vrot.lane.b32.xlu0 %v1029, 112
  %v1031 = vpop.permute.xlu0 %1030
  %1032 = vrot.lane.b32.xlu0 %v886, 80
  %v1033 = vpop.permute.xlu0 %1032
  %v1035 = vsel %vm207, %v1031, 0
  %v1038 = vsel %vm207, %v1033, 0
  %1040 = vmatpush.bf16.xpose.msra.mxu0 0
  %1041 = vmatpush.bf16.xpose.msra.mxu0 0
  %1042 = vmatpush.bf16.xpose.msra.mxu0 0
  %1043 = vmatpush.bf16.xpose.msra.mxu0 0
  %1044 = vmatpush.bf16.xpose.msra.mxu0 0
  %1045 = vmatpush.bf16.xpose.msra.mxu0 0
  %1046 = vmatpush.bf16.xpose.msra.mxu0 0
  %1047 = vmatpush.bf16.xpose.msra.mxu0 %v1038
  %1048 = vmatmul.bf16.gmra.mxu0 %v1035
  %v1049 = vpop.f32.mrf.mxu0
  %v1050 = vadd.f32 %v64, %v1049
  %v1051 = vpop.f32.mrf.mxu0
  %1052 = vdwg.mxu0
  %v1053 = vsel %vm251, %v1024, -inf
  %1054 = vmax.xlane.f32.xlu0 %v1053
  %v1055 = vpop.xlane.xlu0 %1054
  %v1056 = vsel %vm251, %v1050, -inf
  %1057 = vmax.xlane.f32.xlu0 %v1056
  %v1058 = vpop.xlane.xlu0 %1057
  %v1059 = vsub.f32 %v1024, %v1055
  %v1060 = vsub.f32 %v1050, %v1058
  %v1061 = vmul.f32 %v1059, 1.442695
  %v1062 = vpow.pop %v1061
  %v1063 = vmul.f32 %v1060, 1.442695
  %v1064 = vpow.pop %v1063
  %v1065 = vsel %vm251, %v1062, 0.0
  %1066 = vadd.xlane.f32.xlu0 %v1065
  %v1067 = vpop.xlane.xlu0 %1066
  %v1068 = vsel %vm251, %v1064, 0.0
  %1069 = vadd.xlane.f32.xlu0 %v1068
  %v1070 = vpop.xlane.xlu0 %1069
  %v1071 = vrcp.pop %v1067
  %v1072 = vmul.f32 %v1067, %v1071
  %v1073 = vsub.f32 1.0, %v1072
  %v1074 = vmul.f32 %v1071, %v1073
  %v1075 = vadd.f32 %v1071, %v1074
  %vm1076 = vweird.f32 %v1067
  %vm1077 = vweird.f32 %v1071
  %vm1078 = vmor %vm1076, %vm1077
  %v1079 = vsel %vm1078, %v1071, %v1075
  %v1080 = vand.u32 2147483647, %v1067
  %vm1081 = vcmp.eq.f32.partialorder %v1080, 8.507059e+37
  %v1082 = vand.u32 %v1067, 2147483648
  %v1083 = vor.u32 1.1754944e-38, %v1082
  %v1084 = vsel %vm1081, %v1083, %v1079
  %v1085 = vmul.f32 %v1062, %v1084
  %v1086 = vrcp.pop %v1070
  %v1087 = vmul.f32 %v1070, %v1086
  %v1088 = vsub.f32 1.0, %v1087
  %v1089 = vmul.f32 %v1086, %v1088
  %v1090 = vadd.f32 %v1086, %v1089
  %vm1091 = vweird.f32 %v1070
  %vm1092 = vweird.f32 %v1086
  %vm1093 = vmor %vm1091, %vm1092
  %v1094 = vsel %vm1093, %v1086, %v1090
  %v1095 = vand.u32 2147483647, %v1070
  %vm1096 = vcmp.eq.f32.partialorder %v1095, 8.507059e+37
  %v1097 = vand.u32 %v1070, 2147483648
  %v1098 = vor.u32 1.1754944e-38, %v1097
  %v1099 = vsel %vm1096, %v1098, %v1094
  %v1100 = vmul.f32 %v1064, %v1099
  %v1101 = vpack.c.bf16 %v1085, %v1085
  %v1102 = vpack.c.bf16 %v1100, %v1100
  %1103 = vrot.lane.b32.xlu0 %v862, 48
  %v1104 = vpop.permute.xlu0 %1103
  %v1106 = vsel %vm251, %v1101, 0
  %v1109 = vsel %vm307, %v1104, 0
  %1111 = vmatpush.bf16.msra.mxu0 0
  %1112 = vmatpush.bf16.msra.mxu0 0
  %1113 = vmatpush.bf16.msra.mxu0 0
  %1114 = vmatpush.bf16.msra.mxu0 0
  %1115 = vmatpush.bf16.msra.mxu0 0
  %1116 = vmatpush.bf16.msra.mxu0 0
  %1117 = vmatpush.bf16.msra.mxu0 0
  %1118 = vmatpush.bf16.msra.mxu0 %v1109
  %1119 = vmatmul.bf16.gmra.mxu0 %v1106
  %v1120 = vpop.f32.mrf.mxu0
  %v1121 = vadd.f32 0.0, %v1120
  %v1122 = vpop.f32.mrf.mxu0
  %1123 = vdwg.mxu0
  %1124 = vrot.lane.b32.xlu0 %v886, 48
  %v1125 = vpop.permute.xlu0 %1124
  %v1127 = vsel %vm251, %v1102, 0
  %v1130 = vsel %vm307, %v1125, 0
  %1132 = vmatpush.bf16.msra.mxu0 0
  %1133 = vmatpush.bf16.msra.mxu0 0
  %1134 = vmatpush.bf16.msra.mxu0 0
  %1135 = vmatpush.bf16.msra.mxu0 0
  %1136 = vmatpush.bf16.msra.mxu0 0
  %1137 = vmatpush.bf16.msra.mxu0 0
  %1138 = vmatpush.bf16.msra.mxu0 0
  %1139 = vmatpush.bf16.msra.mxu0 %v1130
  %1140 = vmatmul.bf16.gmra.mxu0 %v1127
  %v1141 = vpop.f32.mrf.mxu0
  %v1142 = vadd.f32 0.0, %v1141
  %v1143 = vpop.f32.mrf.mxu0
  %1144 = vdwg.mxu0
  %v1145 = vpack.c.bf16 %v1142, %v1121
  %v1148 = vunpack.c.l.b16 %v733
  %v1149 = vunpack.c.l.b16 %v734
  %v1150 = vpack.c.b16 %v1149, %v1148
  %v1153 = vsel %vm207, %v1145, 0
  %1155 = vmatpush.bf16.msra.mxu0 0
  %1156 = vmatpush.bf16.msra.mxu0 0
  %1157 = vmatpush.bf16.msra.mxu0 0
  %1158 = vmatpush.bf16.msra.mxu0 0
  %1159 = vmatpush.bf16.msra.mxu0 0
  %1160 = vmatpush.bf16.msra.mxu0 0
  %1161 = vmatpush.bf16.msra.mxu0 0
  %1162 = vmatpush.bf16.msra.mxu0 %v1150
  %1163 = vmatmul.bf16.gmra.mxu0 %v1153
  %v1164 = vpop.f32.mrf.mxu0
  %v1165 = vadd.f32 0.0, %v1164
  %v1166 = vpop.f32.mrf.mxu0
  %v1167 = vadd.f32 0.0, %v1166
  %1168 = vdwg.mxu0
  %v1171 = vunpack.c.l.b16 %v731
  %v1172 = vunpack.c.l.b16 %v732
  %v1173 = vpack.c.b16 %v1172, %v1171
  %v1176 = vsel %vm207, %v1000, 0
  %1178 = vmatpush.bf16.msra.mxu0 0
  %1179 = vmatpush.bf16.msra.mxu0 0
  %1180 = vmatpush.bf16.msra.mxu0 0
  %1181 = vmatpush.bf16.msra.mxu0 0
  %1182 = vmatpush.bf16.msra.mxu0 0
  %1183 = vmatpush.bf16.msra.mxu0 0
  %1184 = vmatpush.bf16.msra.mxu0 0
  %1185 = vmatpush.bf16.msra.mxu0 %v1173
  %1186 = vmatmul.bf16.gmra.mxu0 %v1176
  %v1187 = vpop.f32.mrf.mxu0
  %v1188 = vadd.f32 %v1165, %v1187
  %v1189 = vpop.f32.mrf.mxu0
  %v1190 = vadd.f32 %v1167, %v1189
  %1191 = vdwg.mxu0
  %v1193 = vperm.slane %v736, 0
  %v1195 = vadd.f32 %v1188, %v1193
  %v1196 = vadd.f32 %v1190, %v1193
  %v1197 = vadd.f32 %v717, %v1195
  %v1198 = vadd.f32 %v718, %v1196
  %v1199 = vsel %vm101, %v1197, 0.0
  %1200 = vadd.xlane.f32.xlu0 %v1199
  %v1201 = vpop.xlane.xlu0 %1200
  %v1202 = vsel %vm101, %v1198, 0.0
  %1203 = vadd.xlane.f32.xlu0 %v1202
  %v1204 = vpop.xlane.xlu0 %1203
  %v1205 = vmul.f32 %v1201, %v114
  %v1206 = vmul.f32 %v1204, %v114
  %v1207 = vsub.f32 %v1197, %v1205
  %v1208 = vsub.f32 %v1198, %v1206
  %v1209 = vmul.f32 %v1207, %v1207
  %v1210 = vmul.f32 %v1208, %v1208
  %v1211 = vsel %vm101, %v1209, 0.0
  %1212 = vadd.xlane.f32.xlu0 %v1211
  %v1213 = vpop.xlane.xlu0 %1212
  %v1214 = vsel %vm101, %v1210, 0.0
  %1215 = vadd.xlane.f32.xlu0 %v1214
  %v1216 = vpop.xlane.xlu0 %1215
  %v1217 = vmul.f32 %v1213, %v114
  %v1218 = vmul.f32 %v1216, %v114
  %v1219 = vadd.f32 %v1217, 1e-05
  %v1220 = vadd.f32 %v1218, 1e-05
  %v1221 = vrsqrt.pop %v1219
  %v1222 = vmul.f32 %v1221, %v1219
  %v1223 = vmul.f32 %v1222, %v1221
  %v1224 = vmul.f32 0.5, %v1223
  %v1225 = vsub.f32 1.5, %v1224
  %v1226 = vmul.f32 %v1221, %v1225
  %vm1227 = vweird.f32 %v1219
  %vm1228 = vweird.f32 %v1221
  %vm1229 = vmor %vm1227, %vm1228
  %v1230 = vsel %vm1229, %v1221, %v1226
  %v1231 = vrsqrt.pop %v1220
  %v1232 = vmul.f32 %v1231, %v1220
  %v1233 = vmul.f32 %v1232, %v1231
  %v1234 = vmul.f32 0.5, %v1233
  %v1235 = vsub.f32 1.5, %v1234
  %v1236 = vmul.f32 %v1231, %v1235
  %vm1237 = vweird.f32 %v1220
  %vm1238 = vweird.f32 %v1231
  %vm1239 = vmor %vm1237, %vm1238
  %v1240 = vsel %vm1239, %v1231, %v1236
  %v1241 = vmul.f32 %v1207, %v1230
  %v1242 = vmul.f32 %v1208, %v1240
  %v1244 = vperm.slane %v738, 0
  %v1246 = vmul.f32 %v1241, %v1244
  %v1247 = vmul.f32 %v1242, %v1244
  %v1249 = vperm.slane %v740, 0
  %v1251 = vadd.f32 %v1246, %v1249
  %v1252 = vadd.f32 %v1247, %v1249
  %v1253 = vpack.c.bf16 %v1252, %v1251
  %v1255 = vperm.slane %v747, 0
  %v1261 = vunpack.c.l.b16 %v742
  %v1262 = vunpack.c.l.b16 %v743
  %v1263 = vunpack.c.l.b16 %v744
  %v1264 = vunpack.c.l.b16 %v745
  %v1265 = vpack.c.b16 %v1262, %v1261
  %v1266 = vpack.c.b16 %v1264, %v1263
  %v1270 = vsel %vm101, %v1253, 0
  %1272 = vmatpush.bf16.msra.mxu0 0
  %1273 = vmatpush.bf16.msra.mxu0 0
  %1274 = vmatpush.bf16.msra.mxu0 0
  %1275 = vmatpush.bf16.msra.mxu0 0
  %1276 = vmatpush.bf16.msra.mxu0 0
  %1277 = vmatpush.bf16.msra.mxu0 0
  %1278 = vmatpush.bf16.msra.mxu0 %v1266
  %1279 = vmatpush.bf16.msra.mxu0 %v1265
  %1280 = vmatmul.bf16.gmra.mxu0 %v1270
  %v1281 = vpop.f32.mrf.mxu0
  %v1282 = vadd.f32 %v1255, %v1281
  %v1283 = vpop.f32.mrf.mxu0
  %v1284 = vadd.f32 %v1255, %v1283
  %1285 = vdwg.mxu0
  %v1286 = vmul.f32 %v1282, 0.5
  %v1287 = vmul.f32 %v1284, 0.5
  %v1288 = vmul.f32 %v1282, 0.044715
  %v1289 = vmul.f32 %v1284, 0.044715
  %v1290 = vmul.f32 %v1288, %v1282
  %v1291 = vmul.f32 %v1289, %v1284
  %v1292 = vmul.f32 %v1290, %v1282
  %v1293 = vmul.f32 %v1291, %v1284
  %v1294 = vadd.f32 %v1282, %v1292
  %v1295 = vadd.f32 %v1284, %v1293
  %v1296 = vmul.f32 %v1294, 0.7978846
  %v1297 = vmul.f32 %v1295, 0.7978846
  %v1298 = vtanh.pop %v1296
  %v1299 = vtanh.pop %v1297
  %v1300 = vadd.f32 %v1298, 1.0
  %v1301 = vadd.f32 %v1299, 1.0
  %v1302 = vmul.f32 %v1286, %v1300
  %v1303 = vmul.f32 %v1287, %v1301
  %v1304 = vpack.c.bf16 %v1303, %v1302
  %v1321 = vunpack.c.l.b16 %v749
  %v1322 = vunpack.c.l.b16 %v750
  %v1323 = vunpack.c.l.b16 %v751
  %v1324 = vunpack.c.l.b16 %v752
  %v1325 = vunpack.c.l.b16 %v753
  %v1326 = vunpack.c.l.b16 %v754
  %v1327 = vunpack.c.l.b16 %v755
  %v1328 = vunpack.c.l.b16 %v756
  %v1329 = vunpack.c.l.b16 %v757
  %v1330 = vunpack.c.l.b16 %v758
  %v1331 = vunpack.c.l.b16 %v759
  %v1332 = vunpack.c.l.b16 %v760
  %v1333 = vunpack.c.l.b16 %v761
  %v1334 = vunpack.c.l.b16 %v762
  %v1335 = vunpack.c.l.b16 %v763
  %v1336 = vunpack.c.l.b16 %v764
  %v1337 = vpack.c.b16 %v1322, %v1321
  %v1338 = vpack.c.b16 %v1324, %v1323
  %v1339 = vpack.c.b16 %v1326, %v1325
  %v1340 = vpack.c.b16 %v1328, %v1327
  %v1341 = vpack.c.b16 %v1330, %v1329
  %v1342 = vpack.c.b16 %v1332, %v1331
  %v1343 = vpack.c.b16 %v1334, %v1333
  %v1344 = vpack.c.b16 %v1336, %v1335
  %1353 = vmatpush.bf16.msra.mxu0 %v1344
  %1354 = vmatpush.bf16.msra.mxu0 %v1343
  %1355 = vmatpush.bf16.msra.mxu0 %v1342
  %1356 = vmatpush.bf16.msra.mxu0 %v1341
  %1357 = vmatpush.bf16.msra.mxu0 %v1340
  %1358 = vmatpush.bf16.msra.mxu0 %v1339
  %1359 = vmatpush.bf16.msra.mxu0 %v1338
  %1360 = vmatpush.bf16.msra.mxu0 %v1337
  %1361 = vmatmul.bf16.gmra.mxu0 %v1304
  %v1362 = vpop.f32.mrf.mxu0
  %v1363 = vadd.f32 0.0, %v1362
  %v1364 = vpop.f32.mrf.mxu0
  %v1365 = vadd.f32 0.0, %v1364
  %1366 = vdwg.mxu0
  %v1367 = vadd.f32 %v1197, %v1363
  %v1368 = vadd.f32 %v1198, %v1365
  %v1370 = vperm.slane %v766, 0
  %v1372 = vadd.f32 %v1367, %v1370
  %v1373 = vadd.f32 %v1368, %v1370
  %v1374 = vld [vmem:[%s14] sm:$0x1]
  %v1375 = vld [vmem:[%s15] sm:$0x1]
  %v1376 = vsel %vm101, %v1372, 0.0
  %1377 = vadd.xlane.f32.xlu0 %v1376
  %v1378 = vpop.xlane.xlu0 %1377
  %v1379 = vsel %vm101, %v1373, 0.0
  %1380 = vadd.xlane.f32.xlu0 %v1379
  %v1381 = vpop.xlane.xlu0 %1380
  %v1382 = vmul.f32 %v1378, %v114
  %v1383 = vmul.f32 %v1381, %v114
  %v1384 = vsub.f32 %v1372, %v1382
  %v1385 = vsub.f32 %v1373, %v1383
  %v1386 = vmul.f32 %v1384, %v1384
  %v1387 = vmul.f32 %v1385, %v1385
  %v1388 = vsel %vm101, %v1386, 0.0
  %1389 = vadd.xlane.f32.xlu0 %v1388
  %v1390 = vpop.xlane.xlu0 %1389
  %v1391 = vsel %vm101, %v1387, 0.0
  %1392 = vadd.xlane.f32.xlu0 %v1391
  %v1393 = vpop.xlane.xlu0 %1392
  %v1394 = vmul.f32 %v1390, %v114
  %v1395 = vmul.f32 %v1393, %v114
  %v1396 = vadd.f32 %v1394, 1e-05
  %v1397 = vadd.f32 %v1395, 1e-05
  %v1398 = vrsqrt.pop %v1396
  %v1399 = vmul.f32 %v1398, %v1396
  %v1400 = vmul.f32 %v1399, %v1398
  %v1401 = vmul.f32 0.5, %v1400
  %v1402 = vsub.f32 1.5, %v1401
  %v1403 = vmul.f32 %v1398, %v1402
  %vm1404 = vweird.f32 %v1396
  %vm1405 = vweird.f32 %v1398
  %vm1406 = vmor %vm1404, %vm1405
  %v1407 = vsel %vm1406, %v1398, %v1403
  %v1408 = vrsqrt.pop %v1397
  %v1409 = vmul.f32 %v1408, %v1397
  %v1410 = vmul.f32 %v1409, %v1408
  %v1411 = vmul.f32 0.5, %v1410
  %v1412 = vsub.f32 1.5, %v1411
  %v1413 = vmul.f32 %v1408, %v1412
  %vm1414 = vweird.f32 %v1397
  %vm1415 = vweird.f32 %v1408
  %vm1416 = vmor %vm1414, %vm1415
  %v1417 = vsel %vm1416, %v1408, %v1413
  %v1418 = vmul.f32 %v1384, %v1407
  %v1419 = vmul.f32 %v1385, %v1417
  %v1421 = vperm.slane %v1374, 0
  %v1423 = vmul.f32 %v1418, %v1421
  %v1424 = vmul.f32 %v1419, %v1421
  %v1426 = vperm.slane %v1375, 0
  %v1428 = vadd.f32 %v1423, %v1426
  %v1429 = vadd.f32 %v1424, %v1426
  %v1430 = vld [vmem:[%s1] sm:$0x3]
  %v1432 = vsel %vm207, %v1430, 0
  %1434 = vmatpush.msra.mxu0 0.0
  %1435 = vmatpush.msra.mxu0 0.0
  %1436 = vmatpush.msra.mxu0 0.0
  %1437 = vmatpush.msra.mxu0 0.0
  %1438 = vmatpush.msra.mxu0 0.0
  %1439 = vmatpush.msra.mxu0 0.0
  %1440 = vmatpush.msra.mxu0 0.0
  %1441 = vmatpush.msra.mxu0 0.0
  %1442 = vmatpush.msra.mxu0 0.0
  %1443 = vmatpush.msra.mxu0 0.0
  %1444 = vmatpush.msra.mxu0 0.0
  %1445 = vmatpush.msra.mxu0 0.0
  %1446 = vmatpush.msra.mxu0 0.0
  %1447 = vmatpush.msra.mxu0 0.0
  %1448 = vmatpush.msra.mxu0 %v1429
  %1449 = vmatpush.msra.mxu0 %v1428
  %1450 = vmatmul.f32.gmra.mxu0 %v1432
  %v1451 = vpop.f32.mrf.mxu0
  %v1452 = vadd.f32 0.0, %v1451
  %1453 = vdwg.mxu0
  %v1454 = vpack.c.bf16 %v1452, %v1452
  %v1455 = vld [vmem:[%s16] sm:$0xf]
  %v1456 = vld [vmem:[%s16 + $0x4] sm:$0xf]
  %v1457 = vld [vmem:[%s16 + $0x8] sm:$0xf]
  %v1458 = vld [vmem:[%s16 + $0xc] sm:$0xf]
  %v1463 = vunpack.c.l.b16 %v1455
  %v1464 = vunpack.c.l.b16 %v1456
  %v1465 = vunpack.c.l.b16 %v1457
  %v1466 = vunpack.c.l.b16 %v1458
  %v1467 = vpack.c.b16 %v1464, %v1463
  %v1468 = vpack.c.b16 %v1466, %v1465
  %v1472 = vsel %vm101, %v1454, 0
  %1474 = vmatpush.bf16.msra.mxu0 0
  %1475 = vmatpush.bf16.msra.mxu0 0
  %1476 = vmatpush.bf16.msra.mxu0 0
  %1477 = vmatpush.bf16.msra.mxu0 0
  %1478 = vmatpush.bf16.msra.mxu0 0
  %1479 = vmatpush.bf16.msra.mxu0 0
  %1480 = vmatpush.bf16.msra.mxu0 %v1468
  %1481 = vmatpush.bf16.msra.mxu0 %v1467
  %1482 = vmatmul.bf16.gmra.mxu0 %v1472
  %v1483 = vpop.f32.mrf.mxu0
  %v1484 = vadd.f32 0.0, %v1483
  %v1485 = vpop.f32.mrf.mxu0
  %1486 = vdwg.mxu0
  %v1487 = vmul.f32 %v1484, %v1484
  %vm1488 = vcmask 254976
  %v1489 = vsel %vm1488, %v1487, 0.0
  %1490 = vadd.xlane.f32.xlu0 %v1489
  %v1491 = vpop.xlane.xlu0 %1490
  %v1492 = vmax.f32 %v1491, 1e-24
  %v1493 = vrsqrt.pop %v1492
  %v1494 = vmul.f32 %v1493, %v1492
  %v1495 = vmul.f32 %v1494, %v1493
  %v1496 = vmul.f32 0.5, %v1495
  %v1497 = vsub.f32 1.5, %v1496
  %v1498 = vmul.f32 %v1493, %v1497
  %vm1499 = vweird.f32 %v1492
  %vm1500 = vweird.f32 %v1493
  %vm1501 = vmor %vm1499, %vm1500
  %v1502 = vsel %vm1501, %v1493, %v1498
  %v1503 = vmul.f32 %v1484, %v1502
  %1504 = vst.msk [vmem:[%s17] sm:$0x3] %vm1488, %v1503
  // Predicated region
  $region70: #{ours_clip_forward.2} parent=0 // pred_check
    _
  $region71: #{ours_clip_forward.2} parent=0 // pred_check_branch
    %1506 = sbr.rel (0) target = $region73
  $region72: #{ours_clip_forward.2} parent=0 // pred_region
    _
  $region73: #{ours_clip_forward.2} parent=0 // pred_fallthru
    _
  // Predicated region
  $region74: #{ours_clip_forward.2} parent=0 // pred_check
    _
  $region75: #{ours_clip_forward.2} parent=0 // pred_check_branch
    %1508 = sbr.rel (0) target = $region77
  $region76: #{ours_clip_forward.2} parent=0 // pred_region
    _
  $region77: #{ours_clip_forward.2} parent=0 // pred_fallthru
    _

// kernel: ours_clip_forward.3
$region0: #{ours_clip_forward.3}
  #allocation0 [shape = 'u32[]', space=smem, size = 0x4, offset = 0x4, fixed_abs, tag = 'smem constant byte address 0x4 - core index']
  #allocation1 [shape = 'u32[72,128]{1,0:T(1,128)}', space=vmem, size = 0x9000, scoped, tag = 'internal scratch']
  %s0 = inlined_call_operand.vmem [shape: f32[16,192], index: 0, kind: input, shape index: {}]
  %s1 = inlined_call_operand.vmem [shape: f32[2,32], index: 1, kind: input, shape index: {}]
  %s2 = inlined_call_operand.vmem [shape: f32[16,32], index: 2, kind: input, shape index: {}]
  %s3 = inlined_call_operand.vmem [shape: bf16[192,32], index: 3, kind: input, shape index: {}]
  %s4 = inlined_call_operand.vmem [shape: f32[2,1,32], index: 4, kind: input, shape index: {}]
  %s5 = inlined_call_operand.vmem [shape: f32[2,1,32], index: 5, kind: input, shape index: {}]
  %s6 = inlined_call_operand.vmem [shape: bf16[2,32,96], index: 6, kind: input, shape index: {}]
  %s7 = inlined_call_operand.vmem [shape: f32[2,1,96], index: 7, kind: input, shape index: {}]
  %s8 = inlined_call_operand.vmem [shape: bf16[2,32,32], index: 8, kind: input, shape index: {}]
  %s9 = inlined_call_operand.vmem [shape: f32[2,1,32], index: 9, kind: input, shape index: {}]
  %s10 = inlined_call_operand.vmem [shape: f32[2,1,32], index: 10, kind: input, shape index: {}]
  %s11 = inlined_call_operand.vmem [shape: f32[2,1,32], index: 11, kind: input, shape index: {}]
  %s12 = inlined_call_operand.vmem [shape: bf16[2,32,128], index: 12, kind: input, shape index: {}]
  %s13 = inlined_call_operand.vmem [shape: f32[2,1,128], index: 13, kind: input, shape index: {}]
  %s14 = inlined_call_operand.vmem [shape: bf16[2,128,32], index: 14, kind: input, shape index: {}]
  %s15 = inlined_call_operand.vmem [shape: f32[2,1,32], index: 15, kind: input, shape index: {}]
  %s16 = inlined_call_operand.vmem [shape: f32[1,32], index: 16, kind: input, shape index: {}]
  %s17 = inlined_call_operand.vmem [shape: f32[1,32], index: 17, kind: input, shape index: {}]
  %s18 = inlined_call_operand.hbm [shape: f32[2,32], index: 18, kind: output, shape index: {}]
  %s19 = sld [smem:[#allocation0]]
  $region82: #{ours_clip_forward.3} parent=0
    _
  %s21 = ssub.s32 1, %s19
  %s22 = scalar_select 0, %s21, %s19
  $region1: #{ours_clip_forward.3} parent=0
    #allocation2 [shape = 'u8[1024]{0}', space=vmem, size = 0x400, scoped, tag = 'output window, operand 0, single buffered']
    #allocation3 [shape = 's32[1]{0}', space=sflag, size = 0x4, scoped, tag = 'scoped memory for ours_clip_forward.3']
    %23 = vsyncpa [#allocation3], 0
    // Predicated region
    $region2: #{ours_clip_forward.3} parent=1 // pred_check
      _
    $region3: #{ours_clip_forward.3} parent=1 // pred_check_branch
      %25 = sbr.rel (0) target = $region5
    $region4: #{ours_clip_forward.3} parent=1 // pred_region
      _
    $region5: #{ours_clip_forward.3} parent=1 // pred_fallthru
      _
    // Predicated region
    $region6: #{ours_clip_forward.3} parent=1 // pred_check
      _
    $region7: #{ours_clip_forward.3} parent=1 // pred_check_branch
      %27 = sbr.rel (0) target = $region9
    $region8: #{ours_clip_forward.3} parent=1 // pred_region
      _
    $region9: #{ours_clip_forward.3} parent=1 // pred_fallthru
      _
    // Predicated region
    $region10: #{ours_clip_forward.3} parent=1 // pred_check
      _
    $region11: #{ours_clip_forward.3} parent=1 // pred_check_branch
      %29 = sbr.rel (0) target = $region13
    $region12: #{ours_clip_forward.3} parent=1 // pred_region
      _
    $region13: #{ours_clip_forward.3} parent=1 // pred_fallthru
      _
    // Predicated region
    $region14: #{ours_clip_forward.3} parent=1 // pred_check
      _
    $region15: #{ours_clip_forward.3} parent=1 // pred_check_branch
      %31 = sbr.rel (0) target = $region17
    $region16: #{ours_clip_forward.3} parent=1 // pred_region
      _
    $region17: #{ours_clip_forward.3} parent=1 // pred_fallthru
      _
    // Predicated region
    $region18: #{ours_clip_forward.3} parent=1 // pred_check
      _
    $region19: #{ours_clip_forward.3} parent=1 // pred_check_branch
      %33 = sbr.rel (0) target = $region21
    $region20: #{ours_clip_forward.3} parent=1 // pred_region
      _
    $region21: #{ours_clip_forward.3} parent=1 // pred_fallthru
      _
    // Predicated region
    $region22: #{ours_clip_forward.3} parent=1 // pred_check
      _
    $region23: #{ours_clip_forward.3} parent=1 // pred_check_branch
      %35 = sbr.rel (0) target = $region25
    $region24: #{ours_clip_forward.3} parent=1 // pred_region
      _
    $region25: #{ours_clip_forward.3} parent=1 // pred_fallthru
      _
    // Predicated region
    $region26: #{ours_clip_forward.3} parent=1 // pred_check
      _
    $region27: #{ours_clip_forward.3} parent=1 // pred_check_branch
      %37 = sbr.rel (0) target = $region29
    $region28: #{ours_clip_forward.3} parent=1 // pred_region
      _
    $region29: #{ours_clip_forward.3} parent=1 // pred_fallthru
      _
    // Predicated region
    $region30: #{ours_clip_forward.3} parent=1 // pred_check
      _
    $region31: #{ours_clip_forward.3} parent=1 // pred_check_branch
      %39 = sbr.rel (0) target = $region33
    $region32: #{ours_clip_forward.3} parent=1 // pred_region
      _
    $region33: #{ours_clip_forward.3} parent=1 // pred_fallthru
      _
    // Predicated region
    $region34: #{ours_clip_forward.3} parent=1 // pred_check
      _
    $region35: #{ours_clip_forward.3} parent=1 // pred_check_branch
      %41 = sbr.rel (0) target = $region37
    $region36: #{ours_clip_forward.3} parent=1 // pred_region
      _
    $region37: #{ours_clip_forward.3} parent=1 // pred_fallthru
      _
    // Predicated region
    $region38: #{ours_clip_forward.3} parent=1 // pred_check
      _
    $region39: #{ours_clip_forward.3} parent=1 // pred_check_branch
      %43 = sbr.rel (0) target = $region41
    $region40: #{ours_clip_forward.3} parent=1 // pred_region
      _
    $region41: #{ours_clip_forward.3} parent=1 // pred_fallthru
      _
    // Predicated region
    $region42: #{ours_clip_forward.3} parent=1 // pred_check
      _
    $region43: #{ours_clip_forward.3} parent=1 // pred_check_branch
      %45 = sbr.rel (0) target = $region45
    $region44: #{ours_clip_forward.3} parent=1 // pred_region
      _
    $region45: #{ours_clip_forward.3} parent=1 // pred_fallthru
      _
    // Predicated region
    $region46: #{ours_clip_forward.3} parent=1 // pred_check
      _
    $region47: #{ours_clip_forward.3} parent=1 // pred_check_branch
      %47 = sbr.rel (0) target = $region49
    $region48: #{ours_clip_forward.3} parent=1 // pred_region
      _
    $region49: #{ours_clip_forward.3} parent=1 // pred_fallthru
      _
    // Predicated region
    $region50: #{ours_clip_forward.3} parent=1 // pred_check
      _
    $region51: #{ours_clip_forward.3} parent=1 // pred_check_branch
      %49 = sbr.rel (0) target = $region53
    $region52: #{ours_clip_forward.3} parent=1 // pred_region
      _
    $region53: #{ours_clip_forward.3} parent=1 // pred_fallthru
      _
    // Predicated region
    $region54: #{ours_clip_forward.3} parent=1 // pred_check
      _
    $region55: #{ours_clip_forward.3} parent=1 // pred_check_branch
      %51 = sbr.rel (0) target = $region57
    $region56: #{ours_clip_forward.3} parent=1 // pred_region
      _
    $region57: #{ours_clip_forward.3} parent=1 // pred_fallthru
      _
    // Predicated region
    $region58: #{ours_clip_forward.3} parent=1 // pred_check
      _
    $region59: #{ours_clip_forward.3} parent=1 // pred_check_branch
      %53 = sbr.rel (0) target = $region61
    $region60: #{ours_clip_forward.3} parent=1 // pred_region
      _
    $region61: #{ours_clip_forward.3} parent=1 // pred_fallthru
      _
    // Predicated region
    $region62: #{ours_clip_forward.3} parent=1 // pred_check
      _
    $region63: #{ours_clip_forward.3} parent=1 // pred_check_branch
      %55 = sbr.rel (0) target = $region65
    $region64: #{ours_clip_forward.3} parent=1 // pred_region
      _
    $region65: #{ours_clip_forward.3} parent=1 // pred_fallthru
      _
    // Predicated region
    $region66: #{ours_clip_forward.3} parent=1 // pred_check
      _
    $region67: #{ours_clip_forward.3} parent=1 // pred_check_branch
      %57 = sbr.rel (0) target = $region69
    $region68: #{ours_clip_forward.3} parent=1 // pred_region
      _
    $region69: #{ours_clip_forward.3} parent=1 // pred_fallthru
      _
    // Predicated region
    $region70: #{ours_clip_forward.3} parent=1 // pred_check
      _
    $region71: #{ours_clip_forward.3} parent=1 // pred_check_branch
      %59 = sbr.rel (0) target = $region73
    $region72: #{ours_clip_forward.3} parent=1 // pred_region
      _
    $region73: #{ours_clip_forward.3} parent=1 // pred_fallthru
      _
    %v61 = vld [vmem:[%s0] sm:$0xff]
    %v62 = vld [vmem:[%s0 + $0x8] sm:$0xff]
    %v63 = vld [vmem:[%s0 + $0x10] sm:$0xff]
    %v64 = vld [vmem:[%s0 + $0x18] sm:$0xff]
    %v65 = vpack.c.bf16 %v63, %v61
    %v66 = vpack.c.bf16 %v64, %v62
    %v67 = vld [vmem:[%s3] sm:$0xf]
    %v68 = vld [vmem:[%s3 + $0x4] sm:$0xf]
    %v69 = vld [vmem:[%s3 + $0x8] sm:$0xf]
    %v70 = vld [vmem:[%s3 + $0xc] sm:$0xf]
    %v71 = vld [vmem:[%s3 + $0x10] sm:$0xf]
    %v72 = vld [vmem:[%s3 + $0x14] sm:$0xf]
    %v73 = vld [vmem:[%s3 + $0x18] sm:$0xf]
    %v74 = vld [vmem:[%s3 + $0x1c] sm:$0xf]
    %v75 = vld [vmem:[%s3 + $0x20] sm:$0xf]
    %v76 = vld [vmem:[%s3 + $0x24] sm:$0xf]
    %v77 = vld [vmem:[%s3 + $0x28] sm:$0xf]
    %v78 = vld [vmem:[%s3 + $0x2c] sm:$0xf]
    %v79 = vld [vmem:[%s3 + $0x30] sm:$0xf]
    %v80 = vld [vmem:[%s3 + $0x34] sm:$0xf]
    %v81 = vld [vmem:[%s3 + $0x38] sm:$0xf]
    %v82 = vld [vmem:[%s3 + $0x3c] sm:$0xf]
    %v83 = vld [vmem:[%s3 + $0x40] sm:$0xf]
    %v84 = vld [vmem:[%s3 + $0x44] sm:$0xf]
    %v85 = vld [vmem:[%s3 + $0x48] sm:$0xf]
    %v86 = vld [vmem:[%s3 + $0x4c] sm:$0xf]
    %v87 = vld [vmem:[%s3 + $0x50] sm:$0xf]
    %v88 = vld [vmem:[%s3 + $0x54] sm:$0xf]
    %v89 = vld [vmem:[%s3 + $0x58] sm:$0xf]
    %v90 = vld [vmem:[%s3 + $0x5c] sm:$0xf]
    %v91 = vld [vmem:[%s2] sm:$0xff]
    %v92 = vld [vmem:[%s2 + $0x8] sm:$0xff]
    %v117 = vunpack.c.l.b16 %v67
    %v118 = vunpack.c.l.b16 %v68
    %v119 = vunpack.c.l.b16 %v69
    %v120 = vunpack.c.l.b16 %v70
    %v121 = vunpack.c.l.b16 %v71
    %v122 = vunpack.c.l.b16 %v72
    %v123 = vunpack.c.l.b16 %v73
    %v124 = vunpack.c.l.b16 %v74
    %v125 = vunpack.c.l.b16 %v75
    %v126 = vunpack.c.l.b16 %v76
    %v127 = vunpack.c.l.b16 %v77
    %v128 = vunpack.c.l.b16 %v78
    %v129 = vunpack.c.l.b16 %v79
    %v130 = vunpack.c.l.b16 %v80
    %v131 = vunpack.c.l.b16 %v81
    %v132 = vunpack.c.l.b16 %v82
    %v133 = vunpack.c.l.b16 %v83
    %v134 = vunpack.c.l.b16 %v84
    %v135 = vunpack.c.l.b16 %v85
    %v136 = vunpack.c.l.b16 %v86
    %v137 = vunpack.c.l.b16 %v87
    %v138 = vunpack.c.l.b16 %v88
    %v139 = vunpack.c.l.b16 %v89
    %v140 = vunpack.c.l.b16 %v90
    %v141 = vpack.c.b16 %v118, %v117
    %v142 = vpack.c.b16 %v120, %v119
    %v143 = vpack.c.b16 %v122, %v121
    %v144 = vpack.c.b16 %v124, %v123
    %v145 = vpack.c.b16 %v126, %v125
    %v146 = vpack.c.b16 %v128, %v127
    %v147 = vpack.c.b16 %v130, %v129
    %v148 = vpack.c.b16 %v132, %v131
    %v149 = vpack.c.b16 %v134, %v133
    %v150 = vpack.c.b16 %v136, %v135
    %v151 = vpack.c.b16 %v138, %v137
    %v152 = vpack.c.b16 %v140, %v139
    %vm165 = vcmask 523264
    %v167 = vsel %vm165, %v66, 0
    %169 = vmatpush.bf16.msra.mxu0 %v148
    %170 = vmatpush.bf16.msra.mxu0 %v147
    %171 = vmatpush.bf16.msra.mxu0 %v146
    %172 = vmatpush.bf16.msra.mxu0 %v145
    %173 = vmatpush.bf16.msra.mxu0 %v144
    %174 = vmatpush.bf16.msra.mxu0 %v143
    %175 = vmatpush.bf16.msra.mxu0 %v142
    %176 = vmatpush.bf16.msra.mxu0 %v141
    %177 = vmatmul.bf16.gmra.mxu0 %v65
    %v178 = vpop.f32.mrf.mxu0
    %v179 = vadd.f32 %v91, %v178
    %v180 = vpop.f32.mrf.mxu0
    %v181 = vadd.f32 %v92, %v180
    %182 = vdwg.mxu0
    %183 = vmatpush.bf16.msra.mxu0 0
    %184 = vmatpush.bf16.msra.mxu0 0
    %185 = vmatpush.bf16.msra.mxu0 0
    %186 = vmatpush.bf16.msra.mxu0 0
    %187 = vmatpush.bf16.msra.mxu0 %v152
    %188 = vmatpush.bf16.msra.mxu0 %v151
    %189 = vmatpush.bf16.msra.mxu0 %v150
    %190 = vmatpush.bf16.msra.mxu0 %v149
    %191 = vmatmul.bf16.gmra.mxu0 %v167
    %v192 = vpop.f32.mrf.mxu0
    %v193 = vadd.f32 %v179, %v192
    %v194 = vpop.f32.mrf.mxu0
    %v195 = vadd.f32 %v181, %v194
    %196 = vdwg.mxu0
    %v197 = vlaneseq
    %v198 = vand.u32 %v197, 127
    %vm199 = vcmp.lt.s32.totalorder %v198, 5
    %v200 = vsel %vm199, 0.0, -1e+30
    %v201 = vld [vmem:[%s4] sm:$0x1]
    %v202 = vld [vmem:[%s5] sm:$0x1]
    %v203 = vld [vmem:[%s6] sm:$0xf]
    %v204 = vld [vmem:[%s6 + $0x4] sm:$0xf]
    %v205 = vld [vmem:[%s6 + $0x8] sm:$0xf]
    %v206 = vld [vmem:[%s6 + $0xc] sm:$0xf]
    %v207 = vld [vmem:[%s7] sm:$0x1]
    %v208 = vld [vmem:[%s8] sm:$0xf]
    %v209 = vld [vmem:[%s8 + $0x4] sm:$0xf]
    %v210 = vld [vmem:[%s8 + $0x8] sm:$0xf]
    %v211 = vld [vmem:[%s8 + $0xc] sm:$0xf]
    %v212 = vld [vmem:[%s9] sm:$0x1]
    %v213 = vld [vmem:[%s10] sm:$0x1]
    %v214 = vld [vmem:[%s11] sm:$0x1]
    %v215 = vld [vmem:[%s12] sm:$0xf]
    %v216 = vld [vmem:[%s12 + $0x4] sm:$0xf]
    %v217 = vld [vmem:[%s12 + $0x8] sm:$0xf]
    %v218 = vld [vmem:[%s12 + $0xc] sm:$0xf]
    %v219 = vld [vmem:[%s13] sm:$0x1]
    %v220 = vld [vmem:[%s14] sm:$0xf]
    %v221 = vld [vmem:[%s14 + $0x4] sm:$0xf]
    %v222 = vld [vmem:[%s14 + $0x8] sm:$0xf]
    %v223 = vld [vmem:[%s14 + $0xc] sm:$0xf]
    %v224 = vld [vmem:[%s14 + $0x10] sm:$0xf]
    %v225 = vld [vmem:[%s14 + $0x14] sm:$0xf]
    %v226 = vld [vmem:[%s14 + $0x18] sm:$0xf]
    %v227 = vld [vmem:[%s14 + $0x1c] sm:$0xf]
    %v228 = vld [vmem:[%s14 + $0x20] sm:$0xf]
    %v229 = vld [vmem:[%s14 + $0x24] sm:$0xf]
    %v230 = vld [vmem:[%s14 + $0x28] sm:$0xf]
    %v231 = vld [vmem:[%s14 + $0x2c] sm:$0xf]
    %v232 = vld [vmem:[%s14 + $0x30] sm:$0xf]
    %v233 = vld [vmem:[%s14 + $0x34] sm:$0xf]
    %v234 = vld [vmem:[%s14 + $0x38] sm:$0xf]
    %v235 = vld [vmem:[%s14 + $0x3c] sm:$0xf]
    %v236 = vld [vmem:[%s15] sm:$0x1]
    %vm237 = vcmask 261120
    %v238 = vsel %vm237, %v193, 0.0
    %239 = vadd.xlane.f32.xlu0 %v238
    %v240 = vpop.xlane.xlu0 %239
    %v241 = vsel %vm237, %v195, 0.0
    %242 = vadd.xlane.f32.xlu0 %v241
    %v243 = vpop.xlane.xlu0 %242
    %v244 = vrcp.pop 32.0
    %v245 = vmul.f32 32.0, %v244
    %v246 = vsub.f32 1.0, %v245
    %v247 = vmul.f32 %v244, %v246
    %v248 = vadd.f32 %v244, %v247
    %vm249 = vweird.f32 %v244
    %v250 = vsel %vm249, %v244, %v248
    %v251 = vmul.f32 %v240, %v250
    %v252 = vmul.f32 %v243, %v250
    %v253 = vsub.f32 %v193, %v251
    %v254 = vsub.f32 %v195, %v252
    %v255 = vmul.f32 %v253, %v253
    %v256 = vmul.f32 %v254, %v254
    %v257 = vsel %vm237, %v255, 0.0
    %258 = vadd.xlane.f32.xlu0 %v257
    %v259 = vpop.xlane.xlu0 %258
    %v260 = vsel %vm237, %v256, 0.0
    %261 = vadd.xlane.f32.xlu0 %v260
    %v262 = vpop.xlane.xlu0 %261
    %v263 = vmul.f32 %v259, %v250
    %v264 = vmul.f32 %v262, %v250
    %v265 = vadd.f32 %v263, 1e-05
    %v266 = vadd.f32 %v264, 1e-05
    %v267 = vrsqrt.pop %v265
    %v268 = vmul.f32 %v267, %v265
    %v269 = vmul.f32 %v268, %v267
    %v270 = vmul.f32 0.5, %v269
    %v271 = vsub.f32 1.5, %v270
    %v272 = vmul.f32 %v267, %v271
    %vm273 = vweird.f32 %v265
    %vm274 = vweird.f32 %v267
    %vm275 = vmor %vm273, %vm274
    %v276 = vsel %vm275, %v267, %v272
    %v277 = vrsqrt.pop %v266
    %v278 = vmul.f32 %v277, %v266
    %v279 = vmul.f32 %v278, %v277
    %v280 = vmul.f32 0.5, %v279
    %v281 = vsub.f32 1.5, %v280
    %v282 = vmul.f32 %v277, %v281
    %vm283 = vweird.f32 %v266
    %vm284 = vweird.f32 %v277
    %vm285 = vmor %vm283, %vm284
    %v286 = vsel %vm285, %v277, %v282
    %v287 = vmul.f32 %v253, %v276
    %v288 = vmul.f32 %v254, %v286
    %v290 = vperm.slane %v201, 0
    %v292 = vmul.f32 %v287, %v290
    %v293 = vmul.f32 %v288, %v290
    %v295 = vperm.slane %v202, 0
    %v297 = vadd.f32 %v292, %v295
    %v298 = vadd.f32 %v293, %v295
    %v299 = vpack.c.bf16 %v298, %v297
    %v301 = vperm.slane %v207, 0
    %v307 = vunpack.c.l.b16 %v203
    %v308 = vunpack.c.l.b16 %v204
    %v309 = vunpack.c.l.b16 %v205
    %v310 = vunpack.c.l.b16 %v206
    %v311 = vpack.c.b16 %v308, %v307
    %v312 = vpack.c.b16 %v310, %v309
    %v316 = vsel %vm237, %v299, 0
    %318 = vmatpush.bf16.msra.mxu0 0
    %319 = vmatpush.bf16.msra.mxu0 0
    %320 = vmatpush.bf16.msra.mxu0 0
    %321 = vmatpush.bf16.msra.mxu0 0
    %322 = vmatpush.bf16.msra.mxu0 0
    %323 = vmatpush.bf16.msra.mxu0 0
    %324 = vmatpush.bf16.msra.mxu0 %v312
    %325 = vmatpush.bf16.msra.mxu0 %v311
    %326 = vmatmul.bf16.gmra.mxu0 %v316
    %v327 = vpop.f32.mrf.mxu0
    %v328 = vadd.f32 %v301, %v327
    %v329 = vpop.f32.mrf.mxu0
    %v330 = vadd.f32 %v301, %v329
    %331 = vdwg.mxu0
    %v332 = vmul.f32 %v328, 0.25
    %v333 = vmul.f32 %v330, 0.25
    %v334 = vpack.c.bf16 %v332, %v332
    %v335 = vpack.c.bf16 %v333, %v333
    %v336 = vpack.c.bf16 %v328, %v328
    %v337 = vpack.c.bf16 %v330, %v330
    %v339 = vunpack.c.l.b16 %v336
    %v340 = vpack.c.b16 %v339, %v339
    %341 = vrot.lane.b32.xlu0 %v340, 96
    %v342 = vpop.permute.xlu0 %341
    %vm343 = vcmask 130048
    %v345 = vsel %vm343, %v334, 0
    %v348 = vsel %vm343, %v342, 0
    %350 = vmatpush.bf16.xpose.msra.mxu0 0
    %351 = vmatpush.bf16.xpose.msra.mxu0 0
    %352 = vmatpush.bf16.xpose.msra.mxu0 0
    %353 = vmatpush.bf16.xpose.msra.mxu0 0
    %354 = vmatpush.bf16.xpose.msra.mxu0 0
    %355 = vmatpush.bf16.xpose.msra.mxu0 0
    %356 = vmatpush.bf16.xpose.msra.mxu0 0
    %357 = vmatpush.bf16.xpose.msra.mxu0 %v348
    %358 = vmatmul.bf16.gmra.mxu0 %v345
    %v359 = vpop.f32.mrf.mxu0
    %v360 = vadd.f32 %v200, %v359
    %v361 = vpop.f32.mrf.mxu0
    %362 = vdwg.mxu0
    %v364 = vunpack.c.l.b16 %v337
    %v365 = vpack.c.b16 %v364, %v364
    %366 = vrot.lane.b32.xlu0 %v365, 96
    %v367 = vpop.permute.xlu0 %366
    %v369 = vsel %vm343, %v335, 0
    %v372 = vsel %vm343, %v367, 0
    %374 = vmatpush.bf16.xpose.msra.mxu0 0
    %375 = vmatpush.bf16.xpose.msra.mxu0 0
    %376 = vmatpush.bf16.xpose.msra.mxu0 0
    %377 = vmatpush.bf16.xpose.msra.mxu0 0
    %378 = vmatpush.bf16.xpose.msra.mxu0 0
    %379 = vmatpush.bf16.xpose.msra.mxu0 0
    %380 = vmatpush.bf16.xpose.msra.mxu0 0
    %381 = vmatpush.bf16.xpose.msra.mxu0 %v372
    %382 = vmatmul.bf16.gmra.mxu0 %v369
    %v383 = vpop.f32.mrf.mxu0
    %v384 = vadd.f32 %v200, %v383
    %v385 = vpop.f32.mrf.mxu0
    %386 = vdwg.mxu0
    %vm387 = vcmask 64512
    %v388 = vsel %vm387, %v360, -inf
    %389 = vmax.xlane.f32.xlu0 %v388
    %v390 = vpop.xlane.xlu0 %389
    %v391 = vsel %vm387, %v384, -inf
    %392 = vmax.xlane.f32.xlu0 %v391
    %v393 = vpop.xlane.xlu0 %392
    %v394 = vsub.f32 %v360, %v390
    %v395 = vsub.f32 %v384, %v393
    %v396 = vmul.f32 %v394, 1.442695
    %v397 = vpow.pop %v396
    %v398 = vmul.f32 %v395, 1.442695
    %v399 = vpow.pop %v398
    %v400 = vsel %vm387, %v397, 0.0
    %401 = vadd.xlane.f32.xlu0 %v400
    %v402 = vpop.xlane.xlu0 %401
    %v403 = vsel %vm387, %v399, 0.0
    %404 = vadd.xlane.f32.xlu0 %v403
    %v405 = vpop.xlane.xlu0 %404
    %v406 = vrcp.pop %v402
    %v407 = vmul.f32 %v402, %v406
    %v408 = vsub.f32 1.0, %v407
    %v409 = vmul.f32 %v406, %v408
    %v410 = vadd.f32 %v406, %v409
    %vm411 = vweird.f32 %v402
    %vm412 = vweird.f32 %v406
    %vm413 = vmor %vm411, %vm412
    %v414 = vsel %vm413, %v406, %v410
    %v415 = vand.u32 2147483647, %v402
    %vm416 = vcmp.eq.f32.partialorder %v415, 8.507059e+37
    %v417 = vand.u32 %v402, 2147483648
    %v418 = vor.u32 1.1754944e-38, %v417
    %v419 = vsel %vm416, %v418, %v414
    %v420 = vmul.f32 %v397, %v419
    %v421 = vrcp.pop %v405
    %v422 = vmul.f32 %v405, %v421
    %v423 = vsub.f32 1.0, %v422
    %v424 = vmul.f32 %v421, %v423
    %v425 = vadd.f32 %v421, %v424
    %vm426 = vweird.f32 %v405
    %vm427 = vweird.f32 %v421
    %vm428 = vmor %vm426, %vm427
    %v429 = vsel %vm428, %v421, %v425
    %v430 = vand.u32 2147483647, %v405
    %vm431 = vcmp.eq.f32.partialorder %v430, 8.507059e+37
    %v432 = vand.u32 %v405, 2147483648
    %v433 = vor.u32 1.1754944e-38, %v432
    %v434 = vsel %vm431, %v433, %v429
    %v435 = vmul.f32 %v399, %v434
    %v436 = vpack.c.bf16 %v420, %v420
    %v437 = vpack.c.bf16 %v435, %v435
    %438 = vrot.lane.b32.xlu0 %v340, 64
    %v439 = vpop.permute.xlu0 %438
    %v441 = vsel %vm387, %v436, 0
    %vm443 = vcmask 1043456
    %v445 = vsel %vm443, %v439, 0
    %447 = vmatpush.bf16.msra.mxu0 0
    %448 = vmatpush.bf16.msra.mxu0 0
    %449 = vmatpush.bf16.msra.mxu0 0
    %450 = vmatpush.bf16.msra.mxu0 0
    %451 = vmatpush.bf16.msra.mxu0 0
    %452 = vmatpush.bf16.msra.mxu0 0
    %453 = vmatpush.bf16.msra.mxu0 0
    %454 = vmatpush.bf16.msra.mxu0 %v445
    %455 = vmatmul.bf16.gmra.mxu0 %v441
    %v456 = vpop.f32.mrf.mxu0
    %v457 = vadd.f32 0.0, %v456
    %v458 = vpop.f32.mrf.mxu0
    %459 = vdwg.mxu0
    %460 = vrot.lane.b32.xlu0 %v365, 64
    %v461 = vpop.permute.xlu0 %460
    %v463 = vsel %vm387, %v437, 0
    %v466 = vsel %vm443, %v461, 0
    %468 = vmatpush.bf16.msra.mxu0 0
    %469 = vmatpush.bf16.msra.mxu0 0
    %470 = vmatpush.bf16.msra.mxu0 0
    %471 = vmatpush.bf16.msra.mxu0 0
    %472 = vmatpush.bf16.msra.mxu0 0
    %473 = vmatpush.bf16.msra.mxu0 0
    %474 = vmatpush.bf16.msra.mxu0 0
    %475 = vmatpush.bf16.msra.mxu0 %v466
    %476 = vmatmul.bf16.gmra.mxu0 %v463
    %v477 = vpop.f32.mrf.mxu0
    %v478 = vadd.f32 0.0, %v477
    %v479 = vpop.f32.mrf.mxu0
    %480 = vdwg.mxu0
    %v481 = vpack.c.bf16 %v478, %v457
    %v483 = vunpack.c.l.b16 %v334
    %v484 = vpack.c.b16 %v483, %v483
    %485 = vrot.lane.b32.xlu0 %v484, 112
    %v486 = vpop.permute.xlu0 %485
    %487 = vrot.lane.b32.xlu0 %v340, 80
    %v488 = vpop.permute.xlu0 %487
    %v490 = vsel %vm343, %v486, 0
    %v493 = vsel %vm343, %v488, 0
    %495 = vmatpush.bf16.xpose.msra.mxu0 0
    %496 = vmatpush.bf16.xpose.msra.mxu0 0
    %497 = vmatpush.bf16.xpose.msra.mxu0 0
    %498 = vmatpush.bf16.xpose.msra.mxu0 0
    %499 = vmatpush.bf16.xpose.msra.mxu0 0
    %500 = vmatpush.bf16.xpose.msra.mxu0 0
    %501 = vmatpush.bf16.xpose.msra.mxu0 0
    %502 = vmatpush.bf16.xpose.msra.mxu0 %v493
    %503 = vmatmul.bf16.gmra.mxu0 %v490
    %v504 = vpop.f32.mrf.mxu0
    %v505 = vadd.f32 %v200, %v504
    %v506 = vpop.f32.mrf.mxu0
    %507 = vdwg.mxu0
    %v509 = vunpack.c.l.b16 %v335
    %v510 = vpack.c.b16 %v509, %v509
    %511 = vrot.lane.b32.xlu0 %v510, 112
    %v512 = vpop.permute.xlu0 %511
    %513 = vrot.lane.b32.xlu0 %v365, 80
    %v514 = vpop.permute.xlu0 %513
    %v516 = vsel %vm343, %v512, 0
    %v519 = vsel %vm343, %v514, 0
    %521 = vmatpush.bf16.xpose.msra.mxu0 0
    %522 = vmatpush.bf16.xpose.msra.mxu0 0
    %523 = vmatpush.bf16.xpose.msra.mxu0 0
    %524 = vmatpush.bf16.xpose.msra.mxu0 0
    %525 = vmatpush.bf16.xpose.msra.mxu0 0
    %526 = vmatpush.bf16.xpose.msra.mxu0 0
    %527 = vmatpush.bf16.xpose.msra.mxu0 0
    %528 = vmatpush.bf16.xpose.msra.mxu0 %v519
    %529 = vmatmul.bf16.gmra.mxu0 %v516
    %v530 = vpop.f32.mrf.mxu0
    %v531 = vadd.f32 %v200, %v530
    %v532 = vpop.f32.mrf.mxu0
    %533 = vdwg.mxu0
    %v534 = vsel %vm387, %v505, -inf
    %535 = vmax.xlane.f32.xlu0 %v534
    %v536 = vpop.xlane.xlu0 %535
    %v537 = vsel %vm387, %v531, -inf
    %538 = vmax.xlane.f32.xlu0 %v537
    %v539 = vpop.xlane.xlu0 %538
    %v540 = vsub.f32 %v505, %v536
    %v541 = vsub.f32 %v531, %v539
    %v542 = vmul.f32 %v540, 1.442695
    %v543 = vpow.pop %v542
    %v544 = vmul.f32 %v541, 1.442695
    %v545 = vpow.pop %v544
    %v546 = vsel %vm387, %v543, 0.0
    %547 = vadd.xlane.f32.xlu0 %v546
    %v548 = vpop.xlane.xlu0 %547
    %v549 = vsel %vm387, %v545, 0.0
    %550 = vadd.xlane.f32.xlu0 %v549
    %v551 = vpop.xlane.xlu0 %550
    %v552 = vrcp.pop %v548
    %v553 = vmul.f32 %v548, %v552
    %v554 = vsub.f32 1.0, %v553
    %v555 = vmul.f32 %v552, %v554
    %v556 = vadd.f32 %v552, %v555
    %vm557 = vweird.f32 %v548
    %vm558 = vweird.f32 %v552
    %vm559 = vmor %vm557, %vm558
    %v560 = vsel %vm559, %v552, %v556
    %v561 = vand.u32 2147483647, %v548
    %vm562 = vcmp.eq.f32.partialorder %v561, 8.507059e+37
    %v563 = vand.u32 %v548, 2147483648
    %v564 = vor.u32 1.1754944e-38, %v563
    %v565 = vsel %vm562, %v564, %v560
    %v566 = vmul.f32 %v543, %v565
    %v567 = vrcp.pop %v551
    %v568 = vmul.f32 %v551, %v567
    %v569 = vsub.f32 1.0, %v568
    %v570 = vmul.f32 %v567, %v569
    %v571 = vadd.f32 %v567, %v570
    %vm572 = vweird.f32 %v551
    %vm573 = vweird.f32 %v567
    %vm574 = vmor %vm572, %vm573
    %v575 = vsel %vm574, %v567, %v571
    %v576 = vand.u32 2147483647, %v551
    %vm577 = vcmp.eq.f32.partialorder %v576, 8.507059e+37
    %v578 = vand.u32 %v551, 2147483648
    %v579 = vor.u32 1.1754944e-38, %v578
    %v580 = vsel %vm577, %v579, %v575
    %v581 = vmul.f32 %v545, %v580
    %v582 = vpack.c.bf16 %v566, %v566
    %v583 = vpack.c.bf16 %v581, %v581
    %584 = vrot.lane.b32.xlu0 %v340, 48
    %v585 = vpop.permute.xlu0 %584
    %v587 = vsel %vm387, %v582, 0
    %v590 = vsel %vm443, %v585, 0
    %592 = vmatpush.bf16.msra.mxu0 0
    %593 = vmatpush.bf16.msra.mxu0 0
    %594 = vmatpush.bf16.msra.mxu0 0
    %595 = vmatpush.bf16.msra.mxu0 0
    %596 = vmatpush.bf16.msra.mxu0 0
    %597 = vmatpush.bf16.msra.mxu0 0
    %598 = vmatpush.bf16.msra.mxu0 0
    %599 = vmatpush.bf16.msra.mxu0 %v590
    %600 = vmatmul.bf16.gmra.mxu0 %v587
    %v601 = vpop.f32.mrf.mxu0
    %v602 = vadd.f32 0.0, %v601
    %v603 = vpop.f32.mrf.mxu0
    %604 = vdwg.mxu0
    %605 = vrot.lane.b32.xlu0 %v365, 48
    %v606 = vpop.permute.xlu0 %605
    %v608 = vsel %vm387, %v583, 0
    %v611 = vsel %vm443, %v606, 0
    %613 = vmatpush.bf16.msra.mxu0 0
    %614 = vmatpush.bf16.msra.mxu0 0
    %615 = vmatpush.bf16.msra.mxu0 0
    %616 = vmatpush.bf16.msra.mxu0 0
    %617 = vmatpush.bf16.msra.mxu0 0
    %618 = vmatpush.bf16.msra.mxu0 0
    %619 = vmatpush.bf16.msra.mxu0 0
    %620 = vmatpush.bf16.msra.mxu0 %v611
    %621 = vmatmul.bf16.gmra.mxu0 %v608
    %v622 = vpop.f32.mrf.mxu0
    %v623 = vadd.f32 0.0, %v622
    %v624 = vpop.f32.mrf.mxu0
    %625 = vdwg.mxu0
    %v626 = vpack.c.bf16 %v623, %v602
    %v629 = vunpack.c.l.b16 %v210
    %v630 = vunpack.c.l.b16 %v211
    %v631 = vpack.c.b16 %v630, %v629
    %v634 = vsel %vm343, %v626, 0
    %636 = vmatpush.bf16.msra.mxu0 0
    %637 = vmatpush.bf16.msra.mxu0 0
    %638 = vmatpush.bf16.msra.mxu0 0
    %639 = vmatpush.bf16.msra.mxu0 0
    %640 = vmatpush.bf16.msra.mxu0 0
    %641 = vmatpush.bf16.msra.mxu0 0
    %642 = vmatpush.bf16.msra.mxu0 0
    %643 = vmatpush.bf16.msra.mxu0 %v631
    %644 = vmatmul.bf16.gmra.mxu0 %v634
    %v645 = vpop.f32.mrf.mxu0
    %v646 = vadd.f32 0.0, %v645
    %v647 = vpop.f32.mrf.mxu0
    %v648 = vadd.f32 0.0, %v647
    %649 = vdwg.mxu0
    %v652 = vunpack.c.l.b16 %v208
    %v653 = vunpack.c.l.b16 %v209
    %v654 = vpack.c.b16 %v653, %v652
    %v657 = vsel %vm343, %v481, 0
    %659 = vmatpush.bf16.msra.mxu0 0
    %660 = vmatpush.bf16.msra.mxu0 0
    %661 = vmatpush.bf16.msra.mxu0 0
    %662 = vmatpush.bf16.msra.mxu0 0
    %663 = vmatpush.bf16.msra.mxu0 0
    %664 = vmatpush.bf16.msra.mxu0 0
    %665 = vmatpush.bf16.msra.mxu0 0
    %666 = vmatpush.bf16.msra.mxu0 %v654
    %667 = vmatmul.bf16.gmra.mxu0 %v657
    %v668 = vpop.f32.mrf.mxu0
    %v669 = vadd.f32 %v646, %v668
    %v670 = vpop.f32.mrf.mxu0
    %v671 = vadd.f32 %v648, %v670
    %672 = vdwg.mxu0
    %v674 = vperm.slane %v212, 0
    %v676 = vadd.f32 %v669, %v674
    %v677 = vadd.f32 %v671, %v674
    %v678 = vadd.f32 %v193, %v676
    %v679 = vadd.f32 %v195, %v677
    %v680 = vsel %vm237, %v678, 0.0
    %681 = vadd.xlane.f32.xlu0 %v680
    %v682 = vpop.xlane.xlu0 %681
    %v683 = vsel %vm237, %v679, 0.0
    %684 = vadd.xlane.f32.xlu0 %v683
    %v685 = vpop.xlane.xlu0 %684
    %v686 = vmul.f32 %v682, %v250
    %v687 = vmul.f32 %v685, %v250
    %v688 = vsub.f32 %v678, %v686
    %v689 = vsub.f32 %v679, %v687
    %v690 = vmul.f32 %v688, %v688
    %v691 = vmul.f32 %v689, %v689
    %v692 = vsel %vm237, %v690, 0.0
    %693 = vadd.xlane.f32.xlu0 %v692
    %v694 = vpop.xlane.xlu0 %693
    %v695 = vsel %vm237, %v691, 0.0
    %696 = vadd.xlane.f32.xlu0 %v695
    %v697 = vpop.xlane.xlu0 %696
    %v698 = vmul.f32 %v694, %v250
    %v699 = vmul.f32 %v697, %v250
    %v700 = vadd.f32 %v698, 1e-05
    %v701 = vadd.f32 %v699, 1e-05
    %v702 = vrsqrt.pop %v700
    %v703 = vmul.f32 %v702, %v700
    %v704 = vmul.f32 %v703, %v702
    %v705 = vmul.f32 0.5, %v704
    %v706 = vsub.f32 1.5, %v705
    %v707 = vmul.f32 %v702, %v706
    %vm708 = vweird.f32 %v700
    %vm709 = vweird.f32 %v702
    %vm710 = vmor %vm708, %vm709
    %v711 = vsel %vm710, %v702, %v707
    %v712 = vrsqrt.pop %v701
    %v713 = vmul.f32 %v712, %v701
    %v714 = vmul.f32 %v713, %v712
    %v715 = vmul.f32 0.5, %v714
    %v716 = vsub.f32 1.5, %v715
    %v717 = vmul.f32 %v712, %v716
    %vm718 = vweird.f32 %v701
    %vm719 = vweird.f32 %v712
    %vm720 = vmor %vm718, %vm719
    %v721 = vsel %vm720, %v712, %v717
    %v722 = vmul.f32 %v688, %v711
    %v723 = vmul.f32 %v689, %v721
    %v725 = vperm.slane %v213, 0
    %v727 = vmul.f32 %v722, %v725
    %v728 = vmul.f32 %v723, %v725
    %v730 = vperm.slane %v214, 0
    %v732 = vadd.f32 %v727, %v730
    %v733 = vadd.f32 %v728, %v730
    %v734 = vpack.c.bf16 %v733, %v732
    %v736 = vperm.slane %v219, 0
    %v742 = vunpack.c.l.b16 %v215
    %v743 = vunpack.c.l.b16 %v216
    %v744 = vunpack.c.l.b16 %v217
    %v745 = vunpack.c.l.b16 %v218
    %v746 = vpack.c.b16 %v743, %v742
    %v747 = vpack.c.b16 %v745, %v744
    %v751 = vsel %vm237, %v734, 0
    %753 = vmatpush.bf16.msra.mxu0 0
    %754 = vmatpush.bf16.msra.mxu0 0
    %755 = vmatpush.bf16.msra.mxu0 0
    %756 = vmatpush.bf16.msra.mxu0 0
    %757 = vmatpush.bf16.msra.mxu0 0
    %758 = vmatpush.bf16.msra.mxu0 0
    %759 = vmatpush.bf16.msra.mxu0 %v747
    %760 = vmatpush.bf16.msra.mxu0 %v746
    %761 = vmatmul.bf16.gmra.mxu0 %v751
    %v762 = vpop.f32.mrf.mxu0
    %v763 = vadd.f32 %v736, %v762
    %v764 = vpop.f32.mrf.mxu0
    %v765 = vadd.f32 %v736, %v764
    %766 = vdwg.mxu0
    %v767 = vmul.f32 %v763, 0.5
    %v768 = vmul.f32 %v765, 0.5
    %v769 = vmul.f32 %v763, 0.044715
    %v770 = vmul.f32 %v765, 0.044715
    %v771 = vmul.f32 %v769, %v763
    %v772 = vmul.f32 %v770, %v765
    %v773 = vmul.f32 %v771, %v763
    %v774 = vmul.f32 %v772, %v765
    %v775 = vadd.f32 %v763, %v773
    %v776 = vadd.f32 %v765, %v774
    %v777 = vmul.f32 %v775, 0.7978846
    %v778 = vmul.f32 %v776, 0.7978846
    %v779 = vtanh.pop %v777
    %v780 = vtanh.pop %v778
    %v781 = vadd.f32 %v779, 1.0
    %v782 = vadd.f32 %v780, 1.0
    %v783 = vmul.f32 %v767, %v781
    %v784 = vmul.f32 %v768, %v782
    %v785 = vpack.c.bf16 %v784, %v783
    %v802 = vunpack.c.l.b16 %v220
    %v803 = vunpack.c.l.b16 %v221
    %v804 = vunpack.c.l.b16 %v222
    %v805 = vunpack.c.l.b16 %v223
    %v806 = vunpack.c.l.b16 %v224
    %v807 = vunpack.c.l.b16 %v225
    %v808 = vunpack.c.l.b16 %v226
    %v809 = vunpack.c.l.b16 %v227
    %v810 = vunpack.c.l.b16 %v228
    %v811 = vunpack.c.l.b16 %v229
    %v812 = vunpack.c.l.b16 %v230
    %v813 = vunpack.c.l.b16 %v231
    %v814 = vunpack.c.l.b16 %v232
    %v815 = vunpack.c.l.b16 %v233
    %v816 = vunpack.c.l.b16 %v234
    %v817 = vunpack.c.l.b16 %v235
    %v818 = vpack.c.b16 %v803, %v802
    %v819 = vpack.c.b16 %v805, %v804
    %v820 = vpack.c.b16 %v807, %v806
    %v821 = vpack.c.b16 %v809, %v808
    %v822 = vpack.c.b16 %v811, %v810
    %v823 = vpack.c.b16 %v813, %v812
    %v824 = vpack.c.b16 %v815, %v814
    %v825 = vpack.c.b16 %v817, %v816
    %834 = vmatpush.bf16.msra.mxu0 %v825
    %835 = vmatpush.bf16.msra.mxu0 %v824
    %836 = vmatpush.bf16.msra.mxu0 %v823
    %837 = vmatpush.bf16.msra.mxu0 %v822
    %838 = vmatpush.bf16.msra.mxu0 %v821
    %839 = vmatpush.bf16.msra.mxu0 %v820
    %840 = vmatpush.bf16.msra.mxu0 %v819
    %841 = vmatpush.bf16.msra.mxu0 %v818
    %842 = vmatmul.bf16.gmra.mxu0 %v785
    %v843 = vpop.f32.mrf.mxu0
    %v844 = vadd.f32 0.0, %v843
    %v845 = vpop.f32.mrf.mxu0
    %v846 = vadd.f32 0.0, %v845
    %847 = vdwg.mxu0
    %v848 = vadd.f32 %v678, %v844
    %v849 = vadd.f32 %v679, %v846
    %v851 = vperm.slane %v236, 0
    %v853 = vadd.f32 %v848, %v851
    %v854 = vadd.f32 %v849, %v851
    %s855 = scalar_lea.vmem %s4, 1
    %v856 = vld [vmem:[%s855] sm:$0x1]
    %s857 = scalar_lea.vmem %s5, 1
    %v858 = vld [vmem:[%s857] sm:$0x1]
    %s859 = scalar_lea.vmem %s6, 16
    %v860 = vld [vmem:[%s859] sm:$0xf]
    %v861 = vld [vmem:[%s859 + $0x4] sm:$0xf]
    %v862 = vld [vmem:[%s859 + $0x8] sm:$0xf]
    %v863 = vld [vmem:[%s859 + $0xc] sm:$0xf]
    %s864 = scalar_lea.vmem %s7, 1
    %v865 = vld [vmem:[%s864] sm:$0x1]
    %s866 = scalar_lea.vmem %s8, 16
    %v867 = vld [vmem:[%s866] sm:$0xf]
    %v868 = vld [vmem:[%s866 + $0x4] sm:$0xf]
    %v869 = vld [vmem:[%s866 + $0x8] sm:$0xf]
    %v870 = vld [vmem:[%s866 + $0xc] sm:$0xf]
    %s871 = scalar_lea.vmem %s9, 1
    %v872 = vld [vmem:[%s871] sm:$0x1]
    %s873 = scalar_lea.vmem %s10, 1
    %v874 = vld [vmem:[%s873] sm:$0x1]
    %s875 = scalar_lea.vmem %s11, 1
    %v876 = vld [vmem:[%s875] sm:$0x1]
    %s877 = scalar_lea.vmem %s12, 16
    %v878 = vld [vmem:[%s877] sm:$0xf]
    %v879 = vld [vmem:[%s877 + $0x4] sm:$0xf]
    %v880 = vld [vmem:[%s877 + $0x8] sm:$0xf]
    %v881 = vld [vmem:[%s877 + $0xc] sm:$0xf]
    %s882 = scalar_lea.vmem %s13, 1
    %v883 = vld [vmem:[%s882] sm:$0x1]
    %s884 = scalar_lea.vmem %s14, 64
    %v885 = vld [vmem:[%s884] sm:$0xf]
    %v886 = vld [vmem:[%s884 + $0x4] sm:$0xf]
    %v887 = vld [vmem:[%s884 + $0x8] sm:$0xf]
    %v888 = vld [vmem:[%s884 + $0xc] sm:$0xf]
    %v889 = vld [vmem:[%s884 + $0x10] sm:$0xf]
    %v890 = vld [vmem:[%s884 + $0x14] sm:$0xf]
    %v891 = vld [vmem:[%s884 + $0x18] sm:$0xf]
    %v892 = vld [vmem:[%s884 + $0x1c] sm:$0xf]
    %v893 = vld [vmem:[%s884 + $0x20] sm:$0xf]
    %v894 = vld [vmem:[%s884 + $0x24] sm:$0xf]
    %v895 = vld [vmem:[%s884 + $0x28] sm:$0xf]
    %v896 = vld [vmem:[%s884 + $0x2c] sm:$0xf]
    %v897 = vld [vmem:[%s884 + $0x30] sm:$0xf]
    %v898 = vld [vmem:[%s884 + $0x34] sm:$0xf]
    %v899 = vld [vmem:[%s884 + $0x38] sm:$0xf]
    %v900 = vld [vmem:[%s884 + $0x3c] sm:$0xf]
    %s901 = scalar_lea.vmem %s15, 1
    %v902 = vld [vmem:[%s901] sm:$0x1]
    %v903 = vsel %vm237, %v853, 0.0
    %904 = vadd.xlane.f32.xlu0 %v903
    %v905 = vpop.xlane.xlu0 %904
    %v906 = vsel %vm237, %v854, 0.0
    %907 = vadd.xlane.f32.xlu0 %v906
    %v908 = vpop.xlane.xlu0 %907
    %v909 = vmul.f32 %v905, %v250
    %v910 = vmul.f32 %v908, %v250
    %v911 = vsub.f32 %v853, %v909
    %v912 = vsub.f32 %v854, %v910
    %v913 = vmul.f32 %v911, %v911
    %v914 = vmul.f32 %v912, %v912
    %v915 = vsel %vm237, %v913, 0.0
    %916 = vadd.xlane.f32.xlu0 %v915
    %v917 = vpop.xlane.xlu0 %916
    %v918 = vsel %vm237, %v914, 0.0
    %919 = vadd.xlane.f32.xlu0 %v918
    %v920 = vpop.xlane.xlu0 %919
    %v921 = vmul.f32 %v917, %v250
    %v922 = vmul.f32 %v920, %v250
    %v923 = vadd.f32 %v921, 1e-05
    %v924 = vadd.f32 %v922, 1e-05
    %v925 = vrsqrt.pop %v923
    %v926 = vmul.f32 %v925, %v923
    %v927 = vmul.f32 %v926, %v925
    %v928 = vmul.f32 0.5, %v927
    %v929 = vsub.f32 1.5, %v928
    %v930 = vmul.f32 %v925, %v929
    %vm931 = vweird.f32 %v923
    %vm932 = vweird.f32 %v925
    %vm933 = vmor %vm931, %vm932
    %v934 = vsel %vm933, %v925, %v930
    %v935 = vrsqrt.pop %v924
    %v936 = vmul.f32 %v935, %v924
    %v937 = vmul.f32 %v936, %v935
    %v938 = vmul.f32 0.5, %v937
    %v939 = vsub.f32 1.5, %v938
    %v940 = vmul.f32 %v935, %v939
    %vm941 = vweird.f32 %v924
    %vm942 = vweird.f32 %v935
    %vm943 = vmor %vm941, %vm942
    %v944 = vsel %vm943, %v935, %v940
    %v945 = vmul.f32 %v911, %v934
    %v946 = vmul.f32 %v912, %v944
    %v948 = vperm.slane %v856, 0
    %v950 = vmul.f32 %v945, %v948
    %v951 = vmul.f32 %v946, %v948
    %v953 = vperm.slane %v858, 0
    %v955 = vadd.f32 %v950, %v953
    %v956 = vadd.f32 %v951, %v953
    %v957 = vpack.c.bf16 %v956, %v955
    %v959 = vperm.slane %v865, 0
    %v965 = vunpack.c.l.b16 %v860
    %v966 = vunpack.c.l.b16 %v861
    %v967 = vunpack.c.l.b16 %v862
    %v968 = vunpack.c.l.b16 %v863
    %v969 = vpack.c.b16 %v966, %v965
    %v970 = vpack.c.b16 %v968, %v967
    %v974 = vsel %vm237, %v957, 0
    %976 = vmatpush.bf16.msra.mxu0 0
    %977 = vmatpush.bf16.msra.mxu0 0
    %978 = vmatpush.bf16.msra.mxu0 0
    %979 = vmatpush.bf16.msra.mxu0 0
    %980 = vmatpush.bf16.msra.mxu0 0
    %981 = vmatpush.bf16.msra.mxu0 0
    %982 = vmatpush.bf16.msra.mxu0 %v970
    %983 = vmatpush.bf16.msra.mxu0 %v969
    %984 = vmatmul.bf16.gmra.mxu0 %v974
    %v985 = vpop.f32.mrf.mxu0
    %v986 = vadd.f32 %v959, %v985
    %v987 = vpop.f32.mrf.mxu0
    %v988 = vadd.f32 %v959, %v987
    %989 = vdwg.mxu0
    %v990 = vmul.f32 %v986, 0.25
    %v991 = vmul.f32 %v988, 0.25
    %v992 = vpack.c.bf16 %v990, %v990
    %v993 = vpack.c.bf16 %v991, %v991
    %v994 = vpack.c.bf16 %v986, %v986
    %v995 = vpack.c.bf16 %v988, %v988
    %v997 = vunpack.c.l.b16 %v994
    %v998 = vpack.c.b16 %v997, %v997
    %999 = vrot.lane.b32.xlu0 %v998, 96
    %v1000 = vpop.permute.xlu0 %999
    %v1002 = vsel %vm343, %v992, 0
    %v1005 = vsel %vm343, %v1000, 0
    %1007 = vmatpush.bf16.xpose.msra.mxu0 0
    %1008 = vmatpush.bf16.xpose.msra.mxu0 0
    %1009 = vmatpush.bf16.xpose.msra.mxu0 0
    %1010 = vmatpush.bf16.xpose.msra.mxu0 0
    %1011 = vmatpush.bf16.xpose.msra.mxu0 0
    %1012 = vmatpush.bf16.xpose.msra.mxu0 0
    %1013 = vmatpush.bf16.xpose.msra.mxu0 0
    %1014 = vmatpush.bf16.xpose.msra.mxu0 %v1005
    %1015 = vmatmul.bf16.gmra.mxu0 %v1002
    %v1016 = vpop.f32.mrf.mxu0
    %v1017 = vadd.f32 %v200, %v1016
    %v1018 = vpop.f32.mrf.mxu0
    %1019 = vdwg.mxu0
    %v1021 = vunpack.c.l.b16 %v995
    %v1022 = vpack.c.b16 %v1021, %v1021
    %1023 = vrot.lane.b32.xlu0 %v1022, 96
    %v1024 = vpop.permute.xlu0 %1023
    %v1026 = vsel %vm343, %v993, 0
    %v1029 = vsel %vm343, %v1024, 0
    %1031 = vmatpush.bf16.xpose.msra.mxu0 0
    %1032 = vmatpush.bf16.xpose.msra.mxu0 0
    %1033 = vmatpush.bf16.xpose.msra.mxu0 0
    %1034 = vmatpush.bf16.xpose.msra.mxu0 0
    %1035 = vmatpush.bf16.xpose.msra.mxu0 0
    %1036 = vmatpush.bf16.xpose.msra.mxu0 0
    %1037 = vmatpush.bf16.xpose.msra.mxu0 0
    %1038 = vmatpush.bf16.xpose.msra.mxu0 %v1029
    %1039 = vmatmul.bf16.gmra.mxu0 %v1026
    %v1040 = vpop.f32.mrf.mxu0
    %v1041 = vadd.f32 %v200, %v1040
    %v1042 = vpop.f32.mrf.mxu0
    %1043 = vdwg.mxu0
    %v1044 = vsel %vm387, %v1017, -inf
    %1045 = vmax.xlane.f32.xlu0 %v1044
    %v1046 = vpop.xlane.xlu0 %1045
    %v1047 = vsel %vm387, %v1041, -inf
    %1048 = vmax.xlane.f32.xlu0 %v1047
    %v1049 = vpop.xlane.xlu0 %1048
    %v1050 = vsub.f32 %v1017, %v1046
    %v1051 = vsub.f32 %v1041, %v1049
    %v1052 = vmul.f32 %v1050, 1.442695
    %v1053 = vpow.pop %v1052
    %v1054 = vmul.f32 %v1051, 1.442695
    %v1055 = vpow.pop %v1054
    %v1056 = vsel %vm387, %v1053, 0.0
    %1057 = vadd.xlane.f32.xlu0 %v1056
    %v1058 = vpop.xlane.xlu0 %1057
    %v1059 = vsel %vm387, %v1055, 0.0
    %1060 = vadd.xlane.f32.xlu0 %v1059
    %v1061 = vpop.xlane.xlu0 %1060
    %v1062 = vrcp.pop %v1058
    %v1063 = vmul.f32 %v1058, %v1062
    %v1064 = vsub.f32 1.0, %v1063
    %v1065 = vmul.f32 %v1062, %v1064
    %v1066 = vadd.f32 %v1062, %v1065
    %vm1067 = vweird.f32 %v1058
    %vm1068 = vweird.f32 %v1062
    %vm1069 = vmor %vm1067, %vm1068
    %v1070 = vsel %vm1069, %v1062, %v1066
    %v1071 = vand.u32 2147483647, %v1058
    %vm1072 = vcmp.eq.f32.partialorder %v1071, 8.507059e+37
    %v1073 = vand.u32 %v1058, 2147483648
    %v1074 = vor.u32 1.1754944e-38, %v1073
    %v1075 = vsel %vm1072, %v1074, %v1070
    %v1076 = vmul.f32 %v1053, %v1075
    %v1077 = vrcp.pop %v1061
    %v1078 = vmul.f32 %v1061, %v1077
    %v1079 = vsub.f32 1.0, %v1078
    %v1080 = vmul.f32 %v1077, %v1079
    %v1081 = vadd.f32 %v1077, %v1080
    %vm1082 = vweird.f32 %v1061
    %vm1083 = vweird.f32 %v1077
    %vm1084 = vmor %vm1082, %vm1083
    %v1085 = vsel %vm1084, %v1077, %v1081
    %v1086 = vand.u32 2147483647, %v1061
    %vm1087 = vcmp.eq.f32.partialorder %v1086, 8.507059e+37
    %v1088 = vand.u32 %v1061, 2147483648
    %v1089 = vor.u32 1.1754944e-38, %v1088
    %v1090 = vsel %vm1087, %v1089, %v1085
    %v1091 = vmul.f32 %v1055, %v1090
    %v1092 = vpack.c.bf16 %v1076, %v1076
    %v1093 = vpack.c.bf16 %v1091, %v1091
    %1094 = vrot.lane.b32.xlu0 %v998, 64
    %v1095 = vpop.permute.xlu0 %1094
    %v1097 = vsel %vm387, %v1092, 0
    %v1100 = vsel %vm443, %v1095, 0
    %1102 = vmatpush.bf16.msra.mxu0 0
    %1103 = vmatpush.bf16.msra.mxu0 0
    %1104 = vmatpush.bf16.msra.mxu0 0
    %1105 = vmatpush.bf16.msra.mxu0 0
    %1106 = vmatpush.bf16.msra.mxu0 0
    %1107 = vmatpush.bf16.msra.mxu0 0
    %1108 = vmatpush.bf16.msra.mxu0 0
    %1109 = vmatpush.bf16.msra.mxu0 %v1100
    %1110 = vmatmul.bf16.gmra.mxu0 %v1097
    %v1111 = vpop.f32.mrf.mxu0
    %v1112 = vadd.f32 0.0, %v1111
    %v1113 = vpop.f32.mrf.mxu0
    %1114 = vdwg.mxu0
    %1115 = vrot.lane.b32.xlu0 %v1022, 64
    %v1116 = vpop.permute.xlu0 %1115
    %v1118 = vsel %vm387, %v1093, 0
    %v1121 = vsel %vm443, %v1116, 0
    %1123 = vmatpush.bf16.msra.mxu0 0
    %1124 = vmatpush.bf16.msra.mxu0 0
    %1125 = vmatpush.bf16.msra.mxu0 0
    %1126 = vmatpush.bf16.msra.mxu0 0
    %1127 = vmatpush.bf16.msra.mxu0 0
    %1128 = vmatpush.bf16.msra.mxu0 0
    %1129 = vmatpush.bf16.msra.mxu0 0
    %1130 = vmatpush.bf16.msra.mxu0 %v1121
    %1131 = vmatmul.bf16.gmra.mxu0 %v1118
    %v1132 = vpop.f32.mrf.mxu0
    %v1133 = vadd.f32 0.0, %v1132
    %v1134 = vpop.f32.mrf.mxu0
    %1135 = vdwg.mxu0
    %v1136 = vpack.c.bf16 %v1133, %v1112
    %v1138 = vunpack.c.l.b16 %v992
    %v1139 = vpack.c.b16 %v1138, %v1138
    %1140 = vrot.lane.b32.xlu0 %v1139, 112
    %v1141 = vpop.permute.xlu0 %1140
    %1142 = vrot.lane.b32.xlu0 %v998, 80
    %v1143 = vpop.permute.xlu0 %1142
    %v1145 = vsel %vm343, %v1141, 0
    %v1148 = vsel %vm343, %v1143, 0
    %1150 = vmatpush.bf16.xpose.msra.mxu0 0
    %1151 = vmatpush.bf16.xpose.msra.mxu0 0
    %1152 = vmatpush.bf16.xpose.msra.mxu0 0
    %1153 = vmatpush.bf16.xpose.msra.mxu0 0
    %1154 = vmatpush.bf16.xpose.msra.mxu0 0
    %1155 = vmatpush.bf16.xpose.msra.mxu0 0
    %1156 = vmatpush.bf16.xpose.msra.mxu0 0
    %1157 = vmatpush.bf16.xpose.msra.mxu0 %v1148
    %1158 = vmatmul.bf16.gmra.mxu0 %v1145
    %v1159 = vpop.f32.mrf.mxu0
    %v1160 = vadd.f32 %v200, %v1159
    %v1161 = vpop.f32.mrf.mxu0
    %1162 = vdwg.mxu0
    %v1164 = vunpack.c.l.b16 %v993
    %v1165 = vpack.c.b16 %v1164, %v1164
    %1166 = vrot.lane.b32.xlu0 %v1165, 112
    %v1167 = vpop.permute.xlu0 %1166
    %1168 = vrot.lane.b32.xlu0 %v1022, 80
    %v1169 = vpop.permute.xlu0 %1168
    %v1171 = vsel %vm343, %v1167, 0
    %v1174 = vsel %vm343, %v1169, 0
    %1176 = vmatpush.bf16.xpose.msra.mxu0 0
    %1177 = vmatpush.bf16.xpose.msra.mxu0 0
    %1178 = vmatpush.bf16.xpose.msra.mxu0 0
    %1179 = vmatpush.bf16.xpose.msra.mxu0 0
    %1180 = vmatpush.bf16.xpose.msra.mxu0 0
    %1181 = vmatpush.bf16.xpose.msra.mxu0 0
    %1182 = vmatpush.bf16.xpose.msra.mxu0 0
    %1183 = vmatpush.bf16.xpose.msra.mxu0 %v1174
    %1184 = vmatmul.bf16.gmra.mxu0 %v1171
    %v1185 = vpop.f32.mrf.mxu0
    %v1186 = vadd.f32 %v200, %v1185
    %v1187 = vpop.f32.mrf.mxu0
    %1188 = vdwg.mxu0
    %v1189 = vsel %vm387, %v1160, -inf
    %1190 = vmax.xlane.f32.xlu0 %v1189
    %v1191 = vpop.xlane.xlu0 %1190
    %v1192 = vsel %vm387, %v1186, -inf
    %1193 = vmax.xlane.f32.xlu0 %v1192
    %v1194 = vpop.xlane.xlu0 %1193
    %v1195 = vsub.f32 %v1160, %v1191
    %v1196 = vsub.f32 %v1186, %v1194
    %v1197 = vmul.f32 %v1195, 1.442695
    %v1198 = vpow.pop %v1197
    %v1199 = vmul.f32 %v1196, 1.442695
    %v1200 = vpow.pop %v1199
    %v1201 = vsel %vm387, %v1198, 0.0
    %1202 = vadd.xlane.f32.xlu0 %v1201
    %v1203 = vpop.xlane.xlu0 %1202
    %v1204 = vsel %vm387, %v1200, 0.0
    %1205 = vadd.xlane.f32.xlu0 %v1204
    %v1206 = vpop.xlane.xlu0 %1205
    %v1207 = vrcp.pop %v1203
    %v1208 = vmul.f32 %v1203, %v1207
    %v1209 = vsub.f32 1.0, %v1208
    %v1210 = vmul.f32 %v1207, %v1209
    %v1211 = vadd.f32 %v1207, %v1210
    %vm1212 = vweird.f32 %v1203
    %vm1213 = vweird.f32 %v1207
    %vm1214 = vmor %vm1212, %vm1213
    %v1215 = vsel %vm1214, %v1207, %v1211
    %v1216 = vand.u32 2147483647, %v1203
    %vm1217 = vcmp.eq.f32.partialorder %v1216, 8.507059e+37
    %v1218 = vand.u32 %v1203, 2147483648
    %v1219 = vor.u32 1.1754944e-38, %v1218
    %v1220 = vsel %vm1217, %v1219, %v1215
    %v1221 = vmul.f32 %v1198, %v1220
    %v1222 = vrcp.pop %v1206
    %v1223 = vmul.f32 %v1206, %v1222
    %v1224 = vsub.f32 1.0, %v1223
    %v1225 = vmul.f32 %v1222, %v1224
    %v1226 = vadd.f32 %v1222, %v1225
    %vm1227 = vweird.f32 %v1206
    %vm1228 = vweird.f32 %v1222
    %vm1229 = vmor %vm1227, %vm1228
    %v1230 = vsel %vm1229, %v1222, %v1226
    %v1231 = vand.u32 2147483647, %v1206
    %vm1232 = vcmp.eq.f32.partialorder %v1231, 8.507059e+37
    %v1233 = vand.u32 %v1206, 2147483648
    %v1234 = vor.u32 1.1754944e-38, %v1233
    %v1235 = vsel %vm1232, %v1234, %v1230
    %v1236 = vmul.f32 %v1200, %v1235
    %v1237 = vpack.c.bf16 %v1221, %v1221
    %v1238 = vpack.c.bf16 %v1236, %v1236
    %1239 = vrot.lane.b32.xlu0 %v998, 48
    %v1240 = vpop.permute.xlu0 %1239
    %v1242 = vsel %vm387, %v1237, 0
    %v1245 = vsel %vm443, %v1240, 0
    %1247 = vmatpush.bf16.msra.mxu0 0
    %1248 = vmatpush.bf16.msra.mxu0 0
    %1249 = vmatpush.bf16.msra.mxu0 0
    %1250 = vmatpush.bf16.msra.mxu0 0
    %1251 = vmatpush.bf16.msra.mxu0 0
    %1252 = vmatpush.bf16.msra.mxu0 0
    %1253 = vmatpush.bf16.msra.mxu0 0
    %1254 = vmatpush.bf16.msra.mxu0 %v1245
    %1255 = vmatmul.bf16.gmra.mxu0 %v1242
    %v1256 = vpop.f32.mrf.mxu0
    %v1257 = vadd.f32 0.0, %v1256
    %v1258 = vpop.f32.mrf.mxu0
    %1259 = vdwg.mxu0
    %1260 = vrot.lane.b32.xlu0 %v1022, 48
    %v1261 = vpop.permute.xlu0 %1260
    %v1263 = vsel %vm387, %v1238, 0
    %v1266 = vsel %vm443, %v1261, 0
    %1268 = vmatpush.bf16.msra.mxu0 0
    %1269 = vmatpush.bf16.msra.mxu0 0
    %1270 = vmatpush.bf16.msra.mxu0 0
    %1271 = vmatpush.bf16.msra.mxu0 0
    %1272 = vmatpush.bf16.msra.mxu0 0
    %1273 = vmatpush.bf16.msra.mxu0 0
    %1274 = vmatpush.bf16.msra.mxu0 0
    %1275 = vmatpush.bf16.msra.mxu0 %v1266
    %1276 = vmatmul.bf16.gmra.mxu0 %v1263
    %v1277 = vpop.f32.mrf.mxu0
    %v1278 = vadd.f32 0.0, %v1277
    %v1279 = vpop.f32.mrf.mxu0
    %1280 = vdwg.mxu0
    %v1281 = vpack.c.bf16 %v1278, %v1257
    %v1284 = vunpack.c.l.b16 %v869
    %v1285 = vunpack.c.l.b16 %v870
    %v1286 = vpack.c.b16 %v1285, %v1284
    %v1289 = vsel %vm343, %v1281, 0
    %1291 = vmatpush.bf16.msra.mxu0 0
    %1292 = vmatpush.bf16.msra.mxu0 0
    %1293 = vmatpush.bf16.msra.mxu0 0
    %1294 = vmatpush.bf16.msra.mxu0 0
    %1295 = vmatpush.bf16.msra.mxu0 0
    %1296 = vmatpush.bf16.msra.mxu0 0
    %1297 = vmatpush.bf16.msra.mxu0 0
    %1298 = vmatpush.bf16.msra.mxu0 %v1286
    %1299 = vmatmul.bf16.gmra.mxu0 %v1289
    %v1300 = vpop.f32.mrf.mxu0
    %v1301 = vadd.f32 0.0, %v1300
    %v1302 = vpop.f32.mrf.mxu0
    %v1303 = vadd.f32 0.0, %v1302
    %1304 = vdwg.mxu0
    %v1307 = vunpack.c.l.b16 %v867
    %v1308 = vunpack.c.l.b16 %v868
    %v1309 = vpack.c.b16 %v1308, %v1307
    %v1312 = vsel %vm343, %v1136, 0
    %1314 = vmatpush.bf16.msra.mxu0 0
    %1315 = vmatpush.bf16.msra.mxu0 0
    %1316 = vmatpush.bf16.msra.mxu0 0
    %1317 = vmatpush.bf16.msra.mxu0 0
    %1318 = vmatpush.bf16.msra.mxu0 0
    %1319 = vmatpush.bf16.msra.mxu0 0
    %1320 = vmatpush.bf16.msra.mxu0 0
    %1321 = vmatpush.bf16.msra.mxu0 %v1309
    %1322 = vmatmul.bf16.gmra.mxu0 %v1312
    %v1323 = vpop.f32.mrf.mxu0
    %v1324 = vadd.f32 %v1301, %v1323
    %v1325 = vpop.f32.mrf.mxu0
    %v1326 = vadd.f32 %v1303, %v1325
    %1327 = vdwg.mxu0
    %v1329 = vperm.slane %v872, 0
    %v1331 = vadd.f32 %v1324, %v1329
    %v1332 = vadd.f32 %v1326, %v1329
    %v1333 = vadd.f32 %v853, %v1331
    %v1334 = vadd.f32 %v854, %v1332
    %v1335 = vsel %vm237, %v1333, 0.0
    %1336 = vadd.xlane.f32.xlu0 %v1335
    %v1337 = vpop.xlane.xlu0 %1336
    %v1338 = vsel %vm237, %v1334, 0.0
    %1339 = vadd.xlane.f32.xlu0 %v1338
    %v1340 = vpop.xlane.xlu0 %1339
    %v1341 = vmul.f32 %v1337, %v250
    %v1342 = vmul.f32 %v1340, %v250
    %v1343 = vsub.f32 %v1333, %v1341
    %v1344 = vsub.f32 %v1334, %v1342
    %v1345 = vmul.f32 %v1343, %v1343
    %v1346 = vmul.f32 %v1344, %v1344
    %v1347 = vsel %vm237, %v1345, 0.0
    %1348 = vadd.xlane.f32.xlu0 %v1347
    %v1349 = vpop.xlane.xlu0 %1348
    %v1350 = vsel %vm237, %v1346, 0.0
    %1351 = vadd.xlane.f32.xlu0 %v1350
    %v1352 = vpop.xlane.xlu0 %1351
    %v1353 = vmul.f32 %v1349, %v250
    %v1354 = vmul.f32 %v1352, %v250
    %v1355 = vadd.f32 %v1353, 1e-05
    %v1356 = vadd.f32 %v1354, 1e-05
    %v1357 = vrsqrt.pop %v1355
    %v1358 = vmul.f32 %v1357, %v1355
    %v1359 = vmul.f32 %v1358, %v1357
    %v1360 = vmul.f32 0.5, %v1359
    %v1361 = vsub.f32 1.5, %v1360
    %v1362 = vmul.f32 %v1357, %v1361
    %vm1363 = vweird.f32 %v1355
    %vm1364 = vweird.f32 %v1357
    %vm1365 = vmor %vm1363, %vm1364
    %v1366 = vsel %vm1365, %v1357, %v1362
    %v1367 = vrsqrt.pop %v1356
    %v1368 = vmul.f32 %v1367, %v1356
    %v1369 = vmul.f32 %v1368, %v1367
    %v1370 = vmul.f32 0.5, %v1369
    %v1371 = vsub.f32 1.5, %v1370
    %v1372 = vmul.f32 %v1367, %v1371
    %vm1373 = vweird.f32 %v1356
    %vm1374 = vweird.f32 %v1367
    %vm1375 = vmor %vm1373, %vm1374
    %v1376 = vsel %vm1375, %v1367, %v1372
    %v1377 = vmul.f32 %v1343, %v1366
    %v1378 = vmul.f32 %v1344, %v1376
    %v1380 = vperm.slane %v874, 0
    %v1382 = vmul.f32 %v1377, %v1380
    %v1383 = vmul.f32 %v1378, %v1380
    %v1385 = vperm.slane %v876, 0
    %v1387 = vadd.f32 %v1382, %v1385
    %v1388 = vadd.f32 %v1383, %v1385
    %v1389 = vpack.c.bf16 %v1388, %v1387
    %v1391 = vperm.slane %v883, 0
    %v1397 = vunpack.c.l.b16 %v878
    %v1398 = vunpack.c.l.b16 %v879
    %v1399 = vunpack.c.l.b16 %v880
    %v1400 = vunpack.c.l.b16 %v881
    %v1401 = vpack.c.b16 %v1398, %v1397
    %v1402 = vpack.c.b16 %v1400, %v1399
    %v1406 = vsel %vm237, %v1389, 0
    %1408 = vmatpush.bf16.msra.mxu0 0
    %1409 = vmatpush.bf16.msra.mxu0 0
    %1410 = vmatpush.bf16.msra.mxu0 0
    %1411 = vmatpush.bf16.msra.mxu0 0
    %1412 = vmatpush.bf16.msra.mxu0 0
    %1413 = vmatpush.bf16.msra.mxu0 0
    %1414 = vmatpush.bf16.msra.mxu0 %v1402
    %1415 = vmatpush.bf16.msra.mxu0 %v1401
    %1416 = vmatmul.bf16.gmra.mxu0 %v1406
    %v1417 = vpop.f32.mrf.mxu0
    %v1418 = vadd.f32 %v1391, %v1417
    %v1419 = vpop.f32.mrf.mxu0
    %v1420 = vadd.f32 %v1391, %v1419
    %1421 = vdwg.mxu0
    %v1422 = vmul.f32 %v1418, 0.5
    %v1423 = vmul.f32 %v1420, 0.5
    %v1424 = vmul.f32 %v1418, 0.044715
    %v1425 = vmul.f32 %v1420, 0.044715
    %v1426 = vmul.f32 %v1424, %v1418
    %v1427 = vmul.f32 %v1425, %v1420
    %v1428 = vmul.f32 %v1426, %v1418
    %v1429 = vmul.f32 %v1427, %v1420
    %v1430 = vadd.f32 %v1418, %v1428
    %v1431 = vadd.f32 %v1420, %v1429
    %v1432 = vmul.f32 %v1430, 0.7978846
    %v1433 = vmul.f32 %v1431, 0.7978846
    %v1434 = vtanh.pop %v1432
    %v1435 = vtanh.pop %v1433
    %v1436 = vadd.f32 %v1434, 1.0
    %v1437 = vadd.f32 %v1435, 1.0
    %v1438 = vmul.f32 %v1422, %v1436
    %v1439 = vmul.f32 %v1423, %v1437
    %v1440 = vpack.c.bf16 %v1439, %v1438
    %v1457 = vunpack.c.l.b16 %v885
    %v1458 = vunpack.c.l.b16 %v886
    %v1459 = vunpack.c.l.b16 %v887
    %v1460 = vunpack.c.l.b16 %v888
    %v1461 = vunpack.c.l.b16 %v889
    %v1462 = vunpack.c.l.b16 %v890
    %v1463 = vunpack.c.l.b16 %v891
    %v1464 = vunpack.c.l.b16 %v892
    %v1465 = vunpack.c.l.b16 %v893
    %v1466 = vunpack.c.l.b16 %v894
    %v1467 = vunpack.c.l.b16 %v895
    %v1468 = vunpack.c.l.b16 %v896
    %v1469 = vunpack.c.l.b16 %v897
    %v1470 = vunpack.c.l.b16 %v898
    %v1471 = vunpack.c.l.b16 %v899
    %v1472 = vunpack.c.l.b16 %v900
    %v1473 = vpack.c.b16 %v1458, %v1457
    %v1474 = vpack.c.b16 %v1460, %v1459
    %v1475 = vpack.c.b16 %v1462, %v1461
    %v1476 = vpack.c.b16 %v1464, %v1463
    %v1477 = vpack.c.b16 %v1466, %v1465
    %v1478 = vpack.c.b16 %v1468, %v1467
    %v1479 = vpack.c.b16 %v1470, %v1469
    %v1480 = vpack.c.b16 %v1472, %v1471
    %1489 = vmatpush.bf16.msra.mxu0 %v1480
    %1490 = vmatpush.bf16.msra.mxu0 %v1479
    %1491 = vmatpush.bf16.msra.mxu0 %v1478
    %1492 = vmatpush.bf16.msra.mxu0 %v1477
    %1493 = vmatpush.bf16.msra.mxu0 %v1476
    %1494 = vmatpush.bf16.msra.mxu0 %v1475
    %1495 = vmatpush.bf16.msra.mxu0 %v1474
    %1496 = vmatpush.bf16.msra.mxu0 %v1473
    %1497 = vmatmul.bf16.gmra.mxu0 %v1440
    %v1498 = vpop.f32.mrf.mxu0
    %v1499 = vadd.f32 0.0, %v1498
    %v1500 = vpop.f32.mrf.mxu0
    %v1501 = vadd.f32 0.0, %v1500
    %1502 = vdwg.mxu0
    %v1503 = vadd.f32 %v1333, %v1499
    %v1504 = vadd.f32 %v1334, %v1501
    %v1506 = vperm.slane %v902, 0
    %v1508 = vadd.f32 %v1503, %v1506
    %v1509 = vadd.f32 %v1504, %v1506
    %v1510 = vld [vmem:[%s16] sm:$0x1]
    %v1511 = vld [vmem:[%s17] sm:$0x1]
    %v1512 = vsel %vm237, %v1508, 0.0
    %1513 = vadd.xlane.f32.xlu0 %v1512
    %v1514 = vpop.xlane.xlu0 %1513
    %v1515 = vsel %vm237, %v1509, 0.0
    %1516 = vadd.xlane.f32.xlu0 %v1515
    %v1517 = vpop.xlane.xlu0 %1516
    %v1518 = vmul.f32 %v1514, %v250
    %v1519 = vmul.f32 %v1517, %v250
    %v1520 = vsub.f32 %v1508, %v1518
    %v1521 = vsub.f32 %v1509, %v1519
    %v1522 = vmul.f32 %v1520, %v1520
    %v1523 = vmul.f32 %v1521, %v1521
    %v1524 = vsel %vm237, %v1522, 0.0
    %1525 = vadd.xlane.f32.xlu0 %v1524
    %v1526 = vpop.xlane.xlu0 %1525
    %v1527 = vsel %vm237, %v1523, 0.0
    %1528 = vadd.xlane.f32.xlu0 %v1527
    %v1529 = vpop.xlane.xlu0 %1528
    %v1530 = vmul.f32 %v1526, %v250
    %v1531 = vmul.f32 %v1529, %v250
    %v1532 = vadd.f32 %v1530, 1e-05
    %v1533 = vadd.f32 %v1531, 1e-05
    %v1534 = vrsqrt.pop %v1532
    %v1535 = vmul.f32 %v1534, %v1532
    %v1536 = vmul.f32 %v1535, %v1534
    %v1537 = vmul.f32 0.5, %v1536
    %v1538 = vsub.f32 1.5, %v1537
    %v1539 = vmul.f32 %v1534, %v1538
    %vm1540 = vweird.f32 %v1532
    %vm1541 = vweird.f32 %v1534
    %vm1542 = vmor %vm1540, %vm1541
    %v1543 = vsel %vm1542, %v1534, %v1539
    %v1544 = vrsqrt.pop %v1533
    %v1545 = vmul.f32 %v1544, %v1533
    %v1546 = vmul.f32 %v1545, %v1544
    %v1547 = vmul.f32 0.5, %v1546
    %v1548 = vsub.f32 1.5, %v1547
    %v1549 = vmul.f32 %v1544, %v1548
    %vm1550 = vweird.f32 %v1533
    %vm1551 = vweird.f32 %v1544
    %vm1552 = vmor %vm1550, %vm1551
    %v1553 = vsel %vm1552, %v1544, %v1549
    %v1554 = vmul.f32 %v1520, %v1543
    %v1555 = vmul.f32 %v1521, %v1553
    %v1557 = vperm.slane %v1510, 0
    %v1559 = vmul.f32 %v1554, %v1557
    %v1560 = vmul.f32 %v1555, %v1557
    %v1562 = vperm.slane %v1511, 0
    %v1564 = vadd.f32 %v1559, %v1562
    %v1565 = vadd.f32 %v1560, %v1562
    %v1566 = vmul.f32 %v1564, %v1564
    %v1567 = vmul.f32 %v1565, %v1565
    %v1568 = vsel %vm237, %v1566, 0.0
    %1569 = vadd.xlane.f32.xlu0 %v1568
    %v1570 = vpop.xlane.xlu0 %1569
    %v1571 = vsel %vm237, %v1567, 0.0
    %1572 = vadd.xlane.f32.xlu0 %v1571
    %v1573 = vpop.xlane.xlu0 %1572
    %v1574 = vmax.f32 %v1570, 1e-24
    %v1575 = vmax.f32 %v1573, 1e-24
    %v1576 = vrsqrt.pop %v1574
    %v1577 = vmul.f32 %v1576, %v1574
    %v1578 = vmul.f32 %v1577, %v1576
    %v1579 = vmul.f32 0.5, %v1578
    %v1580 = vsub.f32 1.5, %v1579
    %v1581 = vmul.f32 %v1576, %v1580
    %vm1582 = vweird.f32 %v1574
    %vm1583 = vweird.f32 %v1576
    %vm1584 = vmor %vm1582, %vm1583
    %v1585 = vsel %vm1584, %v1576, %v1581
    %v1586 = vrsqrt.pop %v1575
    %v1587 = vmul.f32 %v1586, %v1575
    %v1588 = vmul.f32 %v1587, %v1586
    %v1589 = vmul.f32 0.5, %v1588
    %v1590 = vsub.f32 1.5, %v1589
    %v1591 = vmul.f32 %v1586, %v1590
    %vm1592 = vweird.f32 %v1575
    %vm1593 = vweird.f32 %v1586
    %vm1594 = vmor %vm1592, %vm1593
    %v1595 = vsel %vm1594, %v1586, %v1591
    %v1596 = vmul.f32 %v1564, %v1585
    %v1597 = vmul.f32 %v1565, %v1595
    %v1598 = vld [vmem:[%s1] sm:$0x3]
    %vm1599 = vcmp.ge.s32.totalorder %v198, 1
    %vm1600 = vmand %vm1599, %vm199
    %v1601 = vsel %vm1600, 0.0, -1e+30
    %v1603 = vrot.slane %v1598, 1
    %v1604 = vperm.slane %v1598, 0
    %v1605 = vperm.slane %v1603, 0
    %v1608 = vmul.f32 %v1604, %v1596
    %v1609 = vmul.f32 %v1605, %v1597
    %v1610 = vsel %vm237, %v1608, 0.0
    %1611 = vadd.xlane.f32.xlu0 %v1610
    %v1612 = vpop.xlane.xlu0 %1611
    %v1613 = vsel %vm237, %v1609, 0.0
    %1614 = vadd.xlane.f32.xlu0 %v1613
    %v1615 = vpop.xlane.xlu0 %1614
    %v1617 = vlaneseq
    %v1618 = vshrl.u32 %v1617, 7
    %1620 = vset.pattern.permute.xlu0 %v1618
    %1621 = vperm.xlu0 %1620, %v1601
    %v1622 = vpop.permute.xlu0 %1621
    %v1624 = vadd.f32 %v1612, %v1622
    %v1625 = vadd.f32 %v1615, %v1622
    %1628 = vset.pattern.permute.xlu0 0
    %1629 = vperm.xlu0 %1628, %v1624
    %v1630 = vpop.permute.xlu0 %1629
    %1631 = vset.pattern.permute.xlu0 0
    %1632 = vperm.xlu0 %1631, %v1625
    %v1633 = vpop.permute.xlu0 %1632
    %v1634 = vperm.slane %v1630, %v198
    %v1635 = vperm.slane %v1633, %v198
    %vm1636 = vcmask 1041409
    %v1637 = vsel %vm1636, %v1635, %v1634
    %vm1639 = vcmask 58368
    %v1640 = vsel %vm1639, %v1637, -inf
    %1641 = vmax.xlane.f32.xlu0 %v1640
    %v1642 = vpop.xlane.xlu0 %1641
    %v1644 = vperm.slane %v1642, 0
    %v1645 = vperm.slane %v1642, 1
    %v1648 = vsub.f32 %v1624, %v1644
    %v1649 = vsub.f32 %v1625, %v1645
    %v1650 = vmul.f32 %v1648, 1.442695
    %v1651 = vpow.pop %v1650
    %v1652 = vmul.f32 %v1649, 1.442695
    %v1653 = vpow.pop %v1652
    %1656 = vset.pattern.permute.xlu0 0
    %1657 = vperm.xlu0 %1656, %v1651
    %v1658 = vpop.permute.xlu0 %1657
    %1659 = vset.pattern.permute.xlu0 0
    %1660 = vperm.xlu0 %1659, %v1653
    %v1661 = vpop.permute.xlu0 %1660
    %v1662 = vperm.slane %v1658, %v198
    %v1663 = vperm.slane %v1661, %v198
    %v1664 = vsel %vm1636, %v1663, %v1662
    %v1666 = vsel %vm1639, %v1664, 0.0
    %1667 = vadd.xlane.f32.xlu0 %v1666
    %v1668 = vpop.xlane.xlu0 %1667
    %v1670 = vperm.slane %v1668, 0
    %v1671 = vperm.slane %v1668, 1
    %v1674 = vrcp.pop %v1670
    %v1675 = vmul.f32 %v1670, %v1674
    %v1676 = vsub.f32 1.0, %v1675
    %v1677 = vmul.f32 %v1674, %v1676
    %v1678 = vadd.f32 %v1674, %v1677
    %vm1679 = vweird.f32 %v1670
    %vm1680 = vweird.f32 %v1674
    %vm1681 = vmor %vm1679, %vm1680
    %v1682 = vsel %vm1681, %v1674, %v1678
    %v1683 = vand.u32 2147483647, %v1670
    %vm1684 = vcmp.eq.f32.partialorder %v1683, 8.507059e+37
    %v1685 = vand.u32 %v1670, 2147483648
    %v1686 = vor.u32 1.1754944e-38, %v1685
    %v1687 = vsel %vm1684, %v1686, %v1682
    %v1688 = vmul.f32 %v1651, %v1687
    %v1689 = vrcp.pop %v1671
    %v1690 = vmul.f32 %v1671, %v1689
    %v1691 = vsub.f32 1.0, %v1690
    %v1692 = vmul.f32 %v1689, %v1691
    %v1693 = vadd.f32 %v1689, %v1692
    %vm1694 = vweird.f32 %v1671
    %vm1695 = vweird.f32 %v1689
    %vm1696 = vmor %vm1694, %vm1695
    %v1697 = vsel %vm1696, %v1689, %v1693
    %v1698 = vand.u32 2147483647, %v1671
    %vm1699 = vcmp.eq.f32.partialorder %v1698, 8.507059e+37
    %v1700 = vand.u32 %v1671, 2147483648
    %v1701 = vor.u32 1.1754944e-38, %v1700
    %v1702 = vsel %vm1699, %v1701, %v1697
    %v1703 = vmul.f32 %v1653, %v1702
    %1705 = vset.pattern.permute.xlu0 0
    %1706 = vperm.xlu0 %1705, %v1688
    %v1707 = vpop.permute.xlu0 %1706
    %1710 = vset.pattern.permute.xlu0 0
    %1711 = vperm.xlu0 %1710, %v1703
    %v1712 = vpop.permute.xlu0 %1711
    %v1714 = vmul.f32 %v1707, %v1596
    %v1715 = vmul.f32 %v1712, %v1597
    %v1716 = vsel %vm237, %v1714, 0.0
    %v1717 = vrot.slane %v1716, 4
    %v1718 = vadd.f32 %v1716, %v1717
    %v1719 = vrot.slane %v1718, 2
    %v1720 = vadd.f32 %v1718, %v1719
    %v1721 = vrot.slane %v1720, 1
    %v1722 = vadd.f32 %v1720, %v1721
    %v1723 = vsel %vm237, %v1715, 0.0
    %v1724 = vrot.slane %v1723, 4
    %v1725 = vadd.f32 %v1723, %v1724
    %v1726 = vrot.slane %v1725, 2
    %v1727 = vadd.f32 %v1725, %v1726
    %v1728 = vrot.slane %v1727, 1
    %v1729 = vadd.f32 %v1727, %v1728
    %v1730 = vmul.f32 %v1722, %v1722
    %v1731 = vmul.f32 %v1729, %v1729
    %v1734 = vsel %vm1636, %v1731, %v1730
    %vm1736 = vcmask 254976
    %v1737 = vsel %vm1736, %v1734, 0.0
    %1738 = vadd.xlane.f32.xlu0 %v1737
    %v1739 = vpop.xlane.xlu0 %1738
    %v1740 = vmax.f32 %v1739, 1e-24
    %v1741 = vrsqrt.pop %v1740
    %v1742 = vmul.f32 %v1741, %v1740
    %v1743 = vmul.f32 %v1742, %v1741
    %v1744 = vmul.f32 0.5, %v1743
    %v1745 = vsub.f32 1.5, %v1744
    %v1746 = vmul.f32 %v1741, %v1745
    %vm1747 = vweird.f32 %v1740
    %vm1748 = vweird.f32 %v1741
    %vm1749 = vmor %vm1747, %vm1748
    %v1750 = vsel %vm1749, %v1741, %v1746
    %v1752 = vrot.slane %v1750, 1
    %v1755 = vmul.f32 %v1722, %v1750
    %v1756 = vmul.f32 %v1729, %v1752
    %v1759 = vrot.slane %v1756, 7
    %v1760 = vsel %vm1636, %v1759, %v1755
    %1762 = vst.msk [vmem:[#allocation2] sm:$0x3] %vm1736, %v1760
    // Predicated region
    $region74: #{ours_clip_forward.3} parent=1 // pred_check
      _
    $region75: #{ours_clip_forward.3} parent=1 // pred_check_branch
      %1764 = sbr.rel (0) target = $region77
    $region76: #{ours_clip_forward.3} parent=1 // pred_region
      %1766 = vsyncadd [#allocation3], 0
      %s1768 = sshll.u32 [#allocation2], 4
      %s1769 = int_to_ptr.vmem [resolvable:$true] %s1768
      %s1770 = sshll.u32 %s18, 4
      %s1771 = int_to_ptr.hbm [resolvable:$true] %s1770
      %1773 = dma.vmem_to_hbm [thread:$0]  %s1769, 32, %s1771, [#allocation3]
    $region77: #{ours_clip_forward.3} parent=1 // pred_fallthru
      _
    // Predicated region
    $region78: #{ours_clip_forward.3} parent=1 // pred_check
      _
    $region79: #{ours_clip_forward.3} parent=1 // pred_check_branch
      %1775 = sbr.rel (0) target = $region81
    $region80: #{ours_clip_forward.3} parent=1 // pred_region
      %1777 = dma.done [#allocation3], 32
    $region81: #{ours_clip_forward.3} parent=1 // pred_fallthru
      _
    %1778 = vsyncpa [#allocation3], 1

</llo_original>
